<compile_context>
chip_gen: v7x
topology: tpu7x:2x2x1
jax: 0.10.0
libtpu: 0.0.40
codegen_flags: <defaults>
</compile_context>

<pallas_src>
import math

import jax
import jax.numpy as jnp
from jax.experimental import pallas as pl
from jax.experimental.pallas import tpu as pltpu  # noqa: F401  (TPU backend assumed)

# ---- model hyper-parameters (SnakeTransformerQNet(seq_len, feature_dim, num_actions)) ----
SEQ_LEN = 8
FEATURE_DIM = 16
NUM_ACTIONS = 4
D_MODEL = 128
NUM_HEADS = 4
HEAD_DIM = D_MODEL // NUM_HEADS      # 32
FF_DIM = 256
HEAD_HIDDEN = 256
NUM_LAYERS = 2
LN_EPS = 1e-5
BATCH = 2
OUT_PAD = 128                         # lane-dense padded action dim
NEG_INF = -1e9

# Order of the (non-x) kernel operands.
_ARG_NAMES = (
    "pool", "attn_bias",
    "we", "be",
    "wqkv", "bqkv", "wo", "bo",
    "w1", "b1", "w2", "b2",
    "g1", "bt1", "g2", "bt2",
    "wh1", "bh1", "wh2", "bh2",
)


def _layer_norm(z, g, b):
    mu = jnp.mean(z, axis=-1, keepdims=True)
    zc = z - mu
    var = jnp.mean(zc * zc, axis=-1, keepdims=True)      # biased var, like nn.LayerNorm
    return zc * jax.lax.rsqrt(var + LN_EPS) * g + b


def _fused_forward(get, xm, *, approx_recip):
    """Shared forward math (bf16 matmuls, f32 accumulation / norms).

    `get(name)` / `get(name, layer)` returns the packed operand; inside the Pallas
    kernel it indexes VMEM refs lazily, outside it indexes plain arrays (this is the
    numerics-matched reference path, approx_recip=False).
    """
    f32, bf16 = jnp.float32, jnp.bfloat16
    M = xm.shape[0]
    D, dh, H = D_MODEL, HEAD_DIM, NUM_HEADS
    scale = 1.0 / math.sqrt(dh)

    def mm(a, w):                      # MXU matmul: bf16 inputs, f32 accumulation
        return jnp.dot(a.astype(bf16), w.astype(bf16), preferred_element_type=f32)

    # embedding
    h = mm(xm, get("we")) + get("be")                                    # (M, D)
    bias = get("attn_bias")                                              # (H*M, M)

    for l in range(NUM_LAYERS):
        # ---- fused QKV projection: one (M,128)@(128,384) matmul ----
        qkv = mm(h, get("wqkv", l)) + get("bqkv", l)                     # (M, 3D)

        # ---- scores for all heads, stacked along rows -> one batched softmax ----
        s_parts = []
        for hh in range(H):
            q = qkv[:, hh * dh:(hh + 1) * dh]
            k = qkv[:, D + hh * dh:D + (hh + 1) * dh]
            s_parts.append(jax.lax.dot_general(
                q.astype(bf16), k.astype(bf16),
                (((1,), (1,)), ((), ())), preferred_element_type=f32))   # (M, M)
        s = jnp.concatenate(s_parts, axis=0) * scale + bias              # (H*M, M)
        s = s - jnp.max(s, axis=-1, keepdims=True)
        p = jnp.exp(s)
        denom = jnp.sum(p, axis=-1, keepdims=True)
        p = p * (pl.reciprocal(denom, approx=True) if approx_recip else 1.0 / denom)

        # ---- per-head PV, concat heads -> single out-projection matmul ----
        o_parts = []
        for hh in range(H):
            v = qkv[:, 2 * D + hh * dh:2 * D + (hh + 1) * dh]
            o_parts.append(mm(p[hh * M:(hh + 1) * M], v))                # (M, dh)
        o_cat = jnp.concatenate(o_parts, axis=-1)                        # (M, D)
        attn = mm(o_cat, get("wo", l)) + get("bo", l)
        # dropout: eval-mode identity
        h = _layer_norm(h + attn, get("g1", l), get("bt1", l))

        # ---- feed-forward ----
        ff = jnp.maximum(mm(h, get("w1", l)) + get("b1", l), 0.0)
        ff = mm(ff, get("w2", l)) + get("b2", l)
        h = _layer_norm(h + ff, get("g2", l), get("bt2", l))

    # ---- per-batch mean pool over sequence (small matmul) + MLP head ----
    pooled = jnp.dot(get("pool"), h, preferred_element_type=f32)         # (B, D)
    hid = jnp.maximum(mm(pooled, get("wh1")) + get("bh1"), 0.0)          # (B, 256)
    return mm(hid, get("wh2")) + get("bh2")                              # (B, OUT_PAD)


# ----------------------------------------------------------------------------
# Pallas kernel: single program, everything resident in VMEM (~0.7 MB of bf16
# weights + tiny activations), no grid.
# ----------------------------------------------------------------------------
def snake_qnet_kernel(x_ref, *refs):
    *in_refs, out_ref = refs
    ref_map = dict(zip(_ARG_NAMES, in_refs))

    def get(name, l=None):
        r = ref_map[name]
        return r[l] if l is not None else r[...]

    out_ref[...] = _fused_forward(get, x_ref[...], approx_recip=True)


# ----------------------------------------------------------------------------
# Wrapper: repack PyTorch-layout params into fused, MXU-friendly layouts.
# ----------------------------------------------------------------------------
def pack_params(params, batch):
    f32, bf16 = jnp.float32, jnp.bfloat16
    D, F, FF, A = D_MODEL, FEATURE_DIM, FF_DIM, NUM_ACTIONS
    S, B = SEQ_LEN, batch
    M = B * S

    packed = {
        "we": params["embed_w"].T.astype(bf16),                          # (F, D)
        "be": params["embed_b"].reshape(1, D).astype(f32),
        "wh1": params["head1_w"].T.astype(bf16),                         # (D, 256)
        "bh1": params["head1_b"].reshape(1, HEAD_HIDDEN).astype(f32),
        # lane-dense padded final projection (A=4 -> 128 lanes)
        "wh2": jnp.zeros((HEAD_HIDDEN, OUT_PAD), f32)
               .at[:, :A].set(params["head2_w"].T).astype(bf16),
        "bh2": jnp.zeros((1, OUT_PAD), f32).at[0, :A].set(params["head2_b"]),
    }

    per_layer = {k: [] for k in ("wqkv", "bqkv", "wo", "bo", "w1", "b1", "w2", "b2",
                                 "g1", "bt1", "g2", "bt2")}
    for lp in params["layers"]:
        per_layer["wqkv"].append(lp["in_proj_w"].T)          # (D, 3D): cols [Q|K|V], head-contiguous
        per_layer["bqkv"].append(lp["in_proj_b"].reshape(1, 3 * D))
        per_layer["wo"].append(lp["out_proj_w"].T)           # (D, D)
        per_layer["bo"].append(lp["out_proj_b"].reshape(1, D))
        per_layer["w1"].append(lp["lin1_w"].T)               # (D, FF)
        per_layer["b1"].append(lp["lin1_b"].reshape(1, FF))
        per_layer["w2"].append(lp["lin2_w"].T)               # (FF, D)
        per_layer["b2"].append(lp["lin2_b"].reshape(1, D))
        per_layer["g1"].append(lp["ln1_w"].reshape(1, D))
        per_layer["bt1"].append(lp["ln1_b"].reshape(1, D))
        per_layer["g2"].append(lp["ln2_w"].reshape(1, D))
        per_layer["bt2"].append(lp["ln2_b"].reshape(1, D))

    weight_keys = {"wqkv", "wo", "w1", "w2"}
    for k, vs in per_layer.items():
        packed[k] = jnp.stack(vs, axis=0).astype(bf16 if k in weight_keys else f32)

    # batch folded into rows: pooling matrix + block-diagonal attention mask
    row_batch = jnp.arange(M, dtype=jnp.int32) // S
    packed["pool"] = (row_batch[None, :] == jnp.arange(B, dtype=jnp.int32)[:, None]
                      ).astype(f32) / float(S)                               # (B, M)
    same = row_batch[:, None] == row_batch[None, :]
    packed["attn_bias"] = jnp.tile(
        jnp.where(same, 0.0, NEG_INF).astype(f32), (NUM_HEADS, 1))           # (H*M, M)
    return packed


@jax.jit
def snake_qnet_forward(packed, x):
    B, S, F = x.shape
    xm = x.reshape(B * S, F).astype(jnp.float32)
    out = pl.pallas_call(
        snake_qnet_kernel,
        out_shape=jax.ShapeDtypeStruct((B, OUT_PAD), jnp.float32),
        # No grid / BlockSpecs: single program, whole operands live in VMEM.
    )(xm, *(packed[name] for name in _ARG_NAMES))
    return out[:, :NUM_ACTIONS]                                              # (B, A)


# ----------------------------------------------------------------------------
# Deterministic parameter init (PyTorch layout: Linear weights are (out, in)).
# ----------------------------------------------------------------------------
def init_params(key):
    D, F, FF, A = D_MODEL, FEATURE_DIM, FF_DIM, NUM_ACTIONS
    ks = iter(jax.random.split(key, 64))
    nrm = lambda shape, s=0.05: s * jax.random.normal(next(ks), shape, dtype=jnp.float32)
    params = {
        "embed_w": nrm((D, F)), "embed_b": nrm((D,)),
        "head1_w": nrm((HEAD_HIDDEN, D)), "head1_b": nrm((HEAD_HIDDEN,)),
        "head2_w": nrm((A, HEAD_HIDDEN)), "head2_b": nrm((A,)),
        "layers": [],
    }
    for _ in range(NUM_LAYERS):
        params["layers"].append({
            "in_proj_w": nrm((3 * D, D)), "in_proj_b": nrm((3 * D,)),
            "out_proj_w": nrm((D, D)), "out_proj_b": nrm((D,)),
            "lin1_w": nrm((FF, D)), "lin1_b": nrm((FF,)),
            "lin2_w": nrm((D, FF)), "lin2_b": nrm((D,)),
            "ln1_w": jnp.ones((D,), jnp.float32), "ln1_b": jnp.zeros((D,), jnp.float32),
            "ln2_w": jnp.ones((D,), jnp.float32), "ln2_b": jnp.zeros((D,), jnp.float32),
        })
    return params


# ----------------------------------------------------------------------------
# References.
#  - ref_forward_matched: same bf16-quantized math as the kernel (tight check).
#  - ref_forward_f32: pure-f32 PyTorch eval-mode semantics (looser sanity check).
# ----------------------------------------------------------------------------
def ref_forward_matched(packed, x):
    B, S, F = x.shape
    xm = x.reshape(B * S, F).astype(jnp.float32)

    def get(name, l=None):
        a = packed[name]
        return a[l] if l is not None else a

    out = _fused_forward(get, xm, approx_recip=False)
    return out[:, :NUM_ACTIONS]


def ref_forward_f32(params, x):
    D, H, dh = D_MODEL, NUM_HEADS, HEAD_DIM
    h = x @ params["embed_w"].T + params["embed_b"]
    B, S, _ = h.shape
    for lp in params["layers"]:
        qkv = h @ lp["in_proj_w"].T + lp["in_proj_b"]
        q, k, v = jnp.split(qkv, 3, axis=-1)
        split_heads = lambda t: t.reshape(B, S, H, dh).transpose(0, 2, 1, 3)
        qh, kh, vh = split_heads(q), split_heads(k), split_heads(v)
        s = jnp.einsum("bhqd,bhkd->bhqk", qh, kh) / math.sqrt(dh)
        p = jax.nn.softmax(s, axis=-1)
        o = jnp.einsum("bhqk,bhkd->bhqd", p, vh).transpose(0, 2, 1, 3).reshape(B, S, D)
        o = o @ lp["out_proj_w"].T + lp["out_proj_b"]
        h = _layer_norm(h + o, lp["ln1_w"], lp["ln1_b"])
        ff = jax.nn.relu(h @ lp["lin1_w"].T + lp["lin1_b"]) @ lp["lin2_w"].T + lp["lin2_b"]
        h = _layer_norm(h + ff, lp["ln2_w"], lp["ln2_b"])
    pooled = h.mean(axis=1)
    hid = jax.nn.relu(pooled @ params["head1_w"].T + params["head1_b"])
    return hid @ params["head2_w"].T + params["head2_b"]


if __name__ == "__main__":
    key = jax.random.PRNGKey(0)
    pkey, xkey = jax.random.split(key)
    params = init_params(pkey)
    x = jax.random.normal(xkey, (BATCH, SEQ_LEN, FEATURE_DIM), dtype=jnp.float32)

    packed = pack_params(params, BATCH)
    out = jax.block_until_ready(snake_qnet_forward(packed, x))
    assert out.shape == (BATCH, NUM_ACTIONS)

    ref_m = jax.block_until_ready(ref_forward_matched(packed, x))   # same bf16 quantization
    ref_f = jax.block_until_ready(ref_forward_f32(params, x))       # PyTorch f32 semantics
    assert jnp.allclose(out, ref_m, atol=2e-2, rtol=2e-2), (out, ref_m)
    assert jnp.allclose(out, ref_f, atol=5e-2, rtol=5e-2), (out, ref_f)
    print("KERNEL_OK")
</pallas_src>

<mosaic_0001>
module attributes {stable_mosaic.version = 11 : i64} {
  func.func @snake_qnet_kernel(%arg0: memref<16x16xf32, #tpu.memory_space<vmem>>, %arg1: memref<2x16xf32, #tpu.memory_space<vmem>>, %arg2: memref<64x16xf32, #tpu.memory_space<vmem>>, %arg3: memref<16x128xbf16, #tpu.memory_space<vmem>>, %arg4: memref<1x128xf32, #tpu.memory_space<vmem>>, %arg5: memref<2x128x384xbf16, #tpu.memory_space<vmem>>, %arg6: memref<2x1x384xf32, #tpu.memory_space<vmem>>, %arg7: memref<2x128x128xbf16, #tpu.memory_space<vmem>>, %arg8: memref<2x1x128xf32, #tpu.memory_space<vmem>>, %arg9: memref<2x128x256xbf16, #tpu.memory_space<vmem>>, %arg10: memref<2x1x256xf32, #tpu.memory_space<vmem>>, %arg11: memref<2x256x128xbf16, #tpu.memory_space<vmem>>, %arg12: memref<2x1x128xf32, #tpu.memory_space<vmem>>, %arg13: memref<2x1x128xf32, #tpu.memory_space<vmem>>, %arg14: memref<2x1x128xf32, #tpu.memory_space<vmem>>, %arg15: memref<2x1x128xf32, #tpu.memory_space<vmem>>, %arg16: memref<2x1x128xf32, #tpu.memory_space<vmem>>, %arg17: memref<128x256xbf16, #tpu.memory_space<vmem>>, %arg18: memref<1x256xf32, #tpu.memory_space<vmem>>, %arg19: memref<256x128xbf16, #tpu.memory_space<vmem>>, %arg20: memref<1x128xf32, #tpu.memory_space<vmem>>, %arg21: memref<2x128xf32, #tpu.memory_space<vmem>>) attributes {dimension_semantics = [], scalar_prefetch = 0 : i64, scratch_operands = 0 : i64, tpu.core_type = #tpu.core_type<tc>} {
    %c0 = arith.constant 0 : index
    %c0_0 = arith.constant 0 : index
    %0 = vector.load %arg0[%c0, %c0_0] : memref<16x16xf32, #tpu.memory_space<vmem>>, vector<16x16xf32>
    %c0_1 = arith.constant 0 : index
    %c0_2 = arith.constant 0 : index
    %1 = vector.load %arg3[%c0_1, %c0_2] : memref<16x128xbf16, #tpu.memory_space<vmem>>, vector<16x128xbf16>
    %2 = arith.truncf %0 : vector<16x16xf32> to vector<16x16xbf16>
    %cst = arith.constant dense<0.000000e+00> : vector<16x128xf32>
    %3 = tpu.matmul %2, %1, %cst {dimension_numbers = #tpu.dot_dimension_numbers<[1], [0], [0], [1], [0, 0, 1, 1], [], []>} : vector<16x16xbf16>, vector<16x128xbf16>, vector<16x128xf32> -> vector<16x128xf32>
    %c0_3 = arith.constant 0 : index
    %c0_4 = arith.constant 0 : index
    %4 = vector.load %arg4[%c0_3, %c0_4] : memref<1x128xf32, #tpu.memory_space<vmem>>, vector<1x128xf32>
    %5 = vector.broadcast %4 : vector<1x128xf32> to vector<16x128xf32>
    %6 = arith.addf %3, %5 : vector<16x128xf32>
    %c0_5 = arith.constant 0 : index
    %c0_6 = arith.constant 0 : index
    %7 = vector.load %arg2[%c0_5, %c0_6] : memref<64x16xf32, #tpu.memory_space<vmem>>, vector<64x16xf32>
    %c0_7 = arith.constant 0 : index
    %c0_8 = arith.constant 0 : index
    %c0_9 = arith.constant 0 : index
    %8 = vector.load %arg5[%c0_7, %c0_8, %c0_9] : memref<2x128x384xbf16, #tpu.memory_space<vmem>>, vector<1x128x384xbf16>
    %9 = vector.shape_cast %8 : vector<1x128x384xbf16> to vector<128x384xbf16>
    %10 = arith.truncf %6 : vector<16x128xf32> to vector<16x128xbf16>
    %cst_10 = arith.constant dense<0.000000e+00> : vector<16x384xf32>
    %11 = tpu.matmul %10, %9, %cst_10 {dimension_numbers = #tpu.dot_dimension_numbers<[1], [0], [0], [1], [0, 0, 1, 1], [], []>} : vector<16x128xbf16>, vector<128x384xbf16>, vector<16x384xf32> -> vector<16x384xf32>
    %c0_11 = arith.constant 0 : index
    %c0_12 = arith.constant 0 : index
    %c0_13 = arith.constant 0 : index
    %12 = vector.load %arg6[%c0_11, %c0_12, %c0_13] : memref<2x1x384xf32, #tpu.memory_space<vmem>>, vector<1x1x384xf32>
    %13 = vector.shape_cast %12 : vector<1x1x384xf32> to vector<1x384xf32>
    %14 = vector.broadcast %13 : vector<1x384xf32> to vector<16x384xf32>
    %15 = arith.addf %11, %14 : vector<16x384xf32>
    %16 = vector.extract_strided_slice %15 {offsets = [0, 0], sizes = [16, 32], strides = [1, 1]} : vector<16x384xf32> to vector<16x32xf32>
    %17 = vector.extract_strided_slice %15 {offsets = [0, 128], sizes = [16, 32], strides = [1, 1]} : vector<16x384xf32> to vector<16x32xf32>
    %18 = arith.truncf %16 : vector<16x32xf32> to vector<16x32xbf16>
    %19 = arith.truncf %17 : vector<16x32xf32> to vector<16x32xbf16>
    %cst_14 = arith.constant dense<0.000000e+00> : vector<16x16xf32>
    %20 = tpu.matmul %18, %19, %cst_14 {dimension_numbers = #tpu.dot_dimension_numbers<[1], [1], [0], [0], [0, 0, 1, 0], [], []>} : vector<16x32xbf16>, vector<16x32xbf16>, vector<16x16xf32> -> vector<16x16xf32>
    %21 = vector.extract_strided_slice %15 {offsets = [0, 32], sizes = [16, 32], strides = [1, 1]} : vector<16x384xf32> to vector<16x32xf32>
    %22 = vector.extract_strided_slice %15 {offsets = [0, 160], sizes = [16, 32], strides = [1, 1]} : vector<16x384xf32> to vector<16x32xf32>
    %23 = arith.truncf %21 : vector<16x32xf32> to vector<16x32xbf16>
    %24 = arith.truncf %22 : vector<16x32xf32> to vector<16x32xbf16>
    %cst_15 = arith.constant dense<0.000000e+00> : vector<16x16xf32>
    %25 = tpu.matmul %23, %24, %cst_15 {dimension_numbers = #tpu.dot_dimension_numbers<[1], [1], [0], [0], [0, 0, 1, 0], [], []>} : vector<16x32xbf16>, vector<16x32xbf16>, vector<16x16xf32> -> vector<16x16xf32>
    %26 = vector.extract_strided_slice %15 {offsets = [0, 64], sizes = [16, 32], strides = [1, 1]} : vector<16x384xf32> to vector<16x32xf32>
    %27 = vector.extract_strided_slice %15 {offsets = [0, 192], sizes = [16, 32], strides = [1, 1]} : vector<16x384xf32> to vector<16x32xf32>
    %28 = arith.truncf %26 : vector<16x32xf32> to vector<16x32xbf16>
    %29 = arith.truncf %27 : vector<16x32xf32> to vector<16x32xbf16>
    %cst_16 = arith.constant dense<0.000000e+00> : vector<16x16xf32>
    %30 = tpu.matmul %28, %29, %cst_16 {dimension_numbers = #tpu.dot_dimension_numbers<[1], [1], [0], [0], [0, 0, 1, 0], [], []>} : vector<16x32xbf16>, vector<16x32xbf16>, vector<16x16xf32> -> vector<16x16xf32>
    %31 = vector.extract_strided_slice %15 {offsets = [0, 96], sizes = [16, 32], strides = [1, 1]} : vector<16x384xf32> to vector<16x32xf32>
    %32 = vector.extract_strided_slice %15 {offsets = [0, 224], sizes = [16, 32], strides = [1, 1]} : vector<16x384xf32> to vector<16x32xf32>
    %33 = arith.truncf %31 : vector<16x32xf32> to vector<16x32xbf16>
    %34 = arith.truncf %32 : vector<16x32xf32> to vector<16x32xbf16>
    %cst_17 = arith.constant dense<0.000000e+00> : vector<16x16xf32>
    %35 = tpu.matmul %33, %34, %cst_17 {dimension_numbers = #tpu.dot_dimension_numbers<[1], [1], [0], [0], [0, 0, 1, 0], [], []>} : vector<16x32xbf16>, vector<16x32xbf16>, vector<16x16xf32> -> vector<16x16xf32>
    %36 = tpu.concatenate %20, %25, %30, %35 in 0 : vector<16x16xf32>, vector<16x16xf32>, vector<16x16xf32>, vector<16x16xf32> -> vector<64x16xf32>
    %cst_18 = arith.constant 0.176776692 : f32
    %37 = vector.broadcast %cst_18 : f32 to vector<64x16xf32>
    %38 = arith.mulf %36, %37 : vector<64x16xf32>
    %39 = arith.addf %38, %7 : vector<64x16xf32>
    %cst_19 = arith.constant dense<0xFF800000> : vector<64xf32>
    %40 = vector.multi_reduction <maximumf>, %39, %cst_19 [1] : vector<64x16xf32> to vector<64xf32>
    %41 = vector.shape_cast %40 : vector<64xf32> to vector<64x1xf32>
    %42 = vector.broadcast %41 : vector<64x1xf32> to vector<64x16xf32>
    %43 = arith.subf %39, %42 : vector<64x16xf32>
    %44 = math.exp %43 : vector<64x16xf32>
    %cst_20 = arith.constant dense<0.000000e+00> : vector<64xf32>
    %45 = vector.multi_reduction <add>, %44, %cst_20 [1] : vector<64x16xf32> to vector<64xf32>
    %46 = vector.shape_cast %45 : vector<64xf32> to vector<64x1xf32>
    %47 = tpu.reciprocal %46 {approx = true} : vector<64x1xf32> -> vector<64x1xf32>
    %48 = vector.broadcast %47 : vector<64x1xf32> to vector<64x16xf32>
    %49 = arith.mulf %44, %48 : vector<64x16xf32>
    %50 = vector.extract_strided_slice %15 {offsets = [0, 256], sizes = [16, 32], strides = [1, 1]} : vector<16x384xf32> to vector<16x32xf32>
    %51 = vector.extract_strided_slice %49 {offsets = [0, 0], sizes = [16, 16], strides = [1, 1]} : vector<64x16xf32> to vector<16x16xf32>
    %52 = arith.truncf %51 : vector<16x16xf32> to vector<16x16xbf16>
    %53 = arith.truncf %50 : vector<16x32xf32> to vector<16x32xbf16>
    %cst_21 = arith.constant dense<0.000000e+00> : vector<16x32xf32>
    %54 = tpu.matmul %52, %53, %cst_21 {dimension_numbers = #tpu.dot_dimension_numbers<[1], [0], [0], [1], [0, 0, 1, 1], [], []>} : vector<16x16xbf16>, vector<16x32xbf16>, vector<16x32xf32> -> vector<16x32xf32>
    %55 = vector.extract_strided_slice %15 {offsets = [0, 288], sizes = [16, 32], strides = [1, 1]} : vector<16x384xf32> to vector<16x32xf32>
    %56 = vector.extract_strided_slice %49 {offsets = [16, 0], sizes = [16, 16], strides = [1, 1]} : vector<64x16xf32> to vector<16x16xf32>
    %57 = arith.truncf %56 : vector<16x16xf32> to vector<16x16xbf16>
    %58 = arith.truncf %55 : vector<16x32xf32> to vector<16x32xbf16>
    %cst_22 = arith.constant dense<0.000000e+00> : vector<16x32xf32>
    %59 = tpu.matmul %57, %58, %cst_22 {dimension_numbers = #tpu.dot_dimension_numbers<[1], [0], [0], [1], [0, 0, 1, 1], [], []>} : vector<16x16xbf16>, vector<16x32xbf16>, vector<16x32xf32> -> vector<16x32xf32>
    %60 = vector.extract_strided_slice %15 {offsets = [0, 320], sizes = [16, 32], strides = [1, 1]} : vector<16x384xf32> to vector<16x32xf32>
    %61 = vector.extract_strided_slice %49 {offsets = [32, 0], sizes = [16, 16], strides = [1, 1]} : vector<64x16xf32> to vector<16x16xf32>
    %62 = arith.truncf %61 : vector<16x16xf32> to vector<16x16xbf16>
    %63 = arith.truncf %60 : vector<16x32xf32> to vector<16x32xbf16>
    %cst_23 = arith.constant dense<0.000000e+00> : vector<16x32xf32>
    %64 = tpu.matmul %62, %63, %cst_23 {dimension_numbers = #tpu.dot_dimension_numbers<[1], [0], [0], [1], [0, 0, 1, 1], [], []>} : vector<16x16xbf16>, vector<16x32xbf16>, vector<16x32xf32> -> vector<16x32xf32>
    %65 = vector.extract_strided_slice %15 {offsets = [0, 352], sizes = [16, 32], strides = [1, 1]} : vector<16x384xf32> to vector<16x32xf32>
    %66 = vector.extract_strided_slice %49 {offsets = [48, 0], sizes = [16, 16], strides = [1, 1]} : vector<64x16xf32> to vector<16x16xf32>
    %67 = arith.truncf %66 : vector<16x16xf32> to vector<16x16xbf16>
    %68 = arith.truncf %65 : vector<16x32xf32> to vector<16x32xbf16>
    %cst_24 = arith.constant dense<0.000000e+00> : vector<16x32xf32>
    %69 = tpu.matmul %67, %68, %cst_24 {dimension_numbers = #tpu.dot_dimension_numbers<[1], [0], [0], [1], [0, 0, 1, 1], [], []>} : vector<16x16xbf16>, vector<16x32xbf16>, vector<16x32xf32> -> vector<16x32xf32>
    %70 = tpu.concatenate %54, %59, %64, %69 in 1 : vector<16x32xf32>, vector<16x32xf32>, vector<16x32xf32>, vector<16x32xf32> -> vector<16x128xf32>
    %c0_25 = arith.constant 0 : index
    %c0_26 = arith.constant 0 : index
    %c0_27 = arith.constant 0 : index
    %71 = vector.load %arg7[%c0_25, %c0_26, %c0_27] : memref<2x128x128xbf16, #tpu.memory_space<vmem>>, vector<1x128x128xbf16>
    %72 = vector.shape_cast %71 : vector<1x128x128xbf16> to vector<128x128xbf16>
    %73 = arith.truncf %70 : vector<16x128xf32> to vector<16x128xbf16>
    %cst_28 = arith.constant dense<0.000000e+00> : vector<16x128xf32>
    %74 = tpu.matmul %73, %72, %cst_28 {dimension_numbers = #tpu.dot_dimension_numbers<[1], [0], [0], [1], [0, 0, 1, 1], [], []>} : vector<16x128xbf16>, vector<128x128xbf16>, vector<16x128xf32> -> vector<16x128xf32>
    %c0_29 = arith.constant 0 : index
    %c0_30 = arith.constant 0 : index
    %c0_31 = arith.constant 0 : index
    %75 = vector.load %arg8[%c0_29, %c0_30, %c0_31] : memref<2x1x128xf32, #tpu.memory_space<vmem>>, vector<1x1x128xf32>
    %76 = vector.shape_cast %75 : vector<1x1x128xf32> to vector<1x128xf32>
    %77 = vector.broadcast %76 : vector<1x128xf32> to vector<16x128xf32>
    %78 = arith.addf %74, %77 : vector<16x128xf32>
    %79 = arith.addf %6, %78 : vector<16x128xf32>
    %c0_32 = arith.constant 0 : index
    %c0_33 = arith.constant 0 : index
    %c0_34 = arith.constant 0 : index
    %80 = vector.load %arg13[%c0_32, %c0_33, %c0_34] : memref<2x1x128xf32, #tpu.memory_space<vmem>>, vector<1x1x128xf32>
    %81 = vector.shape_cast %80 : vector<1x1x128xf32> to vector<1x128xf32>
    %c0_35 = arith.constant 0 : index
    %c0_36 = arith.constant 0 : index
    %c0_37 = arith.constant 0 : index
    %82 = vector.load %arg14[%c0_35, %c0_36, %c0_37] : memref<2x1x128xf32, #tpu.memory_space<vmem>>, vector<1x1x128xf32>
    %83 = vector.shape_cast %82 : vector<1x1x128xf32> to vector<1x128xf32>
    %cst_38 = arith.constant dense<0.000000e+00> : vector<16xf32>
    %84 = vector.multi_reduction <add>, %79, %cst_38 [1] : vector<16x128xf32> to vector<16xf32>
    %85 = vector.shape_cast %84 : vector<16xf32> to vector<16x1xf32>
    %cst_39 = arith.constant 1.280000e+02 : f32
    %86 = vector.broadcast %cst_39 : f32 to vector<16x1xf32>
    %87 = arith.divf %85, %86 : vector<16x1xf32>
    %88 = vector.broadcast %87 : vector<16x1xf32> to vector<16x128xf32>
    %89 = arith.subf %79, %88 : vector<16x128xf32>
    %90 = arith.mulf %89, %89 : vector<16x128xf32>
    %cst_40 = arith.constant dense<0.000000e+00> : vector<16xf32>
    %91 = vector.multi_reduction <add>, %90, %cst_40 [1] : vector<16x128xf32> to vector<16xf32>
    %92 = vector.shape_cast %91 : vector<16xf32> to vector<16x1xf32>
    %cst_41 = arith.constant 1.280000e+02 : f32
    %93 = vector.broadcast %cst_41 : f32 to vector<16x1xf32>
    %94 = arith.divf %92, %93 : vector<16x1xf32>
    %cst_42 = arith.constant 9.99999974E-6 : f32
    %95 = vector.broadcast %cst_42 : f32 to vector<16x1xf32>
    %96 = arith.addf %94, %95 : vector<16x1xf32>
    %97 = math.rsqrt %96 : vector<16x1xf32>
    %98 = vector.broadcast %97 : vector<16x1xf32> to vector<16x128xf32>
    %99 = arith.mulf %89, %98 : vector<16x128xf32>
    %100 = vector.broadcast %81 : vector<1x128xf32> to vector<16x128xf32>
    %101 = arith.mulf %99, %100 : vector<16x128xf32>
    %102 = vector.broadcast %83 : vector<1x128xf32> to vector<16x128xf32>
    %103 = arith.addf %101, %102 : vector<16x128xf32>
    %c0_43 = arith.constant 0 : index
    %c0_44 = arith.constant 0 : index
    %c0_45 = arith.constant 0 : index
    %104 = vector.load %arg9[%c0_43, %c0_44, %c0_45] : memref<2x128x256xbf16, #tpu.memory_space<vmem>>, vector<1x128x256xbf16>
    %105 = vector.shape_cast %104 : vector<1x128x256xbf16> to vector<128x256xbf16>
    %106 = arith.truncf %103 : vector<16x128xf32> to vector<16x128xbf16>
    %cst_46 = arith.constant dense<0.000000e+00> : vector<16x256xf32>
    %107 = tpu.matmul %106, %105, %cst_46 {dimension_numbers = #tpu.dot_dimension_numbers<[1], [0], [0], [1], [0, 0, 1, 1], [], []>} : vector<16x128xbf16>, vector<128x256xbf16>, vector<16x256xf32> -> vector<16x256xf32>
    %c0_47 = arith.constant 0 : index
    %c0_48 = arith.constant 0 : index
    %c0_49 = arith.constant 0 : index
    %108 = vector.load %arg10[%c0_47, %c0_48, %c0_49] : memref<2x1x256xf32, #tpu.memory_space<vmem>>, vector<1x1x256xf32>
    %109 = vector.shape_cast %108 : vector<1x1x256xf32> to vector<1x256xf32>
    %110 = vector.broadcast %109 : vector<1x256xf32> to vector<16x256xf32>
    %111 = arith.addf %107, %110 : vector<16x256xf32>
    %cst_50 = arith.constant 0.000000e+00 : f32
    %112 = vector.broadcast %cst_50 : f32 to vector<16x256xf32>
    %113 = arith.maximumf %111, %112 : vector<16x256xf32>
    %c0_51 = arith.constant 0 : index
    %c0_52 = arith.constant 0 : index
    %c0_53 = arith.constant 0 : index
    %114 = vector.load %arg11[%c0_51, %c0_52, %c0_53] : memref<2x256x128xbf16, #tpu.memory_space<vmem>>, vector<1x256x128xbf16>
    %115 = vector.shape_cast %114 : vector<1x256x128xbf16> to vector<256x128xbf16>
    %116 = arith.truncf %113 : vector<16x256xf32> to vector<16x256xbf16>
    %cst_54 = arith.constant dense<0.000000e+00> : vector<16x128xf32>
    %117 = tpu.matmul %116, %115, %cst_54 {dimension_numbers = #tpu.dot_dimension_numbers<[1], [0], [0], [1], [0, 0, 1, 1], [], []>} : vector<16x256xbf16>, vector<256x128xbf16>, vector<16x128xf32> -> vector<16x128xf32>
    %c0_55 = arith.constant 0 : index
    %c0_56 = arith.constant 0 : index
    %c0_57 = arith.constant 0 : index
    %118 = vector.load %arg12[%c0_55, %c0_56, %c0_57] : memref<2x1x128xf32, #tpu.memory_space<vmem>>, vector<1x1x128xf32>
    %119 = vector.shape_cast %118 : vector<1x1x128xf32> to vector<1x128xf32>
    %120 = vector.broadcast %119 : vector<1x128xf32> to vector<16x128xf32>
    %121 = arith.addf %117, %120 : vector<16x128xf32>
    %122 = arith.addf %103, %121 : vector<16x128xf32>
    %c0_58 = arith.constant 0 : index
    %c0_59 = arith.constant 0 : index
    %c0_60 = arith.constant 0 : index
    %123 = vector.load %arg15[%c0_58, %c0_59, %c0_60] : memref<2x1x128xf32, #tpu.memory_space<vmem>>, vector<1x1x128xf32>
    %124 = vector.shape_cast %123 : vector<1x1x128xf32> to vector<1x128xf32>
    %c0_61 = arith.constant 0 : index
    %c0_62 = arith.constant 0 : index
    %c0_63 = arith.constant 0 : index
    %125 = vector.load %arg16[%c0_61, %c0_62, %c0_63] : memref<2x1x128xf32, #tpu.memory_space<vmem>>, vector<1x1x128xf32>
    %126 = vector.shape_cast %125 : vector<1x1x128xf32> to vector<1x128xf32>
    %cst_64 = arith.constant dense<0.000000e+00> : vector<16xf32>
    %127 = vector.multi_reduction <add>, %122, %cst_64 [1] : vector<16x128xf32> to vector<16xf32>
    %128 = vector.shape_cast %127 : vector<16xf32> to vector<16x1xf32>
    %cst_65 = arith.constant 1.280000e+02 : f32
    %129 = vector.broadcast %cst_65 : f32 to vector<16x1xf32>
    %130 = arith.divf %128, %129 : vector<16x1xf32>
    %131 = vector.broadcast %130 : vector<16x1xf32> to vector<16x128xf32>
    %132 = arith.subf %122, %131 : vector<16x128xf32>
    %133 = arith.mulf %132, %132 : vector<16x128xf32>
    %cst_66 = arith.constant dense<0.000000e+00> : vector<16xf32>
    %134 = vector.multi_reduction <add>, %133, %cst_66 [1] : vector<16x128xf32> to vector<16xf32>
    %135 = vector.shape_cast %134 : vector<16xf32> to vector<16x1xf32>
    %cst_67 = arith.constant 1.280000e+02 : f32
    %136 = vector.broadcast %cst_67 : f32 to vector<16x1xf32>
    %137 = arith.divf %135, %136 : vector<16x1xf32>
    %cst_68 = arith.constant 9.99999974E-6 : f32
    %138 = vector.broadcast %cst_68 : f32 to vector<16x1xf32>
    %139 = arith.addf %137, %138 : vector<16x1xf32>
    %140 = math.rsqrt %139 : vector<16x1xf32>
    %141 = vector.broadcast %140 : vector<16x1xf32> to vector<16x128xf32>
    %142 = arith.mulf %132, %141 : vector<16x128xf32>
    %143 = vector.broadcast %124 : vector<1x128xf32> to vector<16x128xf32>
    %144 = arith.mulf %142, %143 : vector<16x128xf32>
    %145 = vector.broadcast %126 : vector<1x128xf32> to vector<16x128xf32>
    %146 = arith.addf %144, %145 : vector<16x128xf32>
    %c1 = arith.constant 1 : index
    %c0_69 = arith.constant 0 : index
    %c0_70 = arith.constant 0 : index
    %147 = vector.load %arg5[%c1, %c0_69, %c0_70] : memref<2x128x384xbf16, #tpu.memory_space<vmem>>, vector<1x128x384xbf16>
    %148 = vector.shape_cast %147 : vector<1x128x384xbf16> to vector<128x384xbf16>
    %149 = arith.truncf %146 : vector<16x128xf32> to vector<16x128xbf16>
    %cst_71 = arith.constant dense<0.000000e+00> : vector<16x384xf32>
    %150 = tpu.matmul %149, %148, %cst_71 {dimension_numbers = #tpu.dot_dimension_numbers<[1], [0], [0], [1], [0, 0, 1, 1], [], []>} : vector<16x128xbf16>, vector<128x384xbf16>, vector<16x384xf32> -> vector<16x384xf32>
    %c1_72 = arith.constant 1 : index
    %c0_73 = arith.constant 0 : index
    %c0_74 = arith.constant 0 : index
    %151 = vector.load %arg6[%c1_72, %c0_73, %c0_74] : memref<2x1x384xf32, #tpu.memory_space<vmem>>, vector<1x1x384xf32>
    %152 = vector.shape_cast %151 : vector<1x1x384xf32> to vector<1x384xf32>
    %153 = vector.broadcast %152 : vector<1x384xf32> to vector<16x384xf32>
    %154 = arith.addf %150, %153 : vector<16x384xf32>
    %155 = vector.extract_strided_slice %154 {offsets = [0, 0], sizes = [16, 32], strides = [1, 1]} : vector<16x384xf32> to vector<16x32xf32>
    %156 = vector.extract_strided_slice %154 {offsets = [0, 128], sizes = [16, 32], strides = [1, 1]} : vector<16x384xf32> to vector<16x32xf32>
    %157 = arith.truncf %155 : vector<16x32xf32> to vector<16x32xbf16>
    %158 = arith.truncf %156 : vector<16x32xf32> to vector<16x32xbf16>
    %cst_75 = arith.constant dense<0.000000e+00> : vector<16x16xf32>
    %159 = tpu.matmul %157, %158, %cst_75 {dimension_numbers = #tpu.dot_dimension_numbers<[1], [1], [0], [0], [0, 0, 1, 0], [], []>} : vector<16x32xbf16>, vector<16x32xbf16>, vector<16x16xf32> -> vector<16x16xf32>
    %160 = vector.extract_strided_slice %154 {offsets = [0, 32], sizes = [16, 32], strides = [1, 1]} : vector<16x384xf32> to vector<16x32xf32>
    %161 = vector.extract_strided_slice %154 {offsets = [0, 160], sizes = [16, 32], strides = [1, 1]} : vector<16x384xf32> to vector<16x32xf32>
    %162 = arith.truncf %160 : vector<16x32xf32> to vector<16x32xbf16>
    %163 = arith.truncf %161 : vector<16x32xf32> to vector<16x32xbf16>
    %cst_76 = arith.constant dense<0.000000e+00> : vector<16x16xf32>
    %164 = tpu.matmul %162, %163, %cst_76 {dimension_numbers = #tpu.dot_dimension_numbers<[1], [1], [0], [0], [0, 0, 1, 0], [], []>} : vector<16x32xbf16>, vector<16x32xbf16>, vector<16x16xf32> -> vector<16x16xf32>
    %165 = vector.extract_strided_slice %154 {offsets = [0, 64], sizes = [16, 32], strides = [1, 1]} : vector<16x384xf32> to vector<16x32xf32>
    %166 = vector.extract_strided_slice %154 {offsets = [0, 192], sizes = [16, 32], strides = [1, 1]} : vector<16x384xf32> to vector<16x32xf32>
    %167 = arith.truncf %165 : vector<16x32xf32> to vector<16x32xbf16>
    %168 = arith.truncf %166 : vector<16x32xf32> to vector<16x32xbf16>
    %cst_77 = arith.constant dense<0.000000e+00> : vector<16x16xf32>
    %169 = tpu.matmul %167, %168, %cst_77 {dimension_numbers = #tpu.dot_dimension_numbers<[1], [1], [0], [0], [0, 0, 1, 0], [], []>} : vector<16x32xbf16>, vector<16x32xbf16>, vector<16x16xf32> -> vector<16x16xf32>
    %170 = vector.extract_strided_slice %154 {offsets = [0, 96], sizes = [16, 32], strides = [1, 1]} : vector<16x384xf32> to vector<16x32xf32>
    %171 = vector.extract_strided_slice %154 {offsets = [0, 224], sizes = [16, 32], strides = [1, 1]} : vector<16x384xf32> to vector<16x32xf32>
    %172 = arith.truncf %170 : vector<16x32xf32> to vector<16x32xbf16>
    %173 = arith.truncf %171 : vector<16x32xf32> to vector<16x32xbf16>
    %cst_78 = arith.constant dense<0.000000e+00> : vector<16x16xf32>
    %174 = tpu.matmul %172, %173, %cst_78 {dimension_numbers = #tpu.dot_dimension_numbers<[1], [1], [0], [0], [0, 0, 1, 0], [], []>} : vector<16x32xbf16>, vector<16x32xbf16>, vector<16x16xf32> -> vector<16x16xf32>
    %175 = tpu.concatenate %159, %164, %169, %174 in 0 : vector<16x16xf32>, vector<16x16xf32>, vector<16x16xf32>, vector<16x16xf32> -> vector<64x16xf32>
    %cst_79 = arith.constant 0.176776692 : f32
    %176 = vector.broadcast %cst_79 : f32 to vector<64x16xf32>
    %177 = arith.mulf %175, %176 : vector<64x16xf32>
    %178 = arith.addf %177, %7 : vector<64x16xf32>
    %cst_80 = arith.constant dense<0xFF800000> : vector<64xf32>
    %179 = vector.multi_reduction <maximumf>, %178, %cst_80 [1] : vector<64x16xf32> to vector<64xf32>
    %180 = vector.shape_cast %179 : vector<64xf32> to vector<64x1xf32>
    %181 = vector.broadcast %180 : vector<64x1xf32> to vector<64x16xf32>
    %182 = arith.subf %178, %181 : vector<64x16xf32>
    %183 = math.exp %182 : vector<64x16xf32>
    %cst_81 = arith.constant dense<0.000000e+00> : vector<64xf32>
    %184 = vector.multi_reduction <add>, %183, %cst_81 [1] : vector<64x16xf32> to vector<64xf32>
    %185 = vector.shape_cast %184 : vector<64xf32> to vector<64x1xf32>
    %186 = tpu.reciprocal %185 {approx = true} : vector<64x1xf32> -> vector<64x1xf32>
    %187 = vector.broadcast %186 : vector<64x1xf32> to vector<64x16xf32>
    %188 = arith.mulf %183, %187 : vector<64x16xf32>
    %189 = vector.extract_strided_slice %154 {offsets = [0, 256], sizes = [16, 32], strides = [1, 1]} : vector<16x384xf32> to vector<16x32xf32>
    %190 = vector.extract_strided_slice %188 {offsets = [0, 0], sizes = [16, 16], strides = [1, 1]} : vector<64x16xf32> to vector<16x16xf32>
    %191 = arith.truncf %190 : vector<16x16xf32> to vector<16x16xbf16>
    %192 = arith.truncf %189 : vector<16x32xf32> to vector<16x32xbf16>
    %cst_82 = arith.constant dense<0.000000e+00> : vector<16x32xf32>
    %193 = tpu.matmul %191, %192, %cst_82 {dimension_numbers = #tpu.dot_dimension_numbers<[1], [0], [0], [1], [0, 0, 1, 1], [], []>} : vector<16x16xbf16>, vector<16x32xbf16>, vector<16x32xf32> -> vector<16x32xf32>
    %194 = vector.extract_strided_slice %154 {offsets = [0, 288], sizes = [16, 32], strides = [1, 1]} : vector<16x384xf32> to vector<16x32xf32>
    %195 = vector.extract_strided_slice %188 {offsets = [16, 0], sizes = [16, 16], strides = [1, 1]} : vector<64x16xf32> to vector<16x16xf32>
    %196 = arith.truncf %195 : vector<16x16xf32> to vector<16x16xbf16>
    %197 = arith.truncf %194 : vector<16x32xf32> to vector<16x32xbf16>
    %cst_83 = arith.constant dense<0.000000e+00> : vector<16x32xf32>
    %198 = tpu.matmul %196, %197, %cst_83 {dimension_numbers = #tpu.dot_dimension_numbers<[1], [0], [0], [1], [0, 0, 1, 1], [], []>} : vector<16x16xbf16>, vector<16x32xbf16>, vector<16x32xf32> -> vector<16x32xf32>
    %199 = vector.extract_strided_slice %154 {offsets = [0, 320], sizes = [16, 32], strides = [1, 1]} : vector<16x384xf32> to vector<16x32xf32>
    %200 = vector.extract_strided_slice %188 {offsets = [32, 0], sizes = [16, 16], strides = [1, 1]} : vector<64x16xf32> to vector<16x16xf32>
    %201 = arith.truncf %200 : vector<16x16xf32> to vector<16x16xbf16>
    %202 = arith.truncf %199 : vector<16x32xf32> to vector<16x32xbf16>
    %cst_84 = arith.constant dense<0.000000e+00> : vector<16x32xf32>
    %203 = tpu.matmul %201, %202, %cst_84 {dimension_numbers = #tpu.dot_dimension_numbers<[1], [0], [0], [1], [0, 0, 1, 1], [], []>} : vector<16x16xbf16>, vector<16x32xbf16>, vector<16x32xf32> -> vector<16x32xf32>
    %204 = vector.extract_strided_slice %154 {offsets = [0, 352], sizes = [16, 32], strides = [1, 1]} : vector<16x384xf32> to vector<16x32xf32>
    %205 = vector.extract_strided_slice %188 {offsets = [48, 0], sizes = [16, 16], strides = [1, 1]} : vector<64x16xf32> to vector<16x16xf32>
    %206 = arith.truncf %205 : vector<16x16xf32> to vector<16x16xbf16>
    %207 = arith.truncf %204 : vector<16x32xf32> to vector<16x32xbf16>
    %cst_85 = arith.constant dense<0.000000e+00> : vector<16x32xf32>
    %208 = tpu.matmul %206, %207, %cst_85 {dimension_numbers = #tpu.dot_dimension_numbers<[1], [0], [0], [1], [0, 0, 1, 1], [], []>} : vector<16x16xbf16>, vector<16x32xbf16>, vector<16x32xf32> -> vector<16x32xf32>
    %209 = tpu.concatenate %193, %198, %203, %208 in 1 : vector<16x32xf32>, vector<16x32xf32>, vector<16x32xf32>, vector<16x32xf32> -> vector<16x128xf32>
    %c1_86 = arith.constant 1 : index
    %c0_87 = arith.constant 0 : index
    %c0_88 = arith.constant 0 : index
    %210 = vector.load %arg7[%c1_86, %c0_87, %c0_88] : memref<2x128x128xbf16, #tpu.memory_space<vmem>>, vector<1x128x128xbf16>
    %211 = vector.shape_cast %210 : vector<1x128x128xbf16> to vector<128x128xbf16>
    %212 = arith.truncf %209 : vector<16x128xf32> to vector<16x128xbf16>
    %cst_89 = arith.constant dense<0.000000e+00> : vector<16x128xf32>
    %213 = tpu.matmul %212, %211, %cst_89 {dimension_numbers = #tpu.dot_dimension_numbers<[1], [0], [0], [1], [0, 0, 1, 1], [], []>} : vector<16x128xbf16>, vector<128x128xbf16>, vector<16x128xf32> -> vector<16x128xf32>
    %c1_90 = arith.constant 1 : index
    %c0_91 = arith.constant 0 : index
    %c0_92 = arith.constant 0 : index
    %214 = vector.load %arg8[%c1_90, %c0_91, %c0_92] : memref<2x1x128xf32, #tpu.memory_space<vmem>>, vector<1x1x128xf32>
    %215 = vector.shape_cast %214 : vector<1x1x128xf32> to vector<1x128xf32>
    %216 = vector.broadcast %215 : vector<1x128xf32> to vector<16x128xf32>
    %217 = arith.addf %213, %216 : vector<16x128xf32>
    %218 = arith.addf %146, %217 : vector<16x128xf32>
    %c1_93 = arith.constant 1 : index
    %c0_94 = arith.constant 0 : index
    %c0_95 = arith.constant 0 : index
    %219 = vector.load %arg13[%c1_93, %c0_94, %c0_95] : memref<2x1x128xf32, #tpu.memory_space<vmem>>, vector<1x1x128xf32>
    %220 = vector.shape_cast %219 : vector<1x1x128xf32> to vector<1x128xf32>
    %c1_96 = arith.constant 1 : index
    %c0_97 = arith.constant 0 : index
    %c0_98 = arith.constant 0 : index
    %221 = vector.load %arg14[%c1_96, %c0_97, %c0_98] : memref<2x1x128xf32, #tpu.memory_space<vmem>>, vector<1x1x128xf32>
    %222 = vector.shape_cast %221 : vector<1x1x128xf32> to vector<1x128xf32>
    %cst_99 = arith.constant dense<0.000000e+00> : vector<16xf32>
    %223 = vector.multi_reduction <add>, %218, %cst_99 [1] : vector<16x128xf32> to vector<16xf32>
    %224 = vector.shape_cast %223 : vector<16xf32> to vector<16x1xf32>
    %cst_100 = arith.constant 1.280000e+02 : f32
    %225 = vector.broadcast %cst_100 : f32 to vector<16x1xf32>
    %226 = arith.divf %224, %225 : vector<16x1xf32>
    %227 = vector.broadcast %226 : vector<16x1xf32> to vector<16x128xf32>
    %228 = arith.subf %218, %227 : vector<16x128xf32>
    %229 = arith.mulf %228, %228 : vector<16x128xf32>
    %cst_101 = arith.constant dense<0.000000e+00> : vector<16xf32>
    %230 = vector.multi_reduction <add>, %229, %cst_101 [1] : vector<16x128xf32> to vector<16xf32>
    %231 = vector.shape_cast %230 : vector<16xf32> to vector<16x1xf32>
    %cst_102 = arith.constant 1.280000e+02 : f32
    %232 = vector.broadcast %cst_102 : f32 to vector<16x1xf32>
    %233 = arith.divf %231, %232 : vector<16x1xf32>
    %cst_103 = arith.constant 9.99999974E-6 : f32
    %234 = vector.broadcast %cst_103 : f32 to vector<16x1xf32>
    %235 = arith.addf %233, %234 : vector<16x1xf32>
    %236 = math.rsqrt %235 : vector<16x1xf32>
    %237 = vector.broadcast %236 : vector<16x1xf32> to vector<16x128xf32>
    %238 = arith.mulf %228, %237 : vector<16x128xf32>
    %239 = vector.broadcast %220 : vector<1x128xf32> to vector<16x128xf32>
    %240 = arith.mulf %238, %239 : vector<16x128xf32>
    %241 = vector.broadcast %222 : vector<1x128xf32> to vector<16x128xf32>
    %242 = arith.addf %240, %241 : vector<16x128xf32>
    %c1_104 = arith.constant 1 : index
    %c0_105 = arith.constant 0 : index
    %c0_106 = arith.constant 0 : index
    %243 = vector.load %arg9[%c1_104, %c0_105, %c0_106] : memref<2x128x256xbf16, #tpu.memory_space<vmem>>, vector<1x128x256xbf16>
    %244 = vector.shape_cast %243 : vector<1x128x256xbf16> to vector<128x256xbf16>
    %245 = arith.truncf %242 : vector<16x128xf32> to vector<16x128xbf16>
    %cst_107 = arith.constant dense<0.000000e+00> : vector<16x256xf32>
    %246 = tpu.matmul %245, %244, %cst_107 {dimension_numbers = #tpu.dot_dimension_numbers<[1], [0], [0], [1], [0, 0, 1, 1], [], []>} : vector<16x128xbf16>, vector<128x256xbf16>, vector<16x256xf32> -> vector<16x256xf32>
    %c1_108 = arith.constant 1 : index
    %c0_109 = arith.constant 0 : index
    %c0_110 = arith.constant 0 : index
    %247 = vector.load %arg10[%c1_108, %c0_109, %c0_110] : memref<2x1x256xf32, #tpu.memory_space<vmem>>, vector<1x1x256xf32>
    %248 = vector.shape_cast %247 : vector<1x1x256xf32> to vector<1x256xf32>
    %249 = vector.broadcast %248 : vector<1x256xf32> to vector<16x256xf32>
    %250 = arith.addf %246, %249 : vector<16x256xf32>
    %cst_111 = arith.constant 0.000000e+00 : f32
    %251 = vector.broadcast %cst_111 : f32 to vector<16x256xf32>
    %252 = arith.maximumf %250, %251 : vector<16x256xf32>
    %c1_112 = arith.constant 1 : index
    %c0_113 = arith.constant 0 : index
    %c0_114 = arith.constant 0 : index
    %253 = vector.load %arg11[%c1_112, %c0_113, %c0_114] : memref<2x256x128xbf16, #tpu.memory_space<vmem>>, vector<1x256x128xbf16>
    %254 = vector.shape_cast %253 : vector<1x256x128xbf16> to vector<256x128xbf16>
    %255 = arith.truncf %252 : vector<16x256xf32> to vector<16x256xbf16>
    %cst_115 = arith.constant dense<0.000000e+00> : vector<16x128xf32>
    %256 = tpu.matmul %255, %254, %cst_115 {dimension_numbers = #tpu.dot_dimension_numbers<[1], [0], [0], [1], [0, 0, 1, 1], [], []>} : vector<16x256xbf16>, vector<256x128xbf16>, vector<16x128xf32> -> vector<16x128xf32>
    %c1_116 = arith.constant 1 : index
    %c0_117 = arith.constant 0 : index
    %c0_118 = arith.constant 0 : index
    %257 = vector.load %arg12[%c1_116, %c0_117, %c0_118] : memref<2x1x128xf32, #tpu.memory_space<vmem>>, vector<1x1x128xf32>
    %258 = vector.shape_cast %257 : vector<1x1x128xf32> to vector<1x128xf32>
    %259 = vector.broadcast %258 : vector<1x128xf32> to vector<16x128xf32>
    %260 = arith.addf %256, %259 : vector<16x128xf32>
    %261 = arith.addf %242, %260 : vector<16x128xf32>
    %c1_119 = arith.constant 1 : index
    %c0_120 = arith.constant 0 : index
    %c0_121 = arith.constant 0 : index
    %262 = vector.load %arg15[%c1_119, %c0_120, %c0_121] : memref<2x1x128xf32, #tpu.memory_space<vmem>>, vector<1x1x128xf32>
    %263 = vector.shape_cast %262 : vector<1x1x128xf32> to vector<1x128xf32>
    %c1_122 = arith.constant 1 : index
    %c0_123 = arith.constant 0 : index
    %c0_124 = arith.constant 0 : index
    %264 = vector.load %arg16[%c1_122, %c0_123, %c0_124] : memref<2x1x128xf32, #tpu.memory_space<vmem>>, vector<1x1x128xf32>
    %265 = vector.shape_cast %264 : vector<1x1x128xf32> to vector<1x128xf32>
    %cst_125 = arith.constant dense<0.000000e+00> : vector<16xf32>
    %266 = vector.multi_reduction <add>, %261, %cst_125 [1] : vector<16x128xf32> to vector<16xf32>
    %267 = vector.shape_cast %266 : vector<16xf32> to vector<16x1xf32>
    %cst_126 = arith.constant 1.280000e+02 : f32
    %268 = vector.broadcast %cst_126 : f32 to vector<16x1xf32>
    %269 = arith.divf %267, %268 : vector<16x1xf32>
    %270 = vector.broadcast %269 : vector<16x1xf32> to vector<16x128xf32>
    %271 = arith.subf %261, %270 : vector<16x128xf32>
    %272 = arith.mulf %271, %271 : vector<16x128xf32>
    %cst_127 = arith.constant dense<0.000000e+00> : vector<16xf32>
    %273 = vector.multi_reduction <add>, %272, %cst_127 [1] : vector<16x128xf32> to vector<16xf32>
    %274 = vector.shape_cast %273 : vector<16xf32> to vector<16x1xf32>
    %cst_128 = arith.constant 1.280000e+02 : f32
    %275 = vector.broadcast %cst_128 : f32 to vector<16x1xf32>
    %276 = arith.divf %274, %275 : vector<16x1xf32>
    %cst_129 = arith.constant 9.99999974E-6 : f32
    %277 = vector.broadcast %cst_129 : f32 to vector<16x1xf32>
    %278 = arith.addf %276, %277 : vector<16x1xf32>
    %279 = math.rsqrt %278 : vector<16x1xf32>
    %280 = vector.broadcast %279 : vector<16x1xf32> to vector<16x128xf32>
    %281 = arith.mulf %271, %280 : vector<16x128xf32>
    %282 = vector.broadcast %263 : vector<1x128xf32> to vector<16x128xf32>
    %283 = arith.mulf %281, %282 : vector<16x128xf32>
    %284 = vector.broadcast %265 : vector<1x128xf32> to vector<16x128xf32>
    %285 = arith.addf %283, %284 : vector<16x128xf32>
    %c0_130 = arith.constant 0 : index
    %c0_131 = arith.constant 0 : index
    %286 = vector.load %arg1[%c0_130, %c0_131] : memref<2x16xf32, #tpu.memory_space<vmem>>, vector<2x16xf32>
    %cst_132 = arith.constant dense<0.000000e+00> : vector<2x128xf32>
    %287 = tpu.matmul %286, %285, %cst_132 {dimension_numbers = #tpu.dot_dimension_numbers<[1], [0], [0], [1], [0, 0, 1, 1], [], []>} : vector<2x16xf32>, vector<16x128xf32>, vector<2x128xf32> -> vector<2x128xf32>
    %c0_133 = arith.constant 0 : index
    %c0_134 = arith.constant 0 : index
    %288 = vector.load %arg17[%c0_133, %c0_134] : memref<128x256xbf16, #tpu.memory_space<vmem>>, vector<128x256xbf16>
    %289 = arith.truncf %287 : vector<2x128xf32> to vector<2x128xbf16>
    %cst_135 = arith.constant dense<0.000000e+00> : vector<2x256xf32>
    %290 = tpu.matmul %289, %288, %cst_135 {dimension_numbers = #tpu.dot_dimension_numbers<[1], [0], [0], [1], [0, 0, 1, 1], [], []>} : vector<2x128xbf16>, vector<128x256xbf16>, vector<2x256xf32> -> vector<2x256xf32>
    %c0_136 = arith.constant 0 : index
    %c0_137 = arith.constant 0 : index
    %291 = vector.load %arg18[%c0_136, %c0_137] : memref<1x256xf32, #tpu.memory_space<vmem>>, vector<1x256xf32>
    %292 = vector.broadcast %291 : vector<1x256xf32> to vector<2x256xf32>
    %293 = arith.addf %290, %292 : vector<2x256xf32>
    %cst_138 = arith.constant 0.000000e+00 : f32
    %294 = vector.broadcast %cst_138 : f32 to vector<2x256xf32>
    %295 = arith.maximumf %293, %294 : vector<2x256xf32>
    %c0_139 = arith.constant 0 : index
    %c0_140 = arith.constant 0 : index
    %296 = vector.load %arg19[%c0_139, %c0_140] : memref<256x128xbf16, #tpu.memory_space<vmem>>, vector<256x128xbf16>
    %297 = arith.truncf %295 : vector<2x256xf32> to vector<2x256xbf16>
    %cst_141 = arith.constant dense<0.000000e+00> : vector<2x128xf32>
    %298 = tpu.matmul %297, %296, %cst_141 {dimension_numbers = #tpu.dot_dimension_numbers<[1], [0], [0], [1], [0, 0, 1, 1], [], []>} : vector<2x256xbf16>, vector<256x128xbf16>, vector<2x128xf32> -> vector<2x128xf32>
    %c0_142 = arith.constant 0 : index
    %c0_143 = arith.constant 0 : index
    %299 = vector.load %arg20[%c0_142, %c0_143] : memref<1x128xf32, #tpu.memory_space<vmem>>, vector<1x128xf32>
    %300 = vector.broadcast %299 : vector<1x128xf32> to vector<2x128xf32>
    %301 = arith.addf %298, %300 : vector<2x128xf32>
    %c0_144 = arith.constant 0 : index
    %c0_145 = arith.constant 0 : index
    %302 = vector.load %arg21[%c0_144, %c0_145] : memref<2x128xf32, #tpu.memory_space<vmem>>, vector<2x128xf32>
    tpu.vector_store %arg21[%c0_144, %c0_145], %301 {strides = array<i32>} : memref<2x128xf32, #tpu.memory_space<vmem>>, vector<2x128xf32>,
    return
  }
}

</mosaic_0001>

<llo_original>
// kernel: snake_qnet_forward.1
$region0: #{snake_qnet_forward.1}
  #allocation0 [shape = 'u32[]', space=smem, size = 0x4, offset = 0x4, fixed_abs, tag = 'smem constant byte address 0x4 - core index']
  #allocation1 [shape = 'u32[144,128]{1,0:T(1,128)}', space=vmem, size = 0x12000, scoped, tag = 'internal scratch']
  %s0 = inlined_call_operand.vmem [shape: f32[16,16], index: 0, kind: input, shape index: {}]
  %s1 = inlined_call_operand.hbm [shape: f32[2,16], index: 1, kind: input, shape index: {}]
  %s2 = inlined_call_operand.vmem [shape: f32[64,16], index: 2, kind: input, shape index: {}]
  %s3 = inlined_call_operand.hbm [shape: bf16[16,128], index: 3, kind: input, shape index: {}]
  %s4 = inlined_call_operand.vmem [shape: f32[1,128], index: 4, kind: input, shape index: {}]
  %s5 = inlined_call_operand.hbm [shape: bf16[2,128,384], index: 5, kind: input, shape index: {}]
  %s6 = inlined_call_operand.vmem [shape: f32[2,1,384], index: 6, kind: input, shape index: {}]
  %s7 = inlined_call_operand.vmem [shape: bf16[2,128,128], index: 7, kind: input, shape index: {}]
  %s8 = inlined_call_operand.hbm [shape: f32[2,1,128], index: 8, kind: input, shape index: {}]
  %s9 = inlined_call_operand.hbm [shape: bf16[2,128,256], index: 9, kind: input, shape index: {}]
  %s10 = inlined_call_operand.hbm [shape: f32[2,1,256], index: 10, kind: input, shape index: {}]
  %s11 = inlined_call_operand.hbm [shape: bf16[2,256,128], index: 11, kind: input, shape index: {}]
  %s12 = inlined_call_operand.hbm [shape: f32[2,1,128], index: 12, kind: input, shape index: {}]
  %s13 = inlined_call_operand.hbm [shape: f32[2,1,128], index: 13, kind: input, shape index: {}]
  %s14 = inlined_call_operand.hbm [shape: f32[2,1,128], index: 14, kind: input, shape index: {}]
  %s15 = inlined_call_operand.hbm [shape: f32[2,1,128], index: 15, kind: input, shape index: {}]
  %s16 = inlined_call_operand.hbm [shape: f32[2,1,128], index: 16, kind: input, shape index: {}]
  %s17 = inlined_call_operand.hbm [shape: bf16[128,256], index: 17, kind: input, shape index: {}]
  %s18 = inlined_call_operand.hbm [shape: f32[1,256], index: 18, kind: input, shape index: {}]
  %s19 = inlined_call_operand.hbm [shape: bf16[256,128], index: 19, kind: input, shape index: {}]
  %s20 = inlined_call_operand.hbm [shape: f32[1,128], index: 20, kind: input, shape index: {}]
  %s21 = inlined_call_operand.hbm [shape: f32[2,128], index: 21, kind: output, shape index: {}]
  %s22 = sld [smem:[#allocation0]]
  $region158: #{snake_qnet_forward.1} parent=0
    _
  %s24 = ssub.s32 1, %s22
  %s25 = scalar_select 0, %s24, %s22
  $region1: #{snake_qnet_forward.1} parent=0
    #allocation2 [shape = 'u8[1024]{0}', space=vmem, size = 0x400, scoped, tag = 'input window, operand 1, single buffered']
    #allocation3 [shape = 's32[1]{0}', space=sflag, size = 0x4, scoped, tag = 'scoped memory for snake_qnet_forward.1']
    #allocation4 [shape = 's32[1]{0}', space=sflag, size = 0x4, scoped, tag = 'scoped memory for snake_qnet_forward.1']
    #allocation5 [shape = 'u8[4096]{0}', space=vmem, size = 0x1000, scoped, tag = 'input window, operand 3, single buffered']
    #allocation6 [shape = 's32[1]{0}', space=sflag, size = 0x4, scoped, tag = 'scoped memory for snake_qnet_forward.1']
    #allocation7 [shape = 'u8[196608]{0}', space=vmem, size = 0x30000, scoped, tag = 'input window, operand 5, single buffered']
    #allocation8 [shape = 'u8[1024]{0}', space=vmem, size = 0x400, scoped, tag = 'input window, operand 8, single buffered']
    #allocation9 [shape = 's32[1]{0}', space=sflag, size = 0x4, scoped, tag = 'scoped memory for snake_qnet_forward.1']
    #allocation10 [shape = 'u8[131072]{0}', space=vmem, size = 0x20000, scoped, tag = 'input window, operand 9, single buffered']
    #allocation11 [shape = 'u8[2048]{0}', space=vmem, size = 0x800, scoped, tag = 'input window, operand 10, single buffered']
    #allocation12 [shape = 's32[1]{0}', space=sflag, size = 0x4, scoped, tag = 'scoped memory for snake_qnet_forward.1']
    #allocation13 [shape = 'u8[131072]{0}', space=vmem, size = 0x20000, scoped, tag = 'input window, operand 11, single buffered']
    #allocation14 [shape = 'u8[1024]{0}', space=vmem, size = 0x400, scoped, tag = 'input window, operand 12, single buffered']
    #allocation15 [shape = 's32[1]{0}', space=sflag, size = 0x4, scoped, tag = 'scoped memory for snake_qnet_forward.1']
    #allocation16 [shape = 'u8[1024]{0}', space=vmem, size = 0x400, scoped, tag = 'input window, operand 13, single buffered']
    #allocation17 [shape = 'u8[1024]{0}', space=vmem, size = 0x400, scoped, tag = 'input window, operand 14, single buffered']
    #allocation18 [shape = 's32[1]{0}', space=sflag, size = 0x4, scoped, tag = 'scoped memory for snake_qnet_forward.1']
    #allocation19 [shape = 'u8[1024]{0}', space=vmem, size = 0x400, scoped, tag = 'input window, operand 15, single buffered']
    #allocation20 [shape = 'u8[1024]{0}', space=vmem, size = 0x400, scoped, tag = 'input window, operand 16, single buffered']
    #allocation21 [shape = 's32[1]{0}', space=sflag, size = 0x4, scoped, tag = 'scoped memory for snake_qnet_forward.1']
    #allocation22 [shape = 'u8[65536]{0}', space=vmem, size = 0x10000, scoped, tag = 'input window, operand 17, single buffered']
    #allocation23 [shape = 'u8[1024]{0}', space=vmem, size = 0x400, scoped, tag = 'input window, operand 18, single buffered']
    #allocation24 [shape = 's32[1]{0}', space=sflag, size = 0x4, scoped, tag = 'scoped memory for snake_qnet_forward.1']
    #allocation25 [shape = 'u8[65536]{0}', space=vmem, size = 0x10000, scoped, tag = 'input window, operand 19, single buffered']
    #allocation26 [shape = 'u8[512]{0}', space=vmem, size = 0x400, scoped, tag = 'input window, operand 20, single buffered']
    #allocation27 [shape = 's32[1]{0}', space=sflag, size = 0x4, scoped, tag = 'scoped memory for snake_qnet_forward.1']
    #allocation28 [shape = 'u8[1024]{0}', space=vmem, size = 0x400, scoped, tag = 'output window, operand 0, single buffered']
    %26 = vsyncpa [#allocation3], 0
    %27 = vsyncpa [#allocation6], 0
    %28 = vsyncpa [#allocation9], 0
    %29 = vsyncpa [#allocation12], 0
    %30 = vsyncpa [#allocation15], 0
    %31 = vsyncpa [#allocation18], 0
    %32 = vsyncpa [#allocation21], 0
    %33 = vsyncpa [#allocation24], 0
    %34 = vsyncpa [#allocation27], 0
    %35 = vsyncpa [#allocation4], 0
    // Predicated region
    $region2: #{snake_qnet_forward.1} parent=1 // pred_check
      _
    $region3: #{snake_qnet_forward.1} parent=1 // pred_check_branch
      %37 = sbr.rel (0) target = $region5
    $region4: #{snake_qnet_forward.1} parent=1 // pred_region
      _
    $region5: #{snake_qnet_forward.1} parent=1 // pred_fallthru
      _
    // Predicated region
    $region6: #{snake_qnet_forward.1} parent=1 // pred_check
      _
    $region7: #{snake_qnet_forward.1} parent=1 // pred_check_branch
      %39 = sbr.rel (0) target = $region9
    $region8: #{snake_qnet_forward.1} parent=1 // pred_region
      %s41 = ssub.s32 32, 32
      %42 = vsyncadd [#allocation3], %s41
      %s44 = sshll.u32 [#allocation2], 4
      %s45 = int_to_ptr.vmem [resolvable:$true] %s44
      %47 = dma.hbm_to_vmem [thread:$0]  %s1, 32, %s45, [#allocation3]
    $region9: #{snake_qnet_forward.1} parent=1 // pred_fallthru
      _
    // Predicated region
    $region10: #{snake_qnet_forward.1} parent=1 // pred_check
      _
    $region11: #{snake_qnet_forward.1} parent=1 // pred_check_branch
      %49 = sbr.rel (0) target = $region13
    $region12: #{snake_qnet_forward.1} parent=1 // pred_region
      _
    $region13: #{snake_qnet_forward.1} parent=1 // pred_fallthru
      _
    // Predicated region
    $region14: #{snake_qnet_forward.1} parent=1 // pred_check
      _
    $region15: #{snake_qnet_forward.1} parent=1 // pred_check_branch
      %51 = sbr.rel (0) target = $region17
    $region16: #{snake_qnet_forward.1} parent=1 // pred_region
      %s53 = ssub.s32 128, 128
      %54 = vsyncadd [#allocation6], %s53
      %s55 = sshll.u32 [#allocation5], 4
      %s56 = int_to_ptr.vmem [resolvable:$true] %s55
      %61 = dma.hbm_to_vmem [thread:$0]  %s3, 128, %s56, [#allocation6], 64, 64, 4
    $region17: #{snake_qnet_forward.1} parent=1 // pred_fallthru
      _
    // Predicated region
    $region18: #{snake_qnet_forward.1} parent=1 // pred_check
      _
    $region19: #{snake_qnet_forward.1} parent=1 // pred_check_branch
      %63 = sbr.rel (0) target = $region21
    $region20: #{snake_qnet_forward.1} parent=1 // pred_region
      _
    $region21: #{snake_qnet_forward.1} parent=1 // pred_fallthru
      _
    // Predicated region
    $region22: #{snake_qnet_forward.1} parent=1 // pred_check
      _
    $region23: #{snake_qnet_forward.1} parent=1 // pred_check_branch
      %65 = sbr.rel (0) target = $region25
    $region24: #{snake_qnet_forward.1} parent=1 // pred_region
      %s67 = ssub.s32 6144, 6144
      %68 = vsyncadd [#allocation6], %s67
      %s69 = sshll.u32 [#allocation7], 4
      %s70 = int_to_ptr.vmem [resolvable:$true] %s69
      %75 = dma.hbm_to_vmem [thread:$0]  %s5, 6144, %s70, [#allocation6], 192, 192, 12
    $region25: #{snake_qnet_forward.1} parent=1 // pred_fallthru
      _
    // Predicated region
    $region26: #{snake_qnet_forward.1} parent=1 // pred_check
      _
    $region27: #{snake_qnet_forward.1} parent=1 // pred_check_branch
      %77 = sbr.rel (0) target = $region29
    $region28: #{snake_qnet_forward.1} parent=1 // pred_region
      _
    $region29: #{snake_qnet_forward.1} parent=1 // pred_fallthru
      _
    // Predicated region
    $region30: #{snake_qnet_forward.1} parent=1 // pred_check
      _
    $region31: #{snake_qnet_forward.1} parent=1 // pred_check_branch
      %79 = sbr.rel (0) target = $region33
    $region32: #{snake_qnet_forward.1} parent=1 // pred_region
      _
    $region33: #{snake_qnet_forward.1} parent=1 // pred_fallthru
      _
    // Predicated region
    $region34: #{snake_qnet_forward.1} parent=1 // pred_check
      _
    $region35: #{snake_qnet_forward.1} parent=1 // pred_check_branch
      %81 = sbr.rel (0) target = $region37
    $region36: #{snake_qnet_forward.1} parent=1 // pred_region
      %s83 = ssub.s32 32, 32
      %84 = vsyncadd [#allocation9], %s83
      %s85 = sshll.u32 [#allocation8], 4
      %s86 = int_to_ptr.vmem [resolvable:$true] %s85
      %91 = dma.hbm_to_vmem [thread:$0]  %s8, 32, %s86, [#allocation9], 16, 16, 1
    $region37: #{snake_qnet_forward.1} parent=1 // pred_fallthru
      _
    // Predicated region
    $region38: #{snake_qnet_forward.1} parent=1 // pred_check
      _
    $region39: #{snake_qnet_forward.1} parent=1 // pred_check_branch
      %93 = sbr.rel (0) target = $region41
    $region40: #{snake_qnet_forward.1} parent=1 // pred_region
      %s95 = ssub.s32 4096, 4096
      %96 = vsyncadd [#allocation9], %s95
      %s97 = sshll.u32 [#allocation10], 4
      %s98 = int_to_ptr.vmem [resolvable:$true] %s97
      %103 = dma.hbm_to_vmem [thread:$0]  %s9, 4096, %s98, [#allocation9], 128, 128, 8
    $region41: #{snake_qnet_forward.1} parent=1 // pred_fallthru
      _
    // Predicated region
    $region42: #{snake_qnet_forward.1} parent=1 // pred_check
      _
    $region43: #{snake_qnet_forward.1} parent=1 // pred_check_branch
      %105 = sbr.rel (0) target = $region45
    $region44: #{snake_qnet_forward.1} parent=1 // pred_region
      %s107 = ssub.s32 64, 64
      %108 = vsyncadd [#allocation12], %s107
      %s109 = sshll.u32 [#allocation11], 4
      %s110 = int_to_ptr.vmem [resolvable:$true] %s109
      %115 = dma.hbm_to_vmem [thread:$0]  %s10, 64, %s110, [#allocation12], 32, 32, 2
    $region45: #{snake_qnet_forward.1} parent=1 // pred_fallthru
      _
    // Predicated region
    $region46: #{snake_qnet_forward.1} parent=1 // pred_check
      _
    $region47: #{snake_qnet_forward.1} parent=1 // pred_check_branch
      %117 = sbr.rel (0) target = $region49
    $region48: #{snake_qnet_forward.1} parent=1 // pred_region
      %s119 = ssub.s32 4096, 4096
      %120 = vsyncadd [#allocation12], %s119
      %s121 = sshll.u32 [#allocation13], 4
      %s122 = int_to_ptr.vmem [resolvable:$true] %s121
      %127 = dma.hbm_to_vmem [thread:$0]  %s11, 4096, %s122, [#allocation12], 64, 64, 4
    $region49: #{snake_qnet_forward.1} parent=1 // pred_fallthru
      _
    // Predicated region
    $region50: #{snake_qnet_forward.1} parent=1 // pred_check
      _
    $region51: #{snake_qnet_forward.1} parent=1 // pred_check_branch
      %129 = sbr.rel (0) target = $region53
    $region52: #{snake_qnet_forward.1} parent=1 // pred_region
      %s131 = ssub.s32 32, 32
      %132 = vsyncadd [#allocation15], %s131
      %s133 = sshll.u32 [#allocation14], 4
      %s134 = int_to_ptr.vmem [resolvable:$true] %s133
      %139 = dma.hbm_to_vmem [thread:$0]  %s12, 32, %s134, [#allocation15], 16, 16, 1
    $region53: #{snake_qnet_forward.1} parent=1 // pred_fallthru
      _
    // Predicated region
    $region54: #{snake_qnet_forward.1} parent=1 // pred_check
      _
    $region55: #{snake_qnet_forward.1} parent=1 // pred_check_branch
      %141 = sbr.rel (0) target = $region57
    $region56: #{snake_qnet_forward.1} parent=1 // pred_region
      %s143 = ssub.s32 32, 32
      %144 = vsyncadd [#allocation15], %s143
      %s145 = sshll.u32 [#allocation16], 4
      %s146 = int_to_ptr.vmem [resolvable:$true] %s145
      %151 = dma.hbm_to_vmem [thread:$0]  %s13, 32, %s146, [#allocation15], 16, 16, 1
    $region57: #{snake_qnet_forward.1} parent=1 // pred_fallthru
      _
    // Predicated region
    $region58: #{snake_qnet_forward.1} parent=1 // pred_check
      _
    $region59: #{snake_qnet_forward.1} parent=1 // pred_check_branch
      %153 = sbr.rel (0) target = $region61
    $region60: #{snake_qnet_forward.1} parent=1 // pred_region
      %s155 = ssub.s32 32, 32
      %156 = vsyncadd [#allocation18], %s155
      %s157 = sshll.u32 [#allocation17], 4
      %s158 = int_to_ptr.vmem [resolvable:$true] %s157
      %163 = dma.hbm_to_vmem [thread:$0]  %s14, 32, %s158, [#allocation18], 16, 16, 1
    $region61: #{snake_qnet_forward.1} parent=1 // pred_fallthru
      _
    // Predicated region
    $region62: #{snake_qnet_forward.1} parent=1 // pred_check
      _
    $region63: #{snake_qnet_forward.1} parent=1 // pred_check_branch
      %165 = sbr.rel (0) target = $region65
    $region64: #{snake_qnet_forward.1} parent=1 // pred_region
      %s167 = ssub.s32 32, 32
      %168 = vsyncadd [#allocation18], %s167
      %s169 = sshll.u32 [#allocation19], 4
      %s170 = int_to_ptr.vmem [resolvable:$true] %s169
      %175 = dma.hbm_to_vmem [thread:$0]  %s15, 32, %s170, [#allocation18], 16, 16, 1
    $region65: #{snake_qnet_forward.1} parent=1 // pred_fallthru
      _
    // Predicated region
    $region66: #{snake_qnet_forward.1} parent=1 // pred_check
      _
    $region67: #{snake_qnet_forward.1} parent=1 // pred_check_branch
      %177 = sbr.rel (0) target = $region69
    $region68: #{snake_qnet_forward.1} parent=1 // pred_region
      %s179 = ssub.s32 32, 32
      %180 = vsyncadd [#allocation21], %s179
      %s181 = sshll.u32 [#allocation20], 4
      %s182 = int_to_ptr.vmem [resolvable:$true] %s181
      %187 = dma.hbm_to_vmem [thread:$0]  %s16, 32, %s182, [#allocation21], 16, 16, 1
    $region69: #{snake_qnet_forward.1} parent=1 // pred_fallthru
      _
    // Predicated region
    $region70: #{snake_qnet_forward.1} parent=1 // pred_check
      _
    $region71: #{snake_qnet_forward.1} parent=1 // pred_check_branch
      %189 = sbr.rel (0) target = $region73
    $region72: #{snake_qnet_forward.1} parent=1 // pred_region
      %s191 = ssub.s32 2048, 2048
      %192 = vsyncadd [#allocation21], %s191
      %s193 = sshll.u32 [#allocation22], 4
      %s194 = int_to_ptr.vmem [resolvable:$true] %s193
      %199 = dma.hbm_to_vmem [thread:$0]  %s17, 2048, %s194, [#allocation21], 128, 128, 8
    $region73: #{snake_qnet_forward.1} parent=1 // pred_fallthru
      _
    // Predicated region
    $region74: #{snake_qnet_forward.1} parent=1 // pred_check
      _
    $region75: #{snake_qnet_forward.1} parent=1 // pred_check_branch
      %201 = sbr.rel (0) target = $region77
    $region76: #{snake_qnet_forward.1} parent=1 // pred_region
      %s203 = ssub.s32 32, 32
      %204 = vsyncadd [#allocation24], %s203
      %s206 = sshll.u32 [#allocation23], 4
      %s207 = int_to_ptr.vmem [resolvable:$true] %s206
      %209 = dma.hbm_to_vmem [thread:$0]  %s18, 32, %s207, [#allocation24]
    $region77: #{snake_qnet_forward.1} parent=1 // pred_fallthru
      _
    // Predicated region
    $region78: #{snake_qnet_forward.1} parent=1 // pred_check
      _
    $region79: #{snake_qnet_forward.1} parent=1 // pred_check_branch
      %211 = sbr.rel (0) target = $region81
    $region80: #{snake_qnet_forward.1} parent=1 // pred_region
      %s213 = ssub.s32 2048, 2048
      %214 = vsyncadd [#allocation24], %s213
      %s215 = sshll.u32 [#allocation25], 4
      %s216 = int_to_ptr.vmem [resolvable:$true] %s215
      %221 = dma.hbm_to_vmem [thread:$0]  %s19, 2048, %s216, [#allocation24], 64, 64, 4
    $region81: #{snake_qnet_forward.1} parent=1 // pred_fallthru
      _
    // Predicated region
    $region82: #{snake_qnet_forward.1} parent=1 // pred_check
      _
    $region83: #{snake_qnet_forward.1} parent=1 // pred_check_branch
      %223 = sbr.rel (0) target = $region85
    $region84: #{snake_qnet_forward.1} parent=1 // pred_region
      %s225 = ssub.s32 16, 16
      %226 = vsyncadd [#allocation27], %s225
      %s228 = sshll.u32 [#allocation26], 4
      %s229 = int_to_ptr.vmem [resolvable:$true] %s228
      %231 = dma.hbm_to_vmem [thread:$0]  %s20, 16, %s229, [#allocation27]
    $region85: #{snake_qnet_forward.1} parent=1 // pred_fallthru
      _
    // Predicated region
    $region86: #{snake_qnet_forward.1} parent=1 // pred_check
      _
    $region87: #{snake_qnet_forward.1} parent=1 // pred_check_branch
      %233 = sbr.rel (0) target = $region89
    $region88: #{snake_qnet_forward.1} parent=1 // pred_region
      %234 = dma.done [#allocation3], 32
    $region89: #{snake_qnet_forward.1} parent=1 // pred_fallthru
      _
    // Predicated region
    $region90: #{snake_qnet_forward.1} parent=1 // pred_check
      _
    $region91: #{snake_qnet_forward.1} parent=1 // pred_check_branch
      %236 = sbr.rel (0) target = $region93
    $region92: #{snake_qnet_forward.1} parent=1 // pred_region
      %237 = dma.done [#allocation6], 128
    $region93: #{snake_qnet_forward.1} parent=1 // pred_fallthru
      _
    // Predicated region
    $region94: #{snake_qnet_forward.1} parent=1 // pred_check
      _
    $region95: #{snake_qnet_forward.1} parent=1 // pred_check_branch
      %239 = sbr.rel (0) target = $region97
    $region96: #{snake_qnet_forward.1} parent=1 // pred_region
      %240 = dma.done [#allocation6], 6144
    $region97: #{snake_qnet_forward.1} parent=1 // pred_fallthru
      _
    // Predicated region
    $region98: #{snake_qnet_forward.1} parent=1 // pred_check
      _
    $region99: #{snake_qnet_forward.1} parent=1 // pred_check_branch
      %242 = sbr.rel (0) target = $region101
    $region100: #{snake_qnet_forward.1} parent=1 // pred_region
      %243 = dma.done [#allocation9], 32
    $region101: #{snake_qnet_forward.1} parent=1 // pred_fallthru
      _
    // Predicated region
    $region102: #{snake_qnet_forward.1} parent=1 // pred_check
      _
    $region103: #{snake_qnet_forward.1} parent=1 // pred_check_branch
      %245 = sbr.rel (0) target = $region105
    $region104: #{snake_qnet_forward.1} parent=1 // pred_region
      %246 = dma.done [#allocation9], 4096
    $region105: #{snake_qnet_forward.1} parent=1 // pred_fallthru
      _
    // Predicated region
    $region106: #{snake_qnet_forward.1} parent=1 // pred_check
      _
    $region107: #{snake_qnet_forward.1} parent=1 // pred_check_branch
      %248 = sbr.rel (0) target = $region109
    $region108: #{snake_qnet_forward.1} parent=1 // pred_region
      %249 = dma.done [#allocation12], 64
    $region109: #{snake_qnet_forward.1} parent=1 // pred_fallthru
      _
    // Predicated region
    $region110: #{snake_qnet_forward.1} parent=1 // pred_check
      _
    $region111: #{snake_qnet_forward.1} parent=1 // pred_check_branch
      %251 = sbr.rel (0) target = $region113
    $region112: #{snake_qnet_forward.1} parent=1 // pred_region
      %252 = dma.done [#allocation12], 4096
    $region113: #{snake_qnet_forward.1} parent=1 // pred_fallthru
      _
    // Predicated region
    $region114: #{snake_qnet_forward.1} parent=1 // pred_check
      _
    $region115: #{snake_qnet_forward.1} parent=1 // pred_check_branch
      %254 = sbr.rel (0) target = $region117
    $region116: #{snake_qnet_forward.1} parent=1 // pred_region
      %255 = dma.done [#allocation15], 32
    $region117: #{snake_qnet_forward.1} parent=1 // pred_fallthru
      _
    // Predicated region
    $region118: #{snake_qnet_forward.1} parent=1 // pred_check
      _
    $region119: #{snake_qnet_forward.1} parent=1 // pred_check_branch
      %257 = sbr.rel (0) target = $region121
    $region120: #{snake_qnet_forward.1} parent=1 // pred_region
      %258 = dma.done [#allocation15], 32
    $region121: #{snake_qnet_forward.1} parent=1 // pred_fallthru
      _
    // Predicated region
    $region122: #{snake_qnet_forward.1} parent=1 // pred_check
      _
    $region123: #{snake_qnet_forward.1} parent=1 // pred_check_branch
      %260 = sbr.rel (0) target = $region125
    $region124: #{snake_qnet_forward.1} parent=1 // pred_region
      %261 = dma.done [#allocation18], 32
    $region125: #{snake_qnet_forward.1} parent=1 // pred_fallthru
      _
    // Predicated region
    $region126: #{snake_qnet_forward.1} parent=1 // pred_check
      _
    $region127: #{snake_qnet_forward.1} parent=1 // pred_check_branch
      %263 = sbr.rel (0) target = $region129
    $region128: #{snake_qnet_forward.1} parent=1 // pred_region
      %264 = dma.done [#allocation18], 32
    $region129: #{snake_qnet_forward.1} parent=1 // pred_fallthru
      _
    // Predicated region
    $region130: #{snake_qnet_forward.1} parent=1 // pred_check
      _
    $region131: #{snake_qnet_forward.1} parent=1 // pred_check_branch
      %266 = sbr.rel (0) target = $region133
    $region132: #{snake_qnet_forward.1} parent=1 // pred_region
      %267 = dma.done [#allocation21], 32
    $region133: #{snake_qnet_forward.1} parent=1 // pred_fallthru
      _
    // Predicated region
    $region134: #{snake_qnet_forward.1} parent=1 // pred_check
      _
    $region135: #{snake_qnet_forward.1} parent=1 // pred_check_branch
      %269 = sbr.rel (0) target = $region137
    $region136: #{snake_qnet_forward.1} parent=1 // pred_region
      %270 = dma.done [#allocation21], 2048
    $region137: #{snake_qnet_forward.1} parent=1 // pred_fallthru
      _
    // Predicated region
    $region138: #{snake_qnet_forward.1} parent=1 // pred_check
      _
    $region139: #{snake_qnet_forward.1} parent=1 // pred_check_branch
      %272 = sbr.rel (0) target = $region141
    $region140: #{snake_qnet_forward.1} parent=1 // pred_region
      %273 = dma.done [#allocation24], 32
    $region141: #{snake_qnet_forward.1} parent=1 // pred_fallthru
      _
    // Predicated region
    $region142: #{snake_qnet_forward.1} parent=1 // pred_check
      _
    $region143: #{snake_qnet_forward.1} parent=1 // pred_check_branch
      %275 = sbr.rel (0) target = $region145
    $region144: #{snake_qnet_forward.1} parent=1 // pred_region
      %276 = dma.done [#allocation24], 2048
    $region145: #{snake_qnet_forward.1} parent=1 // pred_fallthru
      _
    // Predicated region
    $region146: #{snake_qnet_forward.1} parent=1 // pred_check
      _
    $region147: #{snake_qnet_forward.1} parent=1 // pred_check_branch
      %278 = sbr.rel (0) target = $region149
    $region148: #{snake_qnet_forward.1} parent=1 // pred_region
      %279 = dma.done [#allocation27], 16
    $region149: #{snake_qnet_forward.1} parent=1 // pred_fallthru
      _
    %v281 = vld [vmem:[%s0] sm:$0xff]
    %v282 = vld [vmem:[%s0 + $0x8] sm:$0xff]
    %v283 = vld [vmem:[#allocation5] sm:$0xf]
    %v284 = vld [vmem:[#allocation5 + $0x4] sm:$0xf]
    %v285 = vpack.c.bf16 %v282, %v281
    %v286 = vld [vmem:[%s4] sm:$0x1]
    %v288 = vlaneseq
    %v289 = vshrl.u32 %v288, 7
    %v290 = vsub.s32 0, %v289
    %v291 = vrot.slane %v286, %v290
    %v295 = vunpack.c.l.b16 %v283
    %v296 = vunpack.c.l.b16 %v284
    %v297 = vpack.c.b16 %v296, %v295
    %vm299 = vcmask 130048
    %v301 = vsel %vm299, %v285, 0
    %303 = vmatprep.subr.bf16.mxu0 0
    %304 = vmatpush1.bf16.msra.mxu0 %v297
    %305 = vmatprep.subr.bf16.mxu0 0
    %306 = vmatpush1.bf16.msra.mxu0 0
    %307 = vmatprep.subr.bf16.mxu0 0
    %308 = vmatpush1.bf16.msra.mxu0 0
    %309 = vmatprep.subr.bf16.mxu0 0
    %310 = vmatpush1.bf16.msra.mxu0 0
    %311 = vmatprep.subr.bf16.mxu0 0
    %312 = vmatpush1.bf16.msra.mxu0 0
    %313 = vmatprep.subr.bf16.mxu0 0
    %314 = vmatpush1.bf16.msra.mxu0 0
    %315 = vmatprep.subr.bf16.mxu0 0
    %316 = vmatpush1.bf16.msra.mxu0 0
    %317 = vmatprep.subr.bf16.mxu0 0
    %318 = vmatpush1.bf16.msra.mxu0 0
    %319 = vmatprep.subr.bf16.mxu0 0
    %320 = vmatpush1.bf16.msra.mxu0 0
    %321 = vmatprep.subr.bf16.mxu0 0
    %322 = vmatpush1.bf16.msra.mxu0 0
    %323 = vmatprep.subr.bf16.mxu0 0
    %324 = vmatpush1.bf16.msra.mxu0 0
    %325 = vmatprep.subr.bf16.mxu0 0
    %326 = vmatpush1.bf16.msra.mxu0 0
    %327 = vmatprep.subr.bf16.mxu0 0
    %328 = vmatpush1.bf16.msra.mxu0 0
    %329 = vmatprep.subr.bf16.mxu0 0
    %330 = vmatpush1.bf16.msra.mxu0 0
    %331 = vmatprep.subr.bf16.mxu0 0
    %332 = vmatpush1.bf16.msra.mxu0 0
    %333 = vmatprep.subr.bf16.mxu0 0
    %334 = vmatpush1.bf16.msra.mxu0 0
    %335 = vmatprep.mubr.bf16.mxu0 0
    %336 = vmatmul.mubr.bf16.gmra.mrb[0].mxu0 %v301
    %v337 = vpop.f32.mrb[0].mxu0
    %v338 = vadd.f32 %v291, %v337
    %v339 = vpop.f32.mrb[0].mxu0
    %v340 = vpop.f32.mrb[0].mxu0
    %v341 = vadd.f32 %v291, %v340
    %v342 = vpop.f32.mrb[0].mxu0
    %343 = vdwg.mxu0
    %v344 = vld [vmem:[%s2] sm:$0xff]
    %v345 = vld [vmem:[%s2 + $0x8] sm:$0xff]
    %v346 = vld [vmem:[%s2 + $0x10] sm:$0xff]
    %v347 = vld [vmem:[%s2 + $0x18] sm:$0xff]
    %v348 = vld [vmem:[%s2 + $0x20] sm:$0xff]
    %v349 = vld [vmem:[%s2 + $0x28] sm:$0xff]
    %v350 = vld [vmem:[%s2 + $0x30] sm:$0xff]
    %v351 = vld [vmem:[%s2 + $0x38] sm:$0xff]
    %v352 = vld [vmem:[#allocation7] sm:$0xff]
    %v353 = vld [vmem:[#allocation7 + $0x8] sm:$0xf]
    %v354 = vld [vmem:[#allocation7 + $0xc] sm:$0xff]
    %v355 = vld [vmem:[#allocation7 + $0x14] sm:$0xf]
    %v356 = vld [vmem:[#allocation7 + $0x18] sm:$0xff]
    %v357 = vld [vmem:[#allocation7 + $0x20] sm:$0xf]
    %v358 = vld [vmem:[#allocation7 + $0x24] sm:$0xff]
    %v359 = vld [vmem:[#allocation7 + $0x2c] sm:$0xf]
    %v360 = vld [vmem:[#allocation7 + $0x30] sm:$0xff]
    %v361 = vld [vmem:[#allocation7 + $0x38] sm:$0xf]
    %v362 = vld [vmem:[#allocation7 + $0x3c] sm:$0xff]
    %v363 = vld [vmem:[#allocation7 + $0x44] sm:$0xf]
    %v364 = vld [vmem:[#allocation7 + $0x48] sm:$0xff]
    %v365 = vld [vmem:[#allocation7 + $0x50] sm:$0xf]
    %v366 = vld [vmem:[#allocation7 + $0x54] sm:$0xff]
    %v367 = vld [vmem:[#allocation7 + $0x5c] sm:$0xf]
    %v368 = vld [vmem:[#allocation7 + $0x60] sm:$0xff]
    %v369 = vld [vmem:[#allocation7 + $0x68] sm:$0xf]
    %v370 = vld [vmem:[#allocation7 + $0x6c] sm:$0xff]
    %v371 = vld [vmem:[#allocation7 + $0x74] sm:$0xf]
    %v372 = vld [vmem:[#allocation7 + $0x78] sm:$0xff]
    %v373 = vld [vmem:[#allocation7 + $0x80] sm:$0xf]
    %v374 = vld [vmem:[#allocation7 + $0x84] sm:$0xff]
    %v375 = vld [vmem:[#allocation7 + $0x8c] sm:$0xf]
    %v376 = vld [vmem:[#allocation7 + $0x90] sm:$0xff]
    %v377 = vld [vmem:[#allocation7 + $0x98] sm:$0xf]
    %v378 = vld [vmem:[#allocation7 + $0x9c] sm:$0xff]
    %v379 = vld [vmem:[#allocation7 + $0xa4] sm:$0xf]
    %v380 = vld [vmem:[#allocation7 + $0xa8] sm:$0xff]
    %v381 = vld [vmem:[#allocation7 + $0xb0] sm:$0xf]
    %v382 = vld [vmem:[#allocation7 + $0xb4] sm:$0xff]
    %v383 = vld [vmem:[#allocation7 + $0xbc] sm:$0xf]
    %v384 = vpack.c.bf16 %v341, %v338
    %v385 = vld [vmem:[%s6] sm:$0x7]
    %v387 = vlaneseq
    %v388 = vshrl.u32 %v387, 7
    %v389 = vsub.s32 0, %v388
    %v390 = vrot.slane %v385, %v389
    %v391 = vlaneseq
    %v392 = vshrl.u32 %v391, 7
    %v393 = vsub.s32 1, %v392
    %v394 = vrot.slane %v385, %v393
    %v395 = vlaneseq
    %v396 = vshrl.u32 %v395, 7
    %v397 = vsub.s32 2, %v396
    %v398 = vrot.slane %v385, %v397
    %v434 = vunpack.c.l.b16 %v352
    %v435 = vunpack.c.h.b16 %v352
    %v436 = vunpack.c.l.b16 %v353
    %v437 = vunpack.c.l.b16 %v354
    %v438 = vunpack.c.h.b16 %v354
    %v439 = vunpack.c.l.b16 %v355
    %v440 = vunpack.c.l.b16 %v356
    %v441 = vunpack.c.h.b16 %v356
    %v442 = vunpack.c.l.b16 %v357
    %v443 = vunpack.c.l.b16 %v358
    %v444 = vunpack.c.h.b16 %v358
    %v445 = vunpack.c.l.b16 %v359
    %v446 = vunpack.c.l.b16 %v360
    %v447 = vunpack.c.h.b16 %v360
    %v448 = vunpack.c.l.b16 %v361
    %v449 = vunpack.c.l.b16 %v362
    %v450 = vunpack.c.h.b16 %v362
    %v451 = vunpack.c.l.b16 %v363
    %v452 = vunpack.c.l.b16 %v364
    %v453 = vunpack.c.h.b16 %v364
    %v454 = vunpack.c.l.b16 %v365
    %v455 = vunpack.c.l.b16 %v366
    %v456 = vunpack.c.h.b16 %v366
    %v457 = vunpack.c.l.b16 %v367
    %v458 = vunpack.c.l.b16 %v368
    %v459 = vunpack.c.h.b16 %v368
    %v460 = vunpack.c.l.b16 %v369
    %v461 = vunpack.c.l.b16 %v370
    %v462 = vunpack.c.h.b16 %v370
    %v463 = vunpack.c.l.b16 %v371
    %v464 = vunpack.c.l.b16 %v372
    %v465 = vunpack.c.h.b16 %v372
    %v466 = vunpack.c.l.b16 %v373
    %v467 = vunpack.c.l.b16 %v374
    %v468 = vunpack.c.h.b16 %v374
    %v469 = vunpack.c.l.b16 %v375
    %v470 = vunpack.c.l.b16 %v376
    %v471 = vunpack.c.h.b16 %v376
    %v472 = vunpack.c.l.b16 %v377
    %v473 = vunpack.c.l.b16 %v378
    %v474 = vunpack.c.h.b16 %v378
    %v475 = vunpack.c.l.b16 %v379
    %v476 = vunpack.c.l.b16 %v380
    %v477 = vunpack.c.h.b16 %v380
    %v478 = vunpack.c.l.b16 %v381
    %v479 = vunpack.c.l.b16 %v382
    %v480 = vunpack.c.h.b16 %v382
    %v481 = vunpack.c.l.b16 %v383
    %v482 = vpack.c.b16 %v437, %v434
    %v483 = vpack.c.b16 %v438, %v435
    %v484 = vpack.c.b16 %v439, %v436
    %v485 = vpack.c.b16 %v443, %v440
    %v486 = vpack.c.b16 %v444, %v441
    %v487 = vpack.c.b16 %v445, %v442
    %v488 = vpack.c.b16 %v449, %v446
    %v489 = vpack.c.b16 %v450, %v447
    %v490 = vpack.c.b16 %v451, %v448
    %v491 = vpack.c.b16 %v455, %v452
    %v492 = vpack.c.b16 %v456, %v453
    %v493 = vpack.c.b16 %v457, %v454
    %v494 = vpack.c.b16 %v461, %v458
    %v495 = vpack.c.b16 %v462, %v459
    %v496 = vpack.c.b16 %v463, %v460
    %v497 = vpack.c.b16 %v467, %v464
    %v498 = vpack.c.b16 %v468, %v465
    %v499 = vpack.c.b16 %v469, %v466
    %v500 = vpack.c.b16 %v473, %v470
    %v501 = vpack.c.b16 %v474, %v471
    %v502 = vpack.c.b16 %v475, %v472
    %v503 = vpack.c.b16 %v479, %v476
    %v504 = vpack.c.b16 %v480, %v477
    %v505 = vpack.c.b16 %v481, %v478
    %530 = vmatprep.subr.bf16.mxu0 %v483
    %531 = vmatpush1.bf16.msra.mxu0 %v482
    %532 = vmatprep.subr.bf16.mxu0 %v486
    %533 = vmatpush1.bf16.msra.mxu0 %v485
    %534 = vmatprep.subr.bf16.mxu0 %v489
    %535 = vmatpush1.bf16.msra.mxu0 %v488
    %536 = vmatprep.subr.bf16.mxu0 %v492
    %537 = vmatpush1.bf16.msra.mxu0 %v491
    %538 = vmatprep.subr.bf16.mxu0 %v495
    %539 = vmatpush1.bf16.msra.mxu0 %v494
    %540 = vmatprep.subr.bf16.mxu0 %v498
    %541 = vmatpush1.bf16.msra.mxu0 %v497
    %542 = vmatprep.subr.bf16.mxu0 %v501
    %543 = vmatpush1.bf16.msra.mxu0 %v500
    %544 = vmatprep.subr.bf16.mxu0 %v504
    %545 = vmatpush1.bf16.msra.mxu0 %v503
    %546 = vmatprep.subr.bf16.mxu0 0
    %547 = vmatpush1.bf16.msra.mxu0 0
    %548 = vmatprep.subr.bf16.mxu0 0
    %549 = vmatpush1.bf16.msra.mxu0 0
    %550 = vmatprep.subr.bf16.mxu0 0
    %551 = vmatpush1.bf16.msra.mxu0 0
    %552 = vmatprep.subr.bf16.mxu0 0
    %553 = vmatpush1.bf16.msra.mxu0 0
    %554 = vmatprep.subr.bf16.mxu0 0
    %555 = vmatpush1.bf16.msra.mxu0 0
    %556 = vmatprep.subr.bf16.mxu0 0
    %557 = vmatpush1.bf16.msra.mxu0 0
    %558 = vmatprep.subr.bf16.mxu0 0
    %559 = vmatpush1.bf16.msra.mxu0 0
    %560 = vmatprep.subr.bf16.mxu0 0
    %561 = vmatpush1.bf16.msra.mxu0 0
    %562 = vmatprep.mubr.bf16.mxu0 0
    %563 = vmatmul.mubr.bf16.gmra.mrb[0].mxu0 %v384
    %v564 = vpop.f32.mrb[0].mxu0
    %v565 = vadd.f32 %v390, %v564
    %v566 = vpop.f32.mrb[0].mxu0
    %v567 = vadd.f32 %v394, %v566
    %v568 = vpop.f32.mrb[0].mxu0
    %v569 = vadd.f32 %v390, %v568
    %v570 = vpop.f32.mrb[0].mxu0
    %v571 = vadd.f32 %v394, %v570
    %572 = vdwg.mxu0
    %573 = vmatprep.subr.bf16.mxu0 0
    %574 = vmatpush1.bf16.msra.mxu0 %v484
    %575 = vmatprep.subr.bf16.mxu0 0
    %576 = vmatpush1.bf16.msra.mxu0 %v487
    %577 = vmatprep.subr.bf16.mxu0 0
    %578 = vmatpush1.bf16.msra.mxu0 %v490
    %579 = vmatprep.subr.bf16.mxu0 0
    %580 = vmatpush1.bf16.msra.mxu0 %v493
    %581 = vmatprep.subr.bf16.mxu0 0
    %582 = vmatpush1.bf16.msra.mxu0 %v496
    %583 = vmatprep.subr.bf16.mxu0 0
    %584 = vmatpush1.bf16.msra.mxu0 %v499
    %585 = vmatprep.subr.bf16.mxu0 0
    %586 = vmatpush1.bf16.msra.mxu0 %v502
    %587 = vmatprep.subr.bf16.mxu0 0
    %588 = vmatpush1.bf16.msra.mxu0 %v505
    %589 = vmatprep.subr.bf16.mxu0 0
    %590 = vmatpush1.bf16.msra.mxu0 0
    %591 = vmatprep.subr.bf16.mxu0 0
    %592 = vmatpush1.bf16.msra.mxu0 0
    %593 = vmatprep.subr.bf16.mxu0 0
    %594 = vmatpush1.bf16.msra.mxu0 0
    %595 = vmatprep.subr.bf16.mxu0 0
    %596 = vmatpush1.bf16.msra.mxu0 0
    %597 = vmatprep.subr.bf16.mxu0 0
    %598 = vmatpush1.bf16.msra.mxu0 0
    %599 = vmatprep.subr.bf16.mxu0 0
    %600 = vmatpush1.bf16.msra.mxu0 0
    %601 = vmatprep.subr.bf16.mxu0 0
    %602 = vmatpush1.bf16.msra.mxu0 0
    %603 = vmatprep.subr.bf16.mxu0 0
    %604 = vmatpush1.bf16.msra.mxu0 0
    %605 = vmatprep.mubr.bf16.mxu0 0
    %606 = vmatmul.mubr.bf16.gmra.mrb[0].mxu0 %v384
    %v607 = vpop.f32.mrb[0].mxu0
    %v608 = vadd.f32 %v398, %v607
    %v609 = vpop.f32.mrb[0].mxu0
    %v610 = vpop.f32.mrb[0].mxu0
    %v611 = vadd.f32 %v398, %v610
    %v612 = vpop.f32.mrb[0].mxu0
    %613 = vdwg.mxu0
    %v614 = vpack.c.bf16 %v569, %v565
    %v615 = vpack.c.bf16 %v571, %v567
    %vm616 = vcmask 261120
    %v618 = vsel %vm616, %v614, 0
    %v621 = vsel %vm616, %v615, 0
    %623 = vmatprep.subr.bf16.mxu0 0
    %624 = vmatpush1.bf16.xpose.msra.mxu0 %v621
    %625 = vmatprep.subr.bf16.mxu0 0
    %626 = vmatpush1.bf16.xpose.msra.mxu0 0
    %627 = vmatprep.subr.bf16.mxu0 0
    %628 = vmatpush1.bf16.xpose.msra.mxu0 0
    %629 = vmatprep.subr.bf16.mxu0 0
    %630 = vmatpush1.bf16.xpose.msra.mxu0 0
    %631 = vmatprep.subr.bf16.mxu0 0
    %632 = vmatpush1.bf16.xpose.msra.mxu0 0
    %633 = vmatprep.subr.bf16.mxu0 0
    %634 = vmatpush1.bf16.xpose.msra.mxu0 0
    %635 = vmatprep.subr.bf16.mxu0 0
    %636 = vmatpush1.bf16.xpose.msra.mxu0 0
    %637 = vmatprep.subr.bf16.mxu0 0
    %638 = vmatpush1.bf16.xpose.msra.mxu0 0
    %639 = vmatprep.subr.bf16.mxu0 0
    %640 = vmatpush1.bf16.xpose.msra.mxu0 0
    %641 = vmatprep.subr.bf16.mxu0 0
    %642 = vmatpush1.bf16.xpose.msra.mxu0 0
    %643 = vmatprep.subr.bf16.mxu0 0
    %644 = vmatpush1.bf16.xpose.msra.mxu0 0
    %645 = vmatprep.subr.bf16.mxu0 0
    %646 = vmatpush1.bf16.xpose.msra.mxu0 0
    %647 = vmatprep.subr.bf16.mxu0 0
    %648 = vmatpush1.bf16.xpose.msra.mxu0 0
    %649 = vmatprep.subr.bf16.mxu0 0
    %650 = vmatpush1.bf16.xpose.msra.mxu0 0
    %651 = vmatprep.subr.bf16.mxu0 0
    %652 = vmatpush1.bf16.xpose.msra.mxu0 0
    %653 = vmatprep.subr.bf16.mxu0 0
    %654 = vmatpush1.bf16.xpose.msra.mxu0 0
    %655 = vmatprep.mubr.bf16.mxu0 0
    %656 = vmatmul.mubr.bf16.gmra.mrb[0].mxu0 %v618
    %v657 = vpop.f32.mrb[0].mxu0
    %v658 = vadd.f32 0.0, %v657
    %v659 = vpop.f32.mrb[0].mxu0
    %v660 = vpop.f32.mrb[0].mxu0
    %v661 = vadd.f32 0.0, %v660
    %v662 = vpop.f32.mrb[0].mxu0
    %663 = vdwg.mxu0
    %665 = vrot.lane.b32.xlu0 %v614, 96
    %v666 = vpop.permute.xlu0 %665
    %668 = vrot.lane.b32.xlu0 %v615, 96
    %v669 = vpop.permute.xlu0 %668
    %v671 = vsel %vm616, %v666, 0
    %v674 = vsel %vm616, %v669, 0
    %676 = vmatprep.subr.bf16.mxu0 0
    %677 = vmatpush1.bf16.xpose.msra.mxu0 %v674
    %678 = vmatprep.subr.bf16.mxu0 0
    %679 = vmatpush1.bf16.xpose.msra.mxu0 0
    %680 = vmatprep.subr.bf16.mxu0 0
    %681 = vmatpush1.bf16.xpose.msra.mxu0 0
    %682 = vmatprep.subr.bf16.mxu0 0
    %683 = vmatpush1.bf16.xpose.msra.mxu0 0
    %684 = vmatprep.subr.bf16.mxu0 0
    %685 = vmatpush1.bf16.xpose.msra.mxu0 0
    %686 = vmatprep.subr.bf16.mxu0 0
    %687 = vmatpush1.bf16.xpose.msra.mxu0 0
    %688 = vmatprep.subr.bf16.mxu0 0
    %689 = vmatpush1.bf16.xpose.msra.mxu0 0
    %690 = vmatprep.subr.bf16.mxu0 0
    %691 = vmatpush1.bf16.xpose.msra.mxu0 0
    %692 = vmatprep.subr.bf16.mxu0 0
    %693 = vmatpush1.bf16.xpose.msra.mxu0 0
    %694 = vmatprep.subr.bf16.mxu0 0
    %695 = vmatpush1.bf16.xpose.msra.mxu0 0
    %696 = vmatprep.subr.bf16.mxu0 0
    %697 = vmatpush1.bf16.xpose.msra.mxu0 0
    %698 = vmatprep.subr.bf16.mxu0 0
    %699 = vmatpush1.bf16.xpose.msra.mxu0 0
    %700 = vmatprep.subr.bf16.mxu0 0
    %701 = vmatpush1.bf16.xpose.msra.mxu0 0
    %702 = vmatprep.subr.bf16.mxu0 0
    %703 = vmatpush1.bf16.xpose.msra.mxu0 0
    %704 = vmatprep.subr.bf16.mxu0 0
    %705 = vmatpush1.bf16.xpose.msra.mxu0 0
    %706 = vmatprep.subr.bf16.mxu0 0
    %707 = vmatpush1.bf16.xpose.msra.mxu0 0
    %708 = vmatprep.mubr.bf16.mxu0 0
    %709 = vmatmul.mubr.bf16.gmra.mrb[0].mxu0 %v671
    %v710 = vpop.f32.mrb[0].mxu0
    %v711 = vadd.f32 0.0, %v710
    %v712 = vpop.f32.mrb[0].mxu0
    %v713 = vpop.f32.mrb[0].mxu0
    %v714 = vadd.f32 0.0, %v713
    %v715 = vpop.f32.mrb[0].mxu0
    %716 = vdwg.mxu0
    %717 = vrot.lane.b32.xlu0 %v614, 64
    %v718 = vpop.permute.xlu0 %717
    %719 = vrot.lane.b32.xlu0 %v615, 64
    %v720 = vpop.permute.xlu0 %719
    %v722 = vsel %vm616, %v718, 0
    %v725 = vsel %vm616, %v720, 0
    %727 = vmatprep.subr.bf16.mxu0 0
    %728 = vmatpush1.bf16.xpose.msra.mxu0 %v725
    %729 = vmatprep.subr.bf16.mxu0 0
    %730 = vmatpush1.bf16.xpose.msra.mxu0 0
    %731 = vmatprep.subr.bf16.mxu0 0
    %732 = vmatpush1.bf16.xpose.msra.mxu0 0
    %733 = vmatprep.subr.bf16.mxu0 0
    %734 = vmatpush1.bf16.xpose.msra.mxu0 0
    %735 = vmatprep.subr.bf16.mxu0 0
    %736 = vmatpush1.bf16.xpose.msra.mxu0 0
    %737 = vmatprep.subr.bf16.mxu0 0
    %738 = vmatpush1.bf16.xpose.msra.mxu0 0
    %739 = vmatprep.subr.bf16.mxu0 0
    %740 = vmatpush1.bf16.xpose.msra.mxu0 0
    %741 = vmatprep.subr.bf16.mxu0 0
    %742 = vmatpush1.bf16.xpose.msra.mxu0 0
    %743 = vmatprep.subr.bf16.mxu0 0
    %744 = vmatpush1.bf16.xpose.msra.mxu0 0
    %745 = vmatprep.subr.bf16.mxu0 0
    %746 = vmatpush1.bf16.xpose.msra.mxu0 0
    %747 = vmatprep.subr.bf16.mxu0 0
    %748 = vmatpush1.bf16.xpose.msra.mxu0 0
    %749 = vmatprep.subr.bf16.mxu0 0
    %750 = vmatpush1.bf16.xpose.msra.mxu0 0
    %751 = vmatprep.subr.bf16.mxu0 0
    %752 = vmatpush1.bf16.xpose.msra.mxu0 0
    %753 = vmatprep.subr.bf16.mxu0 0
    %754 = vmatpush1.bf16.xpose.msra.mxu0 0
    %755 = vmatprep.subr.bf16.mxu0 0
    %756 = vmatpush1.bf16.xpose.msra.mxu0 0
    %757 = vmatprep.subr.bf16.mxu0 0
    %758 = vmatpush1.bf16.xpose.msra.mxu0 0
    %759 = vmatprep.mubr.bf16.mxu0 0
    %760 = vmatmul.mubr.bf16.gmra.mrb[0].mxu0 %v722
    %v761 = vpop.f32.mrb[0].mxu0
    %v762 = vadd.f32 0.0, %v761
    %v763 = vpop.f32.mrb[0].mxu0
    %v764 = vpop.f32.mrb[0].mxu0
    %v765 = vadd.f32 0.0, %v764
    %v766 = vpop.f32.mrb[0].mxu0
    %767 = vdwg.mxu0
    %768 = vrot.lane.b32.xlu0 %v614, 32
    %v769 = vpop.permute.xlu0 %768
    %770 = vrot.lane.b32.xlu0 %v615, 32
    %v771 = vpop.permute.xlu0 %770
    %v773 = vsel %vm616, %v769, 0
    %v776 = vsel %vm616, %v771, 0
    %778 = vmatprep.subr.bf16.mxu0 0
    %779 = vmatpush1.bf16.xpose.msra.mxu0 %v776
    %780 = vmatprep.subr.bf16.mxu0 0
    %781 = vmatpush1.bf16.xpose.msra.mxu0 0
    %782 = vmatprep.subr.bf16.mxu0 0
    %783 = vmatpush1.bf16.xpose.msra.mxu0 0
    %784 = vmatprep.subr.bf16.mxu0 0
    %785 = vmatpush1.bf16.xpose.msra.mxu0 0
    %786 = vmatprep.subr.bf16.mxu0 0
    %787 = vmatpush1.bf16.xpose.msra.mxu0 0
    %788 = vmatprep.subr.bf16.mxu0 0
    %789 = vmatpush1.bf16.xpose.msra.mxu0 0
    %790 = vmatprep.subr.bf16.mxu0 0
    %791 = vmatpush1.bf16.xpose.msra.mxu0 0
    %792 = vmatprep.subr.bf16.mxu0 0
    %793 = vmatpush1.bf16.xpose.msra.mxu0 0
    %794 = vmatprep.subr.bf16.mxu0 0
    %795 = vmatpush1.bf16.xpose.msra.mxu0 0
    %796 = vmatprep.subr.bf16.mxu0 0
    %797 = vmatpush1.bf16.xpose.msra.mxu0 0
    %798 = vmatprep.subr.bf16.mxu0 0
    %799 = vmatpush1.bf16.xpose.msra.mxu0 0
    %800 = vmatprep.subr.bf16.mxu0 0
    %801 = vmatpush1.bf16.xpose.msra.mxu0 0
    %802 = vmatprep.subr.bf16.mxu0 0
    %803 = vmatpush1.bf16.xpose.msra.mxu0 0
    %804 = vmatprep.subr.bf16.mxu0 0
    %805 = vmatpush1.bf16.xpose.msra.mxu0 0
    %806 = vmatprep.subr.bf16.mxu0 0
    %807 = vmatpush1.bf16.xpose.msra.mxu0 0
    %808 = vmatprep.subr.bf16.mxu0 0
    %809 = vmatpush1.bf16.xpose.msra.mxu0 0
    %810 = vmatprep.mubr.bf16.mxu0 0
    %811 = vmatmul.mubr.bf16.gmra.mrb[0].mxu0 %v773
    %v812 = vpop.f32.mrb[0].mxu0
    %v813 = vadd.f32 0.0, %v812
    %v814 = vpop.f32.mrb[0].mxu0
    %v815 = vpop.f32.mrb[0].mxu0
    %v816 = vadd.f32 0.0, %v815
    %v817 = vpop.f32.mrb[0].mxu0
    %818 = vdwg.mxu0
    %v819 = vmul.f32 %v658, 0.17677669
    %v820 = vmul.f32 %v661, 0.17677669
    %v821 = vmul.f32 %v711, 0.17677669
    %v822 = vmul.f32 %v714, 0.17677669
    %v823 = vmul.f32 %v762, 0.17677669
    %v824 = vmul.f32 %v765, 0.17677669
    %v825 = vmul.f32 %v813, 0.17677669
    %v826 = vmul.f32 %v816, 0.17677669
    %v827 = vadd.f32 %v819, %v344
    %v828 = vadd.f32 %v820, %v345
    %v829 = vadd.f32 %v821, %v346
    %v830 = vadd.f32 %v822, %v347
    %v831 = vadd.f32 %v823, %v348
    %v832 = vadd.f32 %v824, %v349
    %v833 = vadd.f32 %v825, %v350
    %v834 = vadd.f32 %v826, %v351
    %v835 = vsel %vm299, %v827, -inf
    %836 = vmax.xlane.f32.xlu0 %v835
    %v837 = vpop.xlane.xlu0 %836
    %v838 = vsel %vm299, %v828, -inf
    %839 = vmax.xlane.f32.xlu0 %v838
    %v840 = vpop.xlane.xlu0 %839
    %v841 = vsel %vm299, %v829, -inf
    %842 = vmax.xlane.f32.xlu0 %v841
    %v843 = vpop.xlane.xlu0 %842
    %v844 = vsel %vm299, %v830, -inf
    %845 = vmax.xlane.f32.xlu0 %v844
    %v846 = vpop.xlane.xlu0 %845
    %v847 = vsel %vm299, %v831, -inf
    %848 = vmax.xlane.f32.xlu0 %v847
    %v849 = vpop.xlane.xlu0 %848
    %v850 = vsel %vm299, %v832, -inf
    %851 = vmax.xlane.f32.xlu0 %v850
    %v852 = vpop.xlane.xlu0 %851
    %v853 = vsel %vm299, %v833, -inf
    %854 = vmax.xlane.f32.xlu0 %v853
    %v855 = vpop.xlane.xlu0 %854
    %v856 = vsel %vm299, %v834, -inf
    %857 = vmax.xlane.f32.xlu0 %v856
    %v858 = vpop.xlane.xlu0 %857
    %v859 = vsub.f32 %v827, %v837
    %v860 = vsub.f32 %v828, %v840
    %v861 = vsub.f32 %v829, %v843
    %v862 = vsub.f32 %v830, %v846
    %v863 = vsub.f32 %v831, %v849
    %v864 = vsub.f32 %v832, %v852
    %v865 = vsub.f32 %v833, %v855
    %v866 = vsub.f32 %v834, %v858
    %v867 = vmul.f32 %v859, 1.442695
    %v868 = vpow.pop %v867
    %v869 = vmul.f32 %v860, 1.442695
    %v870 = vpow.pop %v869
    %v871 = vmul.f32 %v861, 1.442695
    %v872 = vpow.pop %v871
    %v873 = vmul.f32 %v862, 1.442695
    %v874 = vpow.pop %v873
    %v875 = vmul.f32 %v863, 1.442695
    %v876 = vpow.pop %v875
    %v877 = vmul.f32 %v864, 1.442695
    %v878 = vpow.pop %v877
    %v879 = vmul.f32 %v865, 1.442695
    %v880 = vpow.pop %v879
    %v881 = vmul.f32 %v866, 1.442695
    %v882 = vpow.pop %v881
    %v883 = vsel %vm299, %v868, 0.0
    %884 = vadd.xlane.f32.xlu0 %v883
    %v885 = vpop.xlane.xlu0 %884
    %v886 = vsel %vm299, %v870, 0.0
    %887 = vadd.xlane.f32.xlu0 %v886
    %v888 = vpop.xlane.xlu0 %887
    %v889 = vsel %vm299, %v872, 0.0
    %890 = vadd.xlane.f32.xlu0 %v889
    %v891 = vpop.xlane.xlu0 %890
    %v892 = vsel %vm299, %v874, 0.0
    %893 = vadd.xlane.f32.xlu0 %v892
    %v894 = vpop.xlane.xlu0 %893
    %v895 = vsel %vm299, %v876, 0.0
    %896 = vadd.xlane.f32.xlu0 %v895
    %v897 = vpop.xlane.xlu0 %896
    %v898 = vsel %vm299, %v878, 0.0
    %899 = vadd.xlane.f32.xlu0 %v898
    %v900 = vpop.xlane.xlu0 %899
    %v901 = vsel %vm299, %v880, 0.0
    %902 = vadd.xlane.f32.xlu0 %v901
    %v903 = vpop.xlane.xlu0 %902
    %v904 = vsel %vm299, %v882, 0.0
    %905 = vadd.xlane.f32.xlu0 %v904
    %v906 = vpop.xlane.xlu0 %905
    %v907 = vrcp.pop %v885
    %v908 = vrcp.pop %v888
    %v909 = vrcp.pop %v891
    %v910 = vrcp.pop %v894
    %v911 = vrcp.pop %v897
    %v912 = vrcp.pop %v900
    %v913 = vrcp.pop %v903
    %v914 = vrcp.pop %v906
    %v915 = vmul.f32 %v868, %v907
    %v916 = vmul.f32 %v870, %v908
    %v917 = vmul.f32 %v872, %v909
    %v918 = vmul.f32 %v874, %v910
    %v919 = vmul.f32 %v876, %v911
    %v920 = vmul.f32 %v878, %v912
    %v921 = vmul.f32 %v880, %v913
    %v922 = vmul.f32 %v882, %v914
    %v923 = vpack.c.bf16 %v916, %v915
    %v924 = vpack.c.bf16 %v611, %v608
    %v926 = vsel %vm299, %v923, 0
    %928 = vmatprep.subr.bf16.mxu0 0
    %929 = vmatpush1.bf16.msra.mxu0 %v924
    %930 = vmatprep.subr.bf16.mxu0 0
    %931 = vmatpush1.bf16.msra.mxu0 0
    %932 = vmatprep.subr.bf16.mxu0 0
    %933 = vmatpush1.bf16.msra.mxu0 0
    %934 = vmatprep.subr.bf16.mxu0 0
    %935 = vmatpush1.bf16.msra.mxu0 0
    %936 = vmatprep.subr.bf16.mxu0 0
    %937 = vmatpush1.bf16.msra.mxu0 0
    %938 = vmatprep.subr.bf16.mxu0 0
    %939 = vmatpush1.bf16.msra.mxu0 0
    %940 = vmatprep.subr.bf16.mxu0 0
    %941 = vmatpush1.bf16.msra.mxu0 0
    %942 = vmatprep.subr.bf16.mxu0 0
    %943 = vmatpush1.bf16.msra.mxu0 0
    %944 = vmatprep.subr.bf16.mxu0 0
    %945 = vmatpush1.bf16.msra.mxu0 0
    %946 = vmatprep.subr.bf16.mxu0 0
    %947 = vmatpush1.bf16.msra.mxu0 0
    %948 = vmatprep.subr.bf16.mxu0 0
    %949 = vmatpush1.bf16.msra.mxu0 0
    %950 = vmatprep.subr.bf16.mxu0 0
    %951 = vmatpush1.bf16.msra.mxu0 0
    %952 = vmatprep.subr.bf16.mxu0 0
    %953 = vmatpush1.bf16.msra.mxu0 0
    %954 = vmatprep.subr.bf16.mxu0 0
    %955 = vmatpush1.bf16.msra.mxu0 0
    %956 = vmatprep.subr.bf16.mxu0 0
    %957 = vmatpush1.bf16.msra.mxu0 0
    %958 = vmatprep.subr.bf16.mxu0 0
    %959 = vmatpush1.bf16.msra.mxu0 0
    %960 = vmatprep.mubr.bf16.mxu0 0
    %961 = vmatmul.mubr.bf16.gmra.mrb[0].mxu0 %v926
    %v962 = vpop.f32.mrb[0].mxu0
    %v963 = vadd.f32 0.0, %v962
    %v964 = vpop.f32.mrb[0].mxu0
    %v965 = vpop.f32.mrb[0].mxu0
    %v966 = vadd.f32 0.0, %v965
    %v967 = vpop.f32.mrb[0].mxu0
    %968 = vdwg.mxu0
    %v969 = vpack.c.bf16 %v918, %v917
    %971 = vrot.lane.b32.xlu0 %v924, 96
    %v972 = vpop.permute.xlu0 %971
    %v975 = vsel %vm299, %v969, 0
    %977 = vmatprep.subr.bf16.mxu0 0
    %978 = vmatpush1.bf16.msra.mxu0 %v972
    %979 = vmatprep.subr.bf16.mxu0 0
    %980 = vmatpush1.bf16.msra.mxu0 0
    %981 = vmatprep.subr.bf16.mxu0 0
    %982 = vmatpush1.bf16.msra.mxu0 0
    %983 = vmatprep.subr.bf16.mxu0 0
    %984 = vmatpush1.bf16.msra.mxu0 0
    %985 = vmatprep.subr.bf16.mxu0 0
    %986 = vmatpush1.bf16.msra.mxu0 0
    %987 = vmatprep.subr.bf16.mxu0 0
    %988 = vmatpush1.bf16.msra.mxu0 0
    %989 = vmatprep.subr.bf16.mxu0 0
    %990 = vmatpush1.bf16.msra.mxu0 0
    %991 = vmatprep.subr.bf16.mxu0 0
    %992 = vmatpush1.bf16.msra.mxu0 0
    %993 = vmatprep.subr.bf16.mxu0 0
    %994 = vmatpush1.bf16.msra.mxu0 0
    %995 = vmatprep.subr.bf16.mxu0 0
    %996 = vmatpush1.bf16.msra.mxu0 0
    %997 = vmatprep.subr.bf16.mxu0 0
    %998 = vmatpush1.bf16.msra.mxu0 0
    %999 = vmatprep.subr.bf16.mxu0 0
    %1000 = vmatpush1.bf16.msra.mxu0 0
    %1001 = vmatprep.subr.bf16.mxu0 0
    %1002 = vmatpush1.bf16.msra.mxu0 0
    %1003 = vmatprep.subr.bf16.mxu0 0
    %1004 = vmatpush1.bf16.msra.mxu0 0
    %1005 = vmatprep.subr.bf16.mxu0 0
    %1006 = vmatpush1.bf16.msra.mxu0 0
    %1007 = vmatprep.subr.bf16.mxu0 0
    %1008 = vmatpush1.bf16.msra.mxu0 0
    %1009 = vmatprep.mubr.bf16.mxu0 0
    %1010 = vmatmul.mubr.bf16.gmra.mrb[0].mxu0 %v975
    %v1011 = vpop.f32.mrb[0].mxu0
    %v1012 = vadd.f32 0.0, %v1011
    %v1013 = vpop.f32.mrb[0].mxu0
    %v1014 = vpop.f32.mrb[0].mxu0
    %v1015 = vadd.f32 0.0, %v1014
    %v1016 = vpop.f32.mrb[0].mxu0
    %1017 = vdwg.mxu0
    %v1018 = vpack.c.bf16 %v920, %v919
    %1019 = vrot.lane.b32.xlu0 %v924, 64
    %v1020 = vpop.permute.xlu0 %1019
    %v1023 = vsel %vm299, %v1018, 0
    %1025 = vmatprep.subr.bf16.mxu0 0
    %1026 = vmatpush1.bf16.msra.mxu0 %v1020
    %1027 = vmatprep.subr.bf16.mxu0 0
    %1028 = vmatpush1.bf16.msra.mxu0 0
    %1029 = vmatprep.subr.bf16.mxu0 0
    %1030 = vmatpush1.bf16.msra.mxu0 0
    %1031 = vmatprep.subr.bf16.mxu0 0
    %1032 = vmatpush1.bf16.msra.mxu0 0
    %1033 = vmatprep.subr.bf16.mxu0 0
    %1034 = vmatpush1.bf16.msra.mxu0 0
    %1035 = vmatprep.subr.bf16.mxu0 0
    %1036 = vmatpush1.bf16.msra.mxu0 0
    %1037 = vmatprep.subr.bf16.mxu0 0
    %1038 = vmatpush1.bf16.msra.mxu0 0
    %1039 = vmatprep.subr.bf16.mxu0 0
    %1040 = vmatpush1.bf16.msra.mxu0 0
    %1041 = vmatprep.subr.bf16.mxu0 0
    %1042 = vmatpush1.bf16.msra.mxu0 0
    %1043 = vmatprep.subr.bf16.mxu0 0
    %1044 = vmatpush1.bf16.msra.mxu0 0
    %1045 = vmatprep.subr.bf16.mxu0 0
    %1046 = vmatpush1.bf16.msra.mxu0 0
    %1047 = vmatprep.subr.bf16.mxu0 0
    %1048 = vmatpush1.bf16.msra.mxu0 0
    %1049 = vmatprep.subr.bf16.mxu0 0
    %1050 = vmatpush1.bf16.msra.mxu0 0
    %1051 = vmatprep.subr.bf16.mxu0 0
    %1052 = vmatpush1.bf16.msra.mxu0 0
    %1053 = vmatprep.subr.bf16.mxu0 0
    %1054 = vmatpush1.bf16.msra.mxu0 0
    %1055 = vmatprep.subr.bf16.mxu0 0
    %1056 = vmatpush1.bf16.msra.mxu0 0
    %1057 = vmatprep.mubr.bf16.mxu0 0
    %1058 = vmatmul.mubr.bf16.gmra.mrb[0].mxu0 %v1023
    %v1059 = vpop.f32.mrb[0].mxu0
    %v1060 = vadd.f32 0.0, %v1059
    %v1061 = vpop.f32.mrb[0].mxu0
    %v1062 = vpop.f32.mrb[0].mxu0
    %v1063 = vadd.f32 0.0, %v1062
    %v1064 = vpop.f32.mrb[0].mxu0
    %1065 = vdwg.mxu0
    %v1066 = vpack.c.bf16 %v922, %v921
    %1067 = vrot.lane.b32.xlu0 %v924, 32
    %v1068 = vpop.permute.xlu0 %1067
    %v1071 = vsel %vm299, %v1066, 0
    %1073 = vmatprep.subr.bf16.mxu0 0
    %1074 = vmatpush1.bf16.msra.mxu0 %v1068
    %1075 = vmatprep.subr.bf16.mxu0 0
    %1076 = vmatpush1.bf16.msra.mxu0 0
    %1077 = vmatprep.subr.bf16.mxu0 0
    %1078 = vmatpush1.bf16.msra.mxu0 0
    %1079 = vmatprep.subr.bf16.mxu0 0
    %1080 = vmatpush1.bf16.msra.mxu0 0
    %1081 = vmatprep.subr.bf16.mxu0 0
    %1082 = vmatpush1.bf16.msra.mxu0 0
    %1083 = vmatprep.subr.bf16.mxu0 0
    %1084 = vmatpush1.bf16.msra.mxu0 0
    %1085 = vmatprep.subr.bf16.mxu0 0
    %1086 = vmatpush1.bf16.msra.mxu0 0
    %1087 = vmatprep.subr.bf16.mxu0 0
    %1088 = vmatpush1.bf16.msra.mxu0 0
    %1089 = vmatprep.subr.bf16.mxu0 0
    %1090 = vmatpush1.bf16.msra.mxu0 0
    %1091 = vmatprep.subr.bf16.mxu0 0
    %1092 = vmatpush1.bf16.msra.mxu0 0
    %1093 = vmatprep.subr.bf16.mxu0 0
    %1094 = vmatpush1.bf16.msra.mxu0 0
    %1095 = vmatprep.subr.bf16.mxu0 0
    %1096 = vmatpush1.bf16.msra.mxu0 0
    %1097 = vmatprep.subr.bf16.mxu0 0
    %1098 = vmatpush1.bf16.msra.mxu0 0
    %1099 = vmatprep.subr.bf16.mxu0 0
    %1100 = vmatpush1.bf16.msra.mxu0 0
    %1101 = vmatprep.subr.bf16.mxu0 0
    %1102 = vmatpush1.bf16.msra.mxu0 0
    %1103 = vmatprep.subr.bf16.mxu0 0
    %1104 = vmatpush1.bf16.msra.mxu0 0
    %1105 = vmatprep.mubr.bf16.mxu0 0
    %1106 = vmatmul.mubr.bf16.gmra.mrb[0].mxu0 %v1071
    %v1107 = vpop.f32.mrb[0].mxu0
    %v1108 = vadd.f32 0.0, %v1107
    %v1109 = vpop.f32.mrb[0].mxu0
    %v1110 = vpop.f32.mrb[0].mxu0
    %v1111 = vadd.f32 0.0, %v1110
    %v1112 = vpop.f32.mrb[0].mxu0
    %1113 = vdwg.mxu0
    %1116 = vrot.lane.b32.xlu0 %v1012, 32
    %v1117 = vpop.permute.xlu0 %1116
    %1118 = vrot.lane.b32.xlu0 %v1015, 32
    %v1119 = vpop.permute.xlu0 %1118
    %1124 = vrot.lane.b32.xlu0 %v1060, 64
    %v1125 = vpop.permute.xlu0 %1124
    %1126 = vrot.lane.b32.xlu0 %v1063, 64
    %v1127 = vpop.permute.xlu0 %1126
    %1132 = vrot.lane.b32.xlu0 %v1108, 96
    %v1133 = vpop.permute.xlu0 %1132
    %1134 = vrot.lane.b32.xlu0 %v1111, 96
    %v1135 = vpop.permute.xlu0 %1134
    %v1138 = vsel %vm616, %v963, %v1117
    %v1139 = vsel %vm616, %v966, %v1119
    %vm1140 = vcmask 523264
    %v1141 = vsel %vm1140, %v1138, %v1125
    %v1142 = vsel %vm1140, %v1139, %v1127
    %vm1143 = vcmask 785408
    %v1144 = vsel %vm1143, %v1141, %v1133
    %v1145 = vsel %vm1143, %v1142, %v1135
    %v1146 = vld [vmem:[%s7] sm:$0xf]
    %v1147 = vld [vmem:[%s7 + $0x4] sm:$0xf]
    %v1148 = vld [vmem:[%s7 + $0x8] sm:$0xf]
    %v1149 = vld [vmem:[%s7 + $0xc] sm:$0xf]
    %v1150 = vld [vmem:[%s7 + $0x10] sm:$0xf]
    %v1151 = vld [vmem:[%s7 + $0x14] sm:$0xf]
    %v1152 = vld [vmem:[%s7 + $0x18] sm:$0xf]
    %v1153 = vld [vmem:[%s7 + $0x1c] sm:$0xf]
    %v1154 = vld [vmem:[%s7 + $0x20] sm:$0xf]
    %v1155 = vld [vmem:[%s7 + $0x24] sm:$0xf]
    %v1156 = vld [vmem:[%s7 + $0x28] sm:$0xf]
    %v1157 = vld [vmem:[%s7 + $0x2c] sm:$0xf]
    %v1158 = vld [vmem:[%s7 + $0x30] sm:$0xf]
    %v1159 = vld [vmem:[%s7 + $0x34] sm:$0xf]
    %v1160 = vld [vmem:[%s7 + $0x38] sm:$0xf]
    %v1161 = vld [vmem:[%s7 + $0x3c] sm:$0xf]
    %v1162 = vpack.c.bf16 %v1145, %v1144
    %v1163 = vld [vmem:[#allocation8] sm:$0x1]
    %v1165 = vlaneseq
    %v1166 = vshrl.u32 %v1165, 7
    %v1167 = vsub.s32 0, %v1166
    %v1168 = vrot.slane %v1163, %v1167
    %v1186 = vunpack.c.l.b16 %v1146
    %v1187 = vunpack.c.l.b16 %v1147
    %v1188 = vunpack.c.l.b16 %v1148
    %v1189 = vunpack.c.l.b16 %v1149
    %v1190 = vunpack.c.l.b16 %v1150
    %v1191 = vunpack.c.l.b16 %v1151
    %v1192 = vunpack.c.l.b16 %v1152
    %v1193 = vunpack.c.l.b16 %v1153
    %v1194 = vunpack.c.l.b16 %v1154
    %v1195 = vunpack.c.l.b16 %v1155
    %v1196 = vunpack.c.l.b16 %v1156
    %v1197 = vunpack.c.l.b16 %v1157
    %v1198 = vunpack.c.l.b16 %v1158
    %v1199 = vunpack.c.l.b16 %v1159
    %v1200 = vunpack.c.l.b16 %v1160
    %v1201 = vunpack.c.l.b16 %v1161
    %v1202 = vpack.c.b16 %v1187, %v1186
    %v1203 = vpack.c.b16 %v1189, %v1188
    %v1204 = vpack.c.b16 %v1191, %v1190
    %v1205 = vpack.c.b16 %v1193, %v1192
    %v1206 = vpack.c.b16 %v1195, %v1194
    %v1207 = vpack.c.b16 %v1197, %v1196
    %v1208 = vpack.c.b16 %v1199, %v1198
    %v1209 = vpack.c.b16 %v1201, %v1200
    %1218 = vmatprep.subr.bf16.mxu0 0
    %1219 = vmatpush1.bf16.msra.mxu0 %v1202
    %1220 = vmatprep.subr.bf16.mxu0 0
    %1221 = vmatpush1.bf16.msra.mxu0 %v1203
    %1222 = vmatprep.subr.bf16.mxu0 0
    %1223 = vmatpush1.bf16.msra.mxu0 %v1204
    %1224 = vmatprep.subr.bf16.mxu0 0
    %1225 = vmatpush1.bf16.msra.mxu0 %v1205
    %1226 = vmatprep.subr.bf16.mxu0 0
    %1227 = vmatpush1.bf16.msra.mxu0 %v1206
    %1228 = vmatprep.subr.bf16.mxu0 0
    %1229 = vmatpush1.bf16.msra.mxu0 %v1207
    %1230 = vmatprep.subr.bf16.mxu0 0
    %1231 = vmatpush1.bf16.msra.mxu0 %v1208
    %1232 = vmatprep.subr.bf16.mxu0 0
    %1233 = vmatpush1.bf16.msra.mxu0 %v1209
    %1234 = vmatprep.subr.bf16.mxu0 0
    %1235 = vmatpush1.bf16.msra.mxu0 0
    %1236 = vmatprep.subr.bf16.mxu0 0
    %1237 = vmatpush1.bf16.msra.mxu0 0
    %1238 = vmatprep.subr.bf16.mxu0 0
    %1239 = vmatpush1.bf16.msra.mxu0 0
    %1240 = vmatprep.subr.bf16.mxu0 0
    %1241 = vmatpush1.bf16.msra.mxu0 0
    %1242 = vmatprep.subr.bf16.mxu0 0
    %1243 = vmatpush1.bf16.msra.mxu0 0
    %1244 = vmatprep.subr.bf16.mxu0 0
    %1245 = vmatpush1.bf16.msra.mxu0 0
    %1246 = vmatprep.subr.bf16.mxu0 0
    %1247 = vmatpush1.bf16.msra.mxu0 0
    %1248 = vmatprep.subr.bf16.mxu0 0
    %1249 = vmatpush1.bf16.msra.mxu0 0
    %1250 = vmatprep.mubr.bf16.mxu0 0
    %1251 = vmatmul.mubr.bf16.gmra.mrb[0].mxu0 %v1162
    %v1252 = vpop.f32.mrb[0].mxu0
    %v1253 = vadd.f32 %v1168, %v1252
    %v1254 = vpop.f32.mrb[0].mxu0
    %v1255 = vpop.f32.mrb[0].mxu0
    %v1256 = vadd.f32 %v1168, %v1255
    %v1257 = vpop.f32.mrb[0].mxu0
    %1258 = vdwg.mxu0
    %v1259 = vadd.f32 %v338, %v1253
    %v1260 = vadd.f32 %v341, %v1256
    %v1261 = vld [vmem:[#allocation16] sm:$0x1]
    %v1262 = vld [vmem:[#allocation17] sm:$0x1]
    %1263 = vadd.xlane.f32.xlu0 %v1259
    %v1264 = vpop.xlane.xlu0 %1263
    %1265 = vadd.xlane.f32.xlu0 %v1260
    %v1266 = vpop.xlane.xlu0 %1265
    %v1267 = vrcp.pop 128.0
    %v1268 = vmul.f32 %v1264, %v1267
    %v1269 = vmul.f32 %v1266, %v1267
    %v1270 = vsub.f32 %v1259, %v1268
    %v1271 = vsub.f32 %v1260, %v1269
    %v1272 = vmul.f32 %v1270, %v1270
    %v1273 = vmul.f32 %v1271, %v1271
    %1274 = vadd.xlane.f32.xlu0 %v1272
    %v1275 = vpop.xlane.xlu0 %1274
    %1276 = vadd.xlane.f32.xlu0 %v1273
    %v1277 = vpop.xlane.xlu0 %1276
    %v1278 = vmul.f32 %v1275, %v1267
    %v1279 = vmul.f32 %v1277, %v1267
    %v1280 = vadd.f32 %v1278, 1e-05
    %v1281 = vadd.f32 %v1279, 1e-05
    %v1282 = vrsqrt.pop %v1280
    %v1283 = vrsqrt.pop %v1281
    %v1284 = vmul.f32 %v1270, %v1282
    %v1285 = vmul.f32 %v1271, %v1283
    %v1287 = vlaneseq
    %v1288 = vshrl.u32 %v1287, 7
    %v1289 = vsub.s32 0, %v1288
    %v1290 = vrot.slane %v1261, %v1289
    %v1292 = vmul.f32 %v1284, %v1290
    %v1293 = vmul.f32 %v1285, %v1290
    %v1295 = vlaneseq
    %v1296 = vshrl.u32 %v1295, 7
    %v1297 = vsub.s32 0, %v1296
    %v1298 = vrot.slane %v1262, %v1297
    %v1300 = vadd.f32 %v1292, %v1298
    %v1301 = vadd.f32 %v1293, %v1298
    %v1302 = vld [vmem:[#allocation10] sm:$0xff]
    %v1303 = vld [vmem:[#allocation10 + $0x8] sm:$0xff]
    %v1304 = vld [vmem:[#allocation10 + $0x10] sm:$0xff]
    %v1305 = vld [vmem:[#allocation10 + $0x18] sm:$0xff]
    %v1306 = vld [vmem:[#allocation10 + $0x20] sm:$0xff]
    %v1307 = vld [vmem:[#allocation10 + $0x28] sm:$0xff]
    %v1308 = vld [vmem:[#allocation10 + $0x30] sm:$0xff]
    %v1309 = vld [vmem:[#allocation10 + $0x38] sm:$0xff]
    %v1310 = vld [vmem:[#allocation10 + $0x40] sm:$0xff]
    %v1311 = vld [vmem:[#allocation10 + $0x48] sm:$0xff]
    %v1312 = vld [vmem:[#allocation10 + $0x50] sm:$0xff]
    %v1313 = vld [vmem:[#allocation10 + $0x58] sm:$0xff]
    %v1314 = vld [vmem:[#allocation10 + $0x60] sm:$0xff]
    %v1315 = vld [vmem:[#allocation10 + $0x68] sm:$0xff]
    %v1316 = vld [vmem:[#allocation10 + $0x70] sm:$0xff]
    %v1317 = vld [vmem:[#allocation10 + $0x78] sm:$0xff]
    %v1318 = vpack.c.bf16 %v1301, %v1300
    %v1319 = vld [vmem:[#allocation11] sm:$0x3]
    %v1321 = vlaneseq
    %v1322 = vshrl.u32 %v1321, 7
    %v1323 = vsub.s32 0, %v1322
    %v1324 = vrot.slane %v1319, %v1323
    %v1325 = vlaneseq
    %v1326 = vshrl.u32 %v1325, 7
    %v1327 = vsub.s32 1, %v1326
    %v1328 = vrot.slane %v1319, %v1327
    %v1347 = vunpack.c.l.b16 %v1302
    %v1348 = vunpack.c.h.b16 %v1302
    %v1349 = vunpack.c.l.b16 %v1303
    %v1350 = vunpack.c.h.b16 %v1303
    %v1351 = vunpack.c.l.b16 %v1304
    %v1352 = vunpack.c.h.b16 %v1304
    %v1353 = vunpack.c.l.b16 %v1305
    %v1354 = vunpack.c.h.b16 %v1305
    %v1355 = vunpack.c.l.b16 %v1306
    %v1356 = vunpack.c.h.b16 %v1306
    %v1357 = vunpack.c.l.b16 %v1307
    %v1358 = vunpack.c.h.b16 %v1307
    %v1359 = vunpack.c.l.b16 %v1308
    %v1360 = vunpack.c.h.b16 %v1308
    %v1361 = vunpack.c.l.b16 %v1309
    %v1362 = vunpack.c.h.b16 %v1309
    %v1363 = vunpack.c.l.b16 %v1310
    %v1364 = vunpack.c.h.b16 %v1310
    %v1365 = vunpack.c.l.b16 %v1311
    %v1366 = vunpack.c.h.b16 %v1311
    %v1367 = vunpack.c.l.b16 %v1312
    %v1368 = vunpack.c.h.b16 %v1312
    %v1369 = vunpack.c.l.b16 %v1313
    %v1370 = vunpack.c.h.b16 %v1313
    %v1371 = vunpack.c.l.b16 %v1314
    %v1372 = vunpack.c.h.b16 %v1314
    %v1373 = vunpack.c.l.b16 %v1315
    %v1374 = vunpack.c.h.b16 %v1315
    %v1375 = vunpack.c.l.b16 %v1316
    %v1376 = vunpack.c.h.b16 %v1316
    %v1377 = vunpack.c.l.b16 %v1317
    %v1378 = vunpack.c.h.b16 %v1317
    %v1379 = vpack.c.b16 %v1349, %v1347
    %v1380 = vpack.c.b16 %v1350, %v1348
    %v1381 = vpack.c.b16 %v1353, %v1351
    %v1382 = vpack.c.b16 %v1354, %v1352
    %v1383 = vpack.c.b16 %v1357, %v1355
    %v1384 = vpack.c.b16 %v1358, %v1356
    %v1385 = vpack.c.b16 %v1361, %v1359
    %v1386 = vpack.c.b16 %v1362, %v1360
    %v1387 = vpack.c.b16 %v1365, %v1363
    %v1388 = vpack.c.b16 %v1366, %v1364
    %v1389 = vpack.c.b16 %v1369, %v1367
    %v1390 = vpack.c.b16 %v1370, %v1368
    %v1391 = vpack.c.b16 %v1373, %v1371
    %v1392 = vpack.c.b16 %v1374, %v1372
    %v1393 = vpack.c.b16 %v1377, %v1375
    %v1394 = vpack.c.b16 %v1378, %v1376
    %1411 = vmatprep.subr.bf16.mxu0 %v1380
    %1412 = vmatpush1.bf16.msra.mxu0 %v1379
    %1413 = vmatprep.subr.bf16.mxu0 %v1382
    %1414 = vmatpush1.bf16.msra.mxu0 %v1381
    %1415 = vmatprep.subr.bf16.mxu0 %v1384
    %1416 = vmatpush1.bf16.msra.mxu0 %v1383
    %1417 = vmatprep.subr.bf16.mxu0 %v1386
    %1418 = vmatpush1.bf16.msra.mxu0 %v1385
    %1419 = vmatprep.subr.bf16.mxu0 %v1388
    %1420 = vmatpush1.bf16.msra.mxu0 %v1387
    %1421 = vmatprep.subr.bf16.mxu0 %v1390
    %1422 = vmatpush1.bf16.msra.mxu0 %v1389
    %1423 = vmatprep.subr.bf16.mxu0 %v1392
    %1424 = vmatpush1.bf16.msra.mxu0 %v1391
    %1425 = vmatprep.subr.bf16.mxu0 %v1394
    %1426 = vmatpush1.bf16.msra.mxu0 %v1393
    %1427 = vmatprep.subr.bf16.mxu0 0
    %1428 = vmatpush1.bf16.msra.mxu0 0
    %1429 = vmatprep.subr.bf16.mxu0 0
    %1430 = vmatpush1.bf16.msra.mxu0 0
    %1431 = vmatprep.subr.bf16.mxu0 0
    %1432 = vmatpush1.bf16.msra.mxu0 0
    %1433 = vmatprep.subr.bf16.mxu0 0
    %1434 = vmatpush1.bf16.msra.mxu0 0
    %1435 = vmatprep.subr.bf16.mxu0 0
    %1436 = vmatpush1.bf16.msra.mxu0 0
    %1437 = vmatprep.subr.bf16.mxu0 0
    %1438 = vmatpush1.bf16.msra.mxu0 0
    %1439 = vmatprep.subr.bf16.mxu0 0
    %1440 = vmatpush1.bf16.msra.mxu0 0
    %1441 = vmatprep.subr.bf16.mxu0 0
    %1442 = vmatpush1.bf16.msra.mxu0 0
    %1443 = vmatprep.mubr.bf16.mxu0 0
    %1444 = vmatmul.mubr.bf16.gmra.mrb[0].mxu0 %v1318
    %v1445 = vpop.f32.mrb[0].mxu0
    %v1446 = vadd.f32 %v1324, %v1445
    %v1447 = vpop.f32.mrb[0].mxu0
    %v1448 = vadd.f32 %v1328, %v1447
    %v1449 = vpop.f32.mrb[0].mxu0
    %v1450 = vadd.f32 %v1324, %v1449
    %v1451 = vpop.f32.mrb[0].mxu0
    %v1452 = vadd.f32 %v1328, %v1451
    %1453 = vdwg.mxu0
    %v1454 = vmax.f32 %v1446, 0.0
    %v1455 = vmax.f32 %v1448, 0.0
    %v1456 = vmax.f32 %v1450, 0.0
    %v1457 = vmax.f32 %v1452, 0.0
    %v1458 = vld [vmem:[#allocation13] sm:$0xf]
    %v1459 = vld [vmem:[#allocation13 + $0x4] sm:$0xf]
    %v1460 = vld [vmem:[#allocation13 + $0x8] sm:$0xf]
    %v1461 = vld [vmem:[#allocation13 + $0xc] sm:$0xf]
    %v1462 = vld [vmem:[#allocation13 + $0x10] sm:$0xf]
    %v1463 = vld [vmem:[#allocation13 + $0x14] sm:$0xf]
    %v1464 = vld [vmem:[#allocation13 + $0x18] sm:$0xf]
    %v1465 = vld [vmem:[#allocation13 + $0x1c] sm:$0xf]
    %v1466 = vld [vmem:[#allocation13 + $0x20] sm:$0xf]
    %v1467 = vld [vmem:[#allocation13 + $0x24] sm:$0xf]
    %v1468 = vld [vmem:[#allocation13 + $0x28] sm:$0xf]
    %v1469 = vld [vmem:[#allocation13 + $0x2c] sm:$0xf]
    %v1470 = vld [vmem:[#allocation13 + $0x30] sm:$0xf]
    %v1471 = vld [vmem:[#allocation13 + $0x34] sm:$0xf]
    %v1472 = vld [vmem:[#allocation13 + $0x38] sm:$0xf]
    %v1473 = vld [vmem:[#allocation13 + $0x3c] sm:$0xf]
    %v1474 = vld [vmem:[#allocation13 + $0x40] sm:$0xf]
    %v1475 = vld [vmem:[#allocation13 + $0x44] sm:$0xf]
    %v1476 = vld [vmem:[#allocation13 + $0x48] sm:$0xf]
    %v1477 = vld [vmem:[#allocation13 + $0x4c] sm:$0xf]
    %v1478 = vld [vmem:[#allocation13 + $0x50] sm:$0xf]
    %v1479 = vld [vmem:[#allocation13 + $0x54] sm:$0xf]
    %v1480 = vld [vmem:[#allocation13 + $0x58] sm:$0xf]
    %v1481 = vld [vmem:[#allocation13 + $0x5c] sm:$0xf]
    %v1482 = vld [vmem:[#allocation13 + $0x60] sm:$0xf]
    %v1483 = vld [vmem:[#allocation13 + $0x64] sm:$0xf]
    %v1484 = vld [vmem:[#allocation13 + $0x68] sm:$0xf]
    %v1485 = vld [vmem:[#allocation13 + $0x6c] sm:$0xf]
    %v1486 = vld [vmem:[#allocation13 + $0x70] sm:$0xf]
    %v1487 = vld [vmem:[#allocation13 + $0x74] sm:$0xf]
    %v1488 = vld [vmem:[#allocation13 + $0x78] sm:$0xf]
    %v1489 = vld [vmem:[#allocation13 + $0x7c] sm:$0xf]
    %v1490 = vpack.c.bf16 %v1456, %v1454
    %v1491 = vpack.c.bf16 %v1457, %v1455
    %v1492 = vld [vmem:[#allocation14] sm:$0x1]
    %v1494 = vlaneseq
    %v1495 = vshrl.u32 %v1494, 7
    %v1496 = vsub.s32 0, %v1495
    %v1497 = vrot.slane %v1492, %v1496
    %v1531 = vunpack.c.l.b16 %v1458
    %v1532 = vunpack.c.l.b16 %v1459
    %v1533 = vunpack.c.l.b16 %v1460
    %v1534 = vunpack.c.l.b16 %v1461
    %v1535 = vunpack.c.l.b16 %v1462
    %v1536 = vunpack.c.l.b16 %v1463
    %v1537 = vunpack.c.l.b16 %v1464
    %v1538 = vunpack.c.l.b16 %v1465
    %v1539 = vunpack.c.l.b16 %v1466
    %v1540 = vunpack.c.l.b16 %v1467
    %v1541 = vunpack.c.l.b16 %v1468
    %v1542 = vunpack.c.l.b16 %v1469
    %v1543 = vunpack.c.l.b16 %v1470
    %v1544 = vunpack.c.l.b16 %v1471
    %v1545 = vunpack.c.l.b16 %v1472
    %v1546 = vunpack.c.l.b16 %v1473
    %v1547 = vunpack.c.l.b16 %v1474
    %v1548 = vunpack.c.l.b16 %v1475
    %v1549 = vunpack.c.l.b16 %v1476
    %v1550 = vunpack.c.l.b16 %v1477
    %v1551 = vunpack.c.l.b16 %v1478
    %v1552 = vunpack.c.l.b16 %v1479
    %v1553 = vunpack.c.l.b16 %v1480
    %v1554 = vunpack.c.l.b16 %v1481
    %v1555 = vunpack.c.l.b16 %v1482
    %v1556 = vunpack.c.l.b16 %v1483
    %v1557 = vunpack.c.l.b16 %v1484
    %v1558 = vunpack.c.l.b16 %v1485
    %v1559 = vunpack.c.l.b16 %v1486
    %v1560 = vunpack.c.l.b16 %v1487
    %v1561 = vunpack.c.l.b16 %v1488
    %v1562 = vunpack.c.l.b16 %v1489
    %v1563 = vpack.c.b16 %v1532, %v1531
    %v1564 = vpack.c.b16 %v1534, %v1533
    %v1565 = vpack.c.b16 %v1536, %v1535
    %v1566 = vpack.c.b16 %v1538, %v1537
    %v1567 = vpack.c.b16 %v1540, %v1539
    %v1568 = vpack.c.b16 %v1542, %v1541
    %v1569 = vpack.c.b16 %v1544, %v1543
    %v1570 = vpack.c.b16 %v1546, %v1545
    %v1571 = vpack.c.b16 %v1548, %v1547
    %v1572 = vpack.c.b16 %v1550, %v1549
    %v1573 = vpack.c.b16 %v1552, %v1551
    %v1574 = vpack.c.b16 %v1554, %v1553
    %v1575 = vpack.c.b16 %v1556, %v1555
    %v1576 = vpack.c.b16 %v1558, %v1557
    %v1577 = vpack.c.b16 %v1560, %v1559
    %v1578 = vpack.c.b16 %v1562, %v1561
    %1595 = vmatprep.subr.bf16.mxu0 0
    %1596 = vmatpush1.bf16.msra.mxu0 %v1563
    %1597 = vmatprep.subr.bf16.mxu0 0
    %1598 = vmatpush1.bf16.msra.mxu0 %v1564
    %1599 = vmatprep.subr.bf16.mxu0 0
    %1600 = vmatpush1.bf16.msra.mxu0 %v1565
    %1601 = vmatprep.subr.bf16.mxu0 0
    %1602 = vmatpush1.bf16.msra.mxu0 %v1566
    %1603 = vmatprep.subr.bf16.mxu0 0
    %1604 = vmatpush1.bf16.msra.mxu0 %v1567
    %1605 = vmatprep.subr.bf16.mxu0 0
    %1606 = vmatpush1.bf16.msra.mxu0 %v1568
    %1607 = vmatprep.subr.bf16.mxu0 0
    %1608 = vmatpush1.bf16.msra.mxu0 %v1569
    %1609 = vmatprep.subr.bf16.mxu0 0
    %1610 = vmatpush1.bf16.msra.mxu0 %v1570
    %1611 = vmatprep.subr.bf16.mxu0 0
    %1612 = vmatpush1.bf16.msra.mxu0 %v1571
    %1613 = vmatprep.subr.bf16.mxu0 0
    %1614 = vmatpush1.bf16.msra.mxu0 %v1572
    %1615 = vmatprep.subr.bf16.mxu0 0
    %1616 = vmatpush1.bf16.msra.mxu0 %v1573
    %1617 = vmatprep.subr.bf16.mxu0 0
    %1618 = vmatpush1.bf16.msra.mxu0 %v1574
    %1619 = vmatprep.subr.bf16.mxu0 0
    %1620 = vmatpush1.bf16.msra.mxu0 %v1575
    %1621 = vmatprep.subr.bf16.mxu0 0
    %1622 = vmatpush1.bf16.msra.mxu0 %v1576
    %1623 = vmatprep.subr.bf16.mxu0 0
    %1624 = vmatpush1.bf16.msra.mxu0 %v1577
    %1625 = vmatprep.subr.bf16.mxu0 0
    %1626 = vmatpush1.bf16.msra.mxu0 %v1578
    %1627 = vmatprep.mubr.bf16.mxu0 %v1491
    %1628 = vmatmul.mubr.bf16.gmra.mrb[0].mxu0 %v1490
    %v1629 = vpop.f32.mrb[0].mxu0
    %v1630 = vadd.f32 %v1497, %v1629
    %v1631 = vpop.f32.mrb[0].mxu0
    %v1632 = vpop.f32.mrb[0].mxu0
    %v1633 = vadd.f32 %v1497, %v1632
    %v1634 = vpop.f32.mrb[0].mxu0
    %1635 = vdwg.mxu0
    %v1636 = vadd.f32 %v1300, %v1630
    %v1637 = vadd.f32 %v1301, %v1633
    %v1638 = vld [vmem:[#allocation19] sm:$0x1]
    %v1639 = vld [vmem:[#allocation20] sm:$0x1]
    %1640 = vadd.xlane.f32.xlu0 %v1636
    %v1641 = vpop.xlane.xlu0 %1640
    %1642 = vadd.xlane.f32.xlu0 %v1637
    %v1643 = vpop.xlane.xlu0 %1642
    %v1644 = vmul.f32 %v1641, %v1267
    %v1645 = vmul.f32 %v1643, %v1267
    %v1646 = vsub.f32 %v1636, %v1644
    %v1647 = vsub.f32 %v1637, %v1645
    %v1648 = vmul.f32 %v1646, %v1646
    %v1649 = vmul.f32 %v1647, %v1647
    %1650 = vadd.xlane.f32.xlu0 %v1648
    %v1651 = vpop.xlane.xlu0 %1650
    %1652 = vadd.xlane.f32.xlu0 %v1649
    %v1653 = vpop.xlane.xlu0 %1652
    %v1654 = vmul.f32 %v1651, %v1267
    %v1655 = vmul.f32 %v1653, %v1267
    %v1656 = vadd.f32 %v1654, 1e-05
    %v1657 = vadd.f32 %v1655, 1e-05
    %v1658 = vrsqrt.pop %v1656
    %v1659 = vrsqrt.pop %v1657
    %v1660 = vmul.f32 %v1646, %v1658
    %v1661 = vmul.f32 %v1647, %v1659
    %v1663 = vlaneseq
    %v1664 = vshrl.u32 %v1663, 7
    %v1665 = vsub.s32 0, %v1664
    %v1666 = vrot.slane %v1638, %v1665
    %v1668 = vmul.f32 %v1660, %v1666
    %v1669 = vmul.f32 %v1661, %v1666
    %v1671 = vlaneseq
    %v1672 = vshrl.u32 %v1671, 7
    %v1673 = vsub.s32 0, %v1672
    %v1674 = vrot.slane %v1639, %v1673
    %v1676 = vadd.f32 %v1668, %v1674
    %v1677 = vadd.f32 %v1669, %v1674
    %s1678 = scalar_lea.vmem [#allocation7], 192
    %v1679 = vld [vmem:[%s1678] sm:$0xff]
    %v1680 = vld [vmem:[%s1678 + $0x8] sm:$0xf]
    %v1681 = vld [vmem:[%s1678 + $0xc] sm:$0xff]
    %v1682 = vld [vmem:[%s1678 + $0x14] sm:$0xf]
    %v1683 = vld [vmem:[%s1678 + $0x18] sm:$0xff]
    %v1684 = vld [vmem:[%s1678 + $0x20] sm:$0xf]
    %v1685 = vld [vmem:[%s1678 + $0x24] sm:$0xff]
    %v1686 = vld [vmem:[%s1678 + $0x2c] sm:$0xf]
    %v1687 = vld [vmem:[%s1678 + $0x30] sm:$0xff]
    %v1688 = vld [vmem:[%s1678 + $0x38] sm:$0xf]
    %v1689 = vld [vmem:[%s1678 + $0x3c] sm:$0xff]
    %v1690 = vld [vmem:[%s1678 + $0x44] sm:$0xf]
    %v1691 = vld [vmem:[%s1678 + $0x48] sm:$0xff]
    %v1692 = vld [vmem:[%s1678 + $0x50] sm:$0xf]
    %v1693 = vld [vmem:[%s1678 + $0x54] sm:$0xff]
    %v1694 = vld [vmem:[%s1678 + $0x5c] sm:$0xf]
    %v1695 = vld [vmem:[%s1678 + $0x60] sm:$0xff]
    %v1696 = vld [vmem:[%s1678 + $0x68] sm:$0xf]
    %v1697 = vld [vmem:[%s1678 + $0x6c] sm:$0xff]
    %v1698 = vld [vmem:[%s1678 + $0x74] sm:$0xf]
    %v1699 = vld [vmem:[%s1678 + $0x78] sm:$0xff]
    %v1700 = vld [vmem:[%s1678 + $0x80] sm:$0xf]
    %v1701 = vld [vmem:[%s1678 + $0x84] sm:$0xff]
    %v1702 = vld [vmem:[%s1678 + $0x8c] sm:$0xf]
    %v1703 = vld [vmem:[%s1678 + $0x90] sm:$0xff]
    %v1704 = vld [vmem:[%s1678 + $0x98] sm:$0xf]
    %v1705 = vld [vmem:[%s1678 + $0x9c] sm:$0xff]
    %v1706 = vld [vmem:[%s1678 + $0xa4] sm:$0xf]
    %v1707 = vld [vmem:[%s1678 + $0xa8] sm:$0xff]
    %v1708 = vld [vmem:[%s1678 + $0xb0] sm:$0xf]
    %v1709 = vld [vmem:[%s1678 + $0xb4] sm:$0xff]
    %v1710 = vld [vmem:[%s1678 + $0xbc] sm:$0xf]
    %v1711 = vpack.c.bf16 %v1677, %v1676
    %s1712 = scalar_lea.vmem %s6, 3
    %v1713 = vld [vmem:[%s1712] sm:$0x7]
    %v1715 = vlaneseq
    %v1716 = vshrl.u32 %v1715, 7
    %v1717 = vsub.s32 0, %v1716
    %v1718 = vrot.slane %v1713, %v1717
    %v1719 = vlaneseq
    %v1720 = vshrl.u32 %v1719, 7
    %v1721 = vsub.s32 1, %v1720
    %v1722 = vrot.slane %v1713, %v1721
    %v1723 = vlaneseq
    %v1724 = vshrl.u32 %v1723, 7
    %v1725 = vsub.s32 2, %v1724
    %v1726 = vrot.slane %v1713, %v1725
    %v1762 = vunpack.c.l.b16 %v1679
    %v1763 = vunpack.c.h.b16 %v1679
    %v1764 = vunpack.c.l.b16 %v1680
    %v1765 = vunpack.c.l.b16 %v1681
    %v1766 = vunpack.c.h.b16 %v1681
    %v1767 = vunpack.c.l.b16 %v1682
    %v1768 = vunpack.c.l.b16 %v1683
    %v1769 = vunpack.c.h.b16 %v1683
    %v1770 = vunpack.c.l.b16 %v1684
    %v1771 = vunpack.c.l.b16 %v1685
    %v1772 = vunpack.c.h.b16 %v1685
    %v1773 = vunpack.c.l.b16 %v1686
    %v1774 = vunpack.c.l.b16 %v1687
    %v1775 = vunpack.c.h.b16 %v1687
    %v1776 = vunpack.c.l.b16 %v1688
    %v1777 = vunpack.c.l.b16 %v1689
    %v1778 = vunpack.c.h.b16 %v1689
    %v1779 = vunpack.c.l.b16 %v1690
    %v1780 = vunpack.c.l.b16 %v1691
    %v1781 = vunpack.c.h.b16 %v1691
    %v1782 = vunpack.c.l.b16 %v1692
    %v1783 = vunpack.c.l.b16 %v1693
    %v1784 = vunpack.c.h.b16 %v1693
    %v1785 = vunpack.c.l.b16 %v1694
    %v1786 = vunpack.c.l.b16 %v1695
    %v1787 = vunpack.c.h.b16 %v1695
    %v1788 = vunpack.c.l.b16 %v1696
    %v1789 = vunpack.c.l.b16 %v1697
    %v1790 = vunpack.c.h.b16 %v1697
    %v1791 = vunpack.c.l.b16 %v1698
    %v1792 = vunpack.c.l.b16 %v1699
    %v1793 = vunpack.c.h.b16 %v1699
    %v1794 = vunpack.c.l.b16 %v1700
    %v1795 = vunpack.c.l.b16 %v1701
    %v1796 = vunpack.c.h.b16 %v1701
    %v1797 = vunpack.c.l.b16 %v1702
    %v1798 = vunpack.c.l.b16 %v1703
    %v1799 = vunpack.c.h.b16 %v1703
    %v1800 = vunpack.c.l.b16 %v1704
    %v1801 = vunpack.c.l.b16 %v1705
    %v1802 = vunpack.c.h.b16 %v1705
    %v1803 = vunpack.c.l.b16 %v1706
    %v1804 = vunpack.c.l.b16 %v1707
    %v1805 = vunpack.c.h.b16 %v1707
    %v1806 = vunpack.c.l.b16 %v1708
    %v1807 = vunpack.c.l.b16 %v1709
    %v1808 = vunpack.c.h.b16 %v1709
    %v1809 = vunpack.c.l.b16 %v1710
    %v1810 = vpack.c.b16 %v1765, %v1762
    %v1811 = vpack.c.b16 %v1766, %v1763
    %v1812 = vpack.c.b16 %v1767, %v1764
    %v1813 = vpack.c.b16 %v1771, %v1768
    %v1814 = vpack.c.b16 %v1772, %v1769
    %v1815 = vpack.c.b16 %v1773, %v1770
    %v1816 = vpack.c.b16 %v1777, %v1774
    %v1817 = vpack.c.b16 %v1778, %v1775
    %v1818 = vpack.c.b16 %v1779, %v1776
    %v1819 = vpack.c.b16 %v1783, %v1780
    %v1820 = vpack.c.b16 %v1784, %v1781
    %v1821 = vpack.c.b16 %v1785, %v1782
    %v1822 = vpack.c.b16 %v1789, %v1786
    %v1823 = vpack.c.b16 %v1790, %v1787
    %v1824 = vpack.c.b16 %v1791, %v1788
    %v1825 = vpack.c.b16 %v1795, %v1792
    %v1826 = vpack.c.b16 %v1796, %v1793
    %v1827 = vpack.c.b16 %v1797, %v1794
    %v1828 = vpack.c.b16 %v1801, %v1798
    %v1829 = vpack.c.b16 %v1802, %v1799
    %v1830 = vpack.c.b16 %v1803, %v1800
    %v1831 = vpack.c.b16 %v1807, %v1804
    %v1832 = vpack.c.b16 %v1808, %v1805
    %v1833 = vpack.c.b16 %v1809, %v1806
    %1858 = vmatprep.subr.bf16.mxu0 %v1811
    %1859 = vmatpush1.bf16.msra.mxu0 %v1810
    %1860 = vmatprep.subr.bf16.mxu0 %v1814
    %1861 = vmatpush1.bf16.msra.mxu0 %v1813
    %1862 = vmatprep.subr.bf16.mxu0 %v1817
    %1863 = vmatpush1.bf16.msra.mxu0 %v1816
    %1864 = vmatprep.subr.bf16.mxu0 %v1820
    %1865 = vmatpush1.bf16.msra.mxu0 %v1819
    %1866 = vmatprep.subr.bf16.mxu0 %v1823
    %1867 = vmatpush1.bf16.msra.mxu0 %v1822
    %1868 = vmatprep.subr.bf16.mxu0 %v1826
    %1869 = vmatpush1.bf16.msra.mxu0 %v1825
    %1870 = vmatprep.subr.bf16.mxu0 %v1829
    %1871 = vmatpush1.bf16.msra.mxu0 %v1828
    %1872 = vmatprep.subr.bf16.mxu0 %v1832
    %1873 = vmatpush1.bf16.msra.mxu0 %v1831
    %1874 = vmatprep.subr.bf16.mxu0 0
    %1875 = vmatpush1.bf16.msra.mxu0 0
    %1876 = vmatprep.subr.bf16.mxu0 0
    %1877 = vmatpush1.bf16.msra.mxu0 0
    %1878 = vmatprep.subr.bf16.mxu0 0
    %1879 = vmatpush1.bf16.msra.mxu0 0
    %1880 = vmatprep.subr.bf16.mxu0 0
    %1881 = vmatpush1.bf16.msra.mxu0 0
    %1882 = vmatprep.subr.bf16.mxu0 0
    %1883 = vmatpush1.bf16.msra.mxu0 0
    %1884 = vmatprep.subr.bf16.mxu0 0
    %1885 = vmatpush1.bf16.msra.mxu0 0
    %1886 = vmatprep.subr.bf16.mxu0 0
    %1887 = vmatpush1.bf16.msra.mxu0 0
    %1888 = vmatprep.subr.bf16.mxu0 0
    %1889 = vmatpush1.bf16.msra.mxu0 0
    %1890 = vmatprep.mubr.bf16.mxu0 0
    %1891 = vmatmul.mubr.bf16.gmra.mrb[0].mxu0 %v1711
    %v1892 = vpop.f32.mrb[0].mxu0
    %v1893 = vadd.f32 %v1718, %v1892
    %v1894 = vpop.f32.mrb[0].mxu0
    %v1895 = vadd.f32 %v1722, %v1894
    %v1896 = vpop.f32.mrb[0].mxu0
    %v1897 = vadd.f32 %v1718, %v1896
    %v1898 = vpop.f32.mrb[0].mxu0
    %v1899 = vadd.f32 %v1722, %v1898
    %1900 = vdwg.mxu0
    %1901 = vmatprep.subr.bf16.mxu0 0
    %1902 = vmatpush1.bf16.msra.mxu0 %v1812
    %1903 = vmatprep.subr.bf16.mxu0 0
    %1904 = vmatpush1.bf16.msra.mxu0 %v1815
    %1905 = vmatprep.subr.bf16.mxu0 0
    %1906 = vmatpush1.bf16.msra.mxu0 %v1818
    %1907 = vmatprep.subr.bf16.mxu0 0
    %1908 = vmatpush1.bf16.msra.mxu0 %v1821
    %1909 = vmatprep.subr.bf16.mxu0 0
    %1910 = vmatpush1.bf16.msra.mxu0 %v1824
    %1911 = vmatprep.subr.bf16.mxu0 0
    %1912 = vmatpush1.bf16.msra.mxu0 %v1827
    %1913 = vmatprep.subr.bf16.mxu0 0
    %1914 = vmatpush1.bf16.msra.mxu0 %v1830
    %1915 = vmatprep.subr.bf16.mxu0 0
    %1916 = vmatpush1.bf16.msra.mxu0 %v1833
    %1917 = vmatprep.subr.bf16.mxu0 0
    %1918 = vmatpush1.bf16.msra.mxu0 0
    %1919 = vmatprep.subr.bf16.mxu0 0
    %1920 = vmatpush1.bf16.msra.mxu0 0
    %1921 = vmatprep.subr.bf16.mxu0 0
    %1922 = vmatpush1.bf16.msra.mxu0 0
    %1923 = vmatprep.subr.bf16.mxu0 0
    %1924 = vmatpush1.bf16.msra.mxu0 0
    %1925 = vmatprep.subr.bf16.mxu0 0
    %1926 = vmatpush1.bf16.msra.mxu0 0
    %1927 = vmatprep.subr.bf16.mxu0 0
    %1928 = vmatpush1.bf16.msra.mxu0 0
    %1929 = vmatprep.subr.bf16.mxu0 0
    %1930 = vmatpush1.bf16.msra.mxu0 0
    %1931 = vmatprep.subr.bf16.mxu0 0
    %1932 = vmatpush1.bf16.msra.mxu0 0
    %1933 = vmatprep.mubr.bf16.mxu0 0
    %1934 = vmatmul.mubr.bf16.gmra.mrb[0].mxu0 %v1711
    %v1935 = vpop.f32.mrb[0].mxu0
    %v1936 = vadd.f32 %v1726, %v1935
    %v1937 = vpop.f32.mrb[0].mxu0
    %v1938 = vpop.f32.mrb[0].mxu0
    %v1939 = vadd.f32 %v1726, %v1938
    %v1940 = vpop.f32.mrb[0].mxu0
    %1941 = vdwg.mxu0
    %v1942 = vpack.c.bf16 %v1897, %v1893
    %v1943 = vpack.c.bf16 %v1899, %v1895
    %v1945 = vsel %vm616, %v1942, 0
    %v1948 = vsel %vm616, %v1943, 0
    %1950 = vmatprep.subr.bf16.mxu0 0
    %1951 = vmatpush1.bf16.xpose.msra.mxu0 %v1948
    %1952 = vmatprep.subr.bf16.mxu0 0
    %1953 = vmatpush1.bf16.xpose.msra.mxu0 0
    %1954 = vmatprep.subr.bf16.mxu0 0
    %1955 = vmatpush1.bf16.xpose.msra.mxu0 0
    %1956 = vmatprep.subr.bf16.mxu0 0
    %1957 = vmatpush1.bf16.xpose.msra.mxu0 0
    %1958 = vmatprep.subr.bf16.mxu0 0
    %1959 = vmatpush1.bf16.xpose.msra.mxu0 0
    %1960 = vmatprep.subr.bf16.mxu0 0
    %1961 = vmatpush1.bf16.xpose.msra.mxu0 0
    %1962 = vmatprep.subr.bf16.mxu0 0
    %1963 = vmatpush1.bf16.xpose.msra.mxu0 0
    %1964 = vmatprep.subr.bf16.mxu0 0
    %1965 = vmatpush1.bf16.xpose.msra.mxu0 0
    %1966 = vmatprep.subr.bf16.mxu0 0
    %1967 = vmatpush1.bf16.xpose.msra.mxu0 0
    %1968 = vmatprep.subr.bf16.mxu0 0
    %1969 = vmatpush1.bf16.xpose.msra.mxu0 0
    %1970 = vmatprep.subr.bf16.mxu0 0
    %1971 = vmatpush1.bf16.xpose.msra.mxu0 0
    %1972 = vmatprep.subr.bf16.mxu0 0
    %1973 = vmatpush1.bf16.xpose.msra.mxu0 0
    %1974 = vmatprep.subr.bf16.mxu0 0
    %1975 = vmatpush1.bf16.xpose.msra.mxu0 0
    %1976 = vmatprep.subr.bf16.mxu0 0
    %1977 = vmatpush1.bf16.xpose.msra.mxu0 0
    %1978 = vmatprep.subr.bf16.mxu0 0
    %1979 = vmatpush1.bf16.xpose.msra.mxu0 0
    %1980 = vmatprep.subr.bf16.mxu0 0
    %1981 = vmatpush1.bf16.xpose.msra.mxu0 0
    %1982 = vmatprep.mubr.bf16.mxu0 0
    %1983 = vmatmul.mubr.bf16.gmra.mrb[0].mxu0 %v1945
    %v1984 = vpop.f32.mrb[0].mxu0
    %v1985 = vadd.f32 0.0, %v1984
    %v1986 = vpop.f32.mrb[0].mxu0
    %v1987 = vpop.f32.mrb[0].mxu0
    %v1988 = vadd.f32 0.0, %v1987
    %v1989 = vpop.f32.mrb[0].mxu0
    %1990 = vdwg.mxu0
    %1992 = vrot.lane.b32.xlu0 %v1942, 96
    %v1993 = vpop.permute.xlu0 %1992
    %1995 = vrot.lane.b32.xlu0 %v1943, 96
    %v1996 = vpop.permute.xlu0 %1995
    %v1998 = vsel %vm616, %v1993, 0
    %v2001 = vsel %vm616, %v1996, 0
    %2003 = vmatprep.subr.bf16.mxu0 0
    %2004 = vmatpush1.bf16.xpose.msra.mxu0 %v2001
    %2005 = vmatprep.subr.bf16.mxu0 0
    %2006 = vmatpush1.bf16.xpose.msra.mxu0 0
    %2007 = vmatprep.subr.bf16.mxu0 0
    %2008 = vmatpush1.bf16.xpose.msra.mxu0 0
    %2009 = vmatprep.subr.bf16.mxu0 0
    %2010 = vmatpush1.bf16.xpose.msra.mxu0 0
    %2011 = vmatprep.subr.bf16.mxu0 0
    %2012 = vmatpush1.bf16.xpose.msra.mxu0 0
    %2013 = vmatprep.subr.bf16.mxu0 0
    %2014 = vmatpush1.bf16.xpose.msra.mxu0 0
    %2015 = vmatprep.subr.bf16.mxu0 0
    %2016 = vmatpush1.bf16.xpose.msra.mxu0 0
    %2017 = vmatprep.subr.bf16.mxu0 0
    %2018 = vmatpush1.bf16.xpose.msra.mxu0 0
    %2019 = vmatprep.subr.bf16.mxu0 0
    %2020 = vmatpush1.bf16.xpose.msra.mxu0 0
    %2021 = vmatprep.subr.bf16.mxu0 0
    %2022 = vmatpush1.bf16.xpose.msra.mxu0 0
    %2023 = vmatprep.subr.bf16.mxu0 0
    %2024 = vmatpush1.bf16.xpose.msra.mxu0 0
    %2025 = vmatprep.subr.bf16.mxu0 0
    %2026 = vmatpush1.bf16.xpose.msra.mxu0 0
    %2027 = vmatprep.subr.bf16.mxu0 0
    %2028 = vmatpush1.bf16.xpose.msra.mxu0 0
    %2029 = vmatprep.subr.bf16.mxu0 0
    %2030 = vmatpush1.bf16.xpose.msra.mxu0 0
    %2031 = vmatprep.subr.bf16.mxu0 0
    %2032 = vmatpush1.bf16.xpose.msra.mxu0 0
    %2033 = vmatprep.subr.bf16.mxu0 0
    %2034 = vmatpush1.bf16.xpose.msra.mxu0 0
    %2035 = vmatprep.mubr.bf16.mxu0 0
    %2036 = vmatmul.mubr.bf16.gmra.mrb[0].mxu0 %v1998
    %v2037 = vpop.f32.mrb[0].mxu0
    %v2038 = vadd.f32 0.0, %v2037
    %v2039 = vpop.f32.mrb[0].mxu0
    %v2040 = vpop.f32.mrb[0].mxu0
    %v2041 = vadd.f32 0.0, %v2040
    %v2042 = vpop.f32.mrb[0].mxu0
    %2043 = vdwg.mxu0
    %2044 = vrot.lane.b32.xlu0 %v1942, 64
    %v2045 = vpop.permute.xlu0 %2044
    %2046 = vrot.lane.b32.xlu0 %v1943, 64
    %v2047 = vpop.permute.xlu0 %2046
    %v2049 = vsel %vm616, %v2045, 0
    %v2052 = vsel %vm616, %v2047, 0
    %2054 = vmatprep.subr.bf16.mxu0 0
    %2055 = vmatpush1.bf16.xpose.msra.mxu0 %v2052
    %2056 = vmatprep.subr.bf16.mxu0 0
    %2057 = vmatpush1.bf16.xpose.msra.mxu0 0
    %2058 = vmatprep.subr.bf16.mxu0 0
    %2059 = vmatpush1.bf16.xpose.msra.mxu0 0
    %2060 = vmatprep.subr.bf16.mxu0 0
    %2061 = vmatpush1.bf16.xpose.msra.mxu0 0
    %2062 = vmatprep.subr.bf16.mxu0 0
    %2063 = vmatpush1.bf16.xpose.msra.mxu0 0
    %2064 = vmatprep.subr.bf16.mxu0 0
    %2065 = vmatpush1.bf16.xpose.msra.mxu0 0
    %2066 = vmatprep.subr.bf16.mxu0 0
    %2067 = vmatpush1.bf16.xpose.msra.mxu0 0
    %2068 = vmatprep.subr.bf16.mxu0 0
    %2069 = vmatpush1.bf16.xpose.msra.mxu0 0
    %2070 = vmatprep.subr.bf16.mxu0 0
    %2071 = vmatpush1.bf16.xpose.msra.mxu0 0
    %2072 = vmatprep.subr.bf16.mxu0 0
    %2073 = vmatpush1.bf16.xpose.msra.mxu0 0
    %2074 = vmatprep.subr.bf16.mxu0 0
    %2075 = vmatpush1.bf16.xpose.msra.mxu0 0
    %2076 = vmatprep.subr.bf16.mxu0 0
    %2077 = vmatpush1.bf16.xpose.msra.mxu0 0
    %2078 = vmatprep.subr.bf16.mxu0 0
    %2079 = vmatpush1.bf16.xpose.msra.mxu0 0
    %2080 = vmatprep.subr.bf16.mxu0 0
    %2081 = vmatpush1.bf16.xpose.msra.mxu0 0
    %2082 = vmatprep.subr.bf16.mxu0 0
    %2083 = vmatpush1.bf16.xpose.msra.mxu0 0
    %2084 = vmatprep.subr.bf16.mxu0 0
    %2085 = vmatpush1.bf16.xpose.msra.mxu0 0
    %2086 = vmatprep.mubr.bf16.mxu0 0
    %2087 = vmatmul.mubr.bf16.gmra.mrb[0].mxu0 %v2049
    %v2088 = vpop.f32.mrb[0].mxu0
    %v2089 = vadd.f32 0.0, %v2088
    %v2090 = vpop.f32.mrb[0].mxu0
    %v2091 = vpop.f32.mrb[0].mxu0
    %v2092 = vadd.f32 0.0, %v2091
    %v2093 = vpop.f32.mrb[0].mxu0
    %2094 = vdwg.mxu0
    %2095 = vrot.lane.b32.xlu0 %v1942, 32
    %v2096 = vpop.permute.xlu0 %2095
    %2097 = vrot.lane.b32.xlu0 %v1943, 32
    %v2098 = vpop.permute.xlu0 %2097
    %v2100 = vsel %vm616, %v2096, 0
    %v2103 = vsel %vm616, %v2098, 0
    %2105 = vmatprep.subr.bf16.mxu0 0
    %2106 = vmatpush1.bf16.xpose.msra.mxu0 %v2103
    %2107 = vmatprep.subr.bf16.mxu0 0
    %2108 = vmatpush1.bf16.xpose.msra.mxu0 0
    %2109 = vmatprep.subr.bf16.mxu0 0
    %2110 = vmatpush1.bf16.xpose.msra.mxu0 0
    %2111 = vmatprep.subr.bf16.mxu0 0
    %2112 = vmatpush1.bf16.xpose.msra.mxu0 0
    %2113 = vmatprep.subr.bf16.mxu0 0
    %2114 = vmatpush1.bf16.xpose.msra.mxu0 0
    %2115 = vmatprep.subr.bf16.mxu0 0
    %2116 = vmatpush1.bf16.xpose.msra.mxu0 0
    %2117 = vmatprep.subr.bf16.mxu0 0
    %2118 = vmatpush1.bf16.xpose.msra.mxu0 0
    %2119 = vmatprep.subr.bf16.mxu0 0
    %2120 = vmatpush1.bf16.xpose.msra.mxu0 0
    %2121 = vmatprep.subr.bf16.mxu0 0
    %2122 = vmatpush1.bf16.xpose.msra.mxu0 0
    %2123 = vmatprep.subr.bf16.mxu0 0
    %2124 = vmatpush1.bf16.xpose.msra.mxu0 0
    %2125 = vmatprep.subr.bf16.mxu0 0
    %2126 = vmatpush1.bf16.xpose.msra.mxu0 0
    %2127 = vmatprep.subr.bf16.mxu0 0
    %2128 = vmatpush1.bf16.xpose.msra.mxu0 0
    %2129 = vmatprep.subr.bf16.mxu0 0
    %2130 = vmatpush1.bf16.xpose.msra.mxu0 0
    %2131 = vmatprep.subr.bf16.mxu0 0
    %2132 = vmatpush1.bf16.xpose.msra.mxu0 0
    %2133 = vmatprep.subr.bf16.mxu0 0
    %2134 = vmatpush1.bf16.xpose.msra.mxu0 0
    %2135 = vmatprep.subr.bf16.mxu0 0
    %2136 = vmatpush1.bf16.xpose.msra.mxu0 0
    %2137 = vmatprep.mubr.bf16.mxu0 0
    %2138 = vmatmul.mubr.bf16.gmra.mrb[0].mxu0 %v2100
    %v2139 = vpop.f32.mrb[0].mxu0
    %v2140 = vadd.f32 0.0, %v2139
    %v2141 = vpop.f32.mrb[0].mxu0
    %v2142 = vpop.f32.mrb[0].mxu0
    %v2143 = vadd.f32 0.0, %v2142
    %v2144 = vpop.f32.mrb[0].mxu0
    %2145 = vdwg.mxu0
    %v2146 = vmul.f32 %v1985, 0.17677669
    %v2147 = vmul.f32 %v1988, 0.17677669
    %v2148 = vmul.f32 %v2038, 0.17677669
    %v2149 = vmul.f32 %v2041, 0.17677669
    %v2150 = vmul.f32 %v2089, 0.17677669
    %v2151 = vmul.f32 %v2092, 0.17677669
    %v2152 = vmul.f32 %v2140, 0.17677669
    %v2153 = vmul.f32 %v2143, 0.17677669
    %v2154 = vadd.f32 %v2146, %v344
    %v2155 = vadd.f32 %v2147, %v345
    %v2156 = vadd.f32 %v2148, %v346
    %v2157 = vadd.f32 %v2149, %v347
    %v2158 = vadd.f32 %v2150, %v348
    %v2159 = vadd.f32 %v2151, %v349
    %v2160 = vadd.f32 %v2152, %v350
    %v2161 = vadd.f32 %v2153, %v351
    %v2162 = vsel %vm299, %v2154, -inf
    %2163 = vmax.xlane.f32.xlu0 %v2162
    %v2164 = vpop.xlane.xlu0 %2163
    %v2165 = vsel %vm299, %v2155, -inf
    %2166 = vmax.xlane.f32.xlu0 %v2165
    %v2167 = vpop.xlane.xlu0 %2166
    %v2168 = vsel %vm299, %v2156, -inf
    %2169 = vmax.xlane.f32.xlu0 %v2168
    %v2170 = vpop.xlane.xlu0 %2169
    %v2171 = vsel %vm299, %v2157, -inf
    %2172 = vmax.xlane.f32.xlu0 %v2171
    %v2173 = vpop.xlane.xlu0 %2172
    %v2174 = vsel %vm299, %v2158, -inf
    %2175 = vmax.xlane.f32.xlu0 %v2174
    %v2176 = vpop.xlane.xlu0 %2175
    %v2177 = vsel %vm299, %v2159, -inf
    %2178 = vmax.xlane.f32.xlu0 %v2177
    %v2179 = vpop.xlane.xlu0 %2178
    %v2180 = vsel %vm299, %v2160, -inf
    %2181 = vmax.xlane.f32.xlu0 %v2180
    %v2182 = vpop.xlane.xlu0 %2181
    %v2183 = vsel %vm299, %v2161, -inf
    %2184 = vmax.xlane.f32.xlu0 %v2183
    %v2185 = vpop.xlane.xlu0 %2184
    %v2186 = vsub.f32 %v2154, %v2164
    %v2187 = vsub.f32 %v2155, %v2167
    %v2188 = vsub.f32 %v2156, %v2170
    %v2189 = vsub.f32 %v2157, %v2173
    %v2190 = vsub.f32 %v2158, %v2176
    %v2191 = vsub.f32 %v2159, %v2179
    %v2192 = vsub.f32 %v2160, %v2182
    %v2193 = vsub.f32 %v2161, %v2185
    %v2194 = vmul.f32 %v2186, 1.442695
    %v2195 = vpow.pop %v2194
    %v2196 = vmul.f32 %v2187, 1.442695
    %v2197 = vpow.pop %v2196
    %v2198 = vmul.f32 %v2188, 1.442695
    %v2199 = vpow.pop %v2198
    %v2200 = vmul.f32 %v2189, 1.442695
    %v2201 = vpow.pop %v2200
    %v2202 = vmul.f32 %v2190, 1.442695
    %v2203 = vpow.pop %v2202
    %v2204 = vmul.f32 %v2191, 1.442695
    %v2205 = vpow.pop %v2204
    %v2206 = vmul.f32 %v2192, 1.442695
    %v2207 = vpow.pop %v2206
    %v2208 = vmul.f32 %v2193, 1.442695
    %v2209 = vpow.pop %v2208
    %v2210 = vsel %vm299, %v2195, 0.0
    %2211 = vadd.xlane.f32.xlu0 %v2210
    %v2212 = vpop.xlane.xlu0 %2211
    %v2213 = vsel %vm299, %v2197, 0.0
    %2214 = vadd.xlane.f32.xlu0 %v2213
    %v2215 = vpop.xlane.xlu0 %2214
    %v2216 = vsel %vm299, %v2199, 0.0
    %2217 = vadd.xlane.f32.xlu0 %v2216
    %v2218 = vpop.xlane.xlu0 %2217
    %v2219 = vsel %vm299, %v2201, 0.0
    %2220 = vadd.xlane.f32.xlu0 %v2219
    %v2221 = vpop.xlane.xlu0 %2220
    %v2222 = vsel %vm299, %v2203, 0.0
    %2223 = vadd.xlane.f32.xlu0 %v2222
    %v2224 = vpop.xlane.xlu0 %2223
    %v2225 = vsel %vm299, %v2205, 0.0
    %2226 = vadd.xlane.f32.xlu0 %v2225
    %v2227 = vpop.xlane.xlu0 %2226
    %v2228 = vsel %vm299, %v2207, 0.0
    %2229 = vadd.xlane.f32.xlu0 %v2228
    %v2230 = vpop.xlane.xlu0 %2229
    %v2231 = vsel %vm299, %v2209, 0.0
    %2232 = vadd.xlane.f32.xlu0 %v2231
    %v2233 = vpop.xlane.xlu0 %2232
    %v2234 = vrcp.pop %v2212
    %v2235 = vrcp.pop %v2215
    %v2236 = vrcp.pop %v2218
    %v2237 = vrcp.pop %v2221
    %v2238 = vrcp.pop %v2224
    %v2239 = vrcp.pop %v2227
    %v2240 = vrcp.pop %v2230
    %v2241 = vrcp.pop %v2233
    %v2242 = vmul.f32 %v2195, %v2234
    %v2243 = vmul.f32 %v2197, %v2235
    %v2244 = vmul.f32 %v2199, %v2236
    %v2245 = vmul.f32 %v2201, %v2237
    %v2246 = vmul.f32 %v2203, %v2238
    %v2247 = vmul.f32 %v2205, %v2239
    %v2248 = vmul.f32 %v2207, %v2240
    %v2249 = vmul.f32 %v2209, %v2241
    %v2250 = vpack.c.bf16 %v2243, %v2242
    %v2251 = vpack.c.bf16 %v1939, %v1936
    %v2253 = vsel %vm299, %v2250, 0
    %2255 = vmatprep.subr.bf16.mxu0 0
    %2256 = vmatpush1.bf16.msra.mxu0 %v2251
    %2257 = vmatprep.subr.bf16.mxu0 0
    %2258 = vmatpush1.bf16.msra.mxu0 0
    %2259 = vmatprep.subr.bf16.mxu0 0
    %2260 = vmatpush1.bf16.msra.mxu0 0
    %2261 = vmatprep.subr.bf16.mxu0 0
    %2262 = vmatpush1.bf16.msra.mxu0 0
    %2263 = vmatprep.subr.bf16.mxu0 0
    %2264 = vmatpush1.bf16.msra.mxu0 0
    %2265 = vmatprep.subr.bf16.mxu0 0
    %2266 = vmatpush1.bf16.msra.mxu0 0
    %2267 = vmatprep.subr.bf16.mxu0 0
    %2268 = vmatpush1.bf16.msra.mxu0 0
    %2269 = vmatprep.subr.bf16.mxu0 0
    %2270 = vmatpush1.bf16.msra.mxu0 0
    %2271 = vmatprep.subr.bf16.mxu0 0
    %2272 = vmatpush1.bf16.msra.mxu0 0
    %2273 = vmatprep.subr.bf16.mxu0 0
    %2274 = vmatpush1.bf16.msra.mxu0 0
    %2275 = vmatprep.subr.bf16.mxu0 0
    %2276 = vmatpush1.bf16.msra.mxu0 0
    %2277 = vmatprep.subr.bf16.mxu0 0
    %2278 = vmatpush1.bf16.msra.mxu0 0
    %2279 = vmatprep.subr.bf16.mxu0 0
    %2280 = vmatpush1.bf16.msra.mxu0 0
    %2281 = vmatprep.subr.bf16.mxu0 0
    %2282 = vmatpush1.bf16.msra.mxu0 0
    %2283 = vmatprep.subr.bf16.mxu0 0
    %2284 = vmatpush1.bf16.msra.mxu0 0
    %2285 = vmatprep.subr.bf16.mxu0 0
    %2286 = vmatpush1.bf16.msra.mxu0 0
    %2287 = vmatprep.mubr.bf16.mxu0 0
    %2288 = vmatmul.mubr.bf16.gmra.mrb[0].mxu0 %v2253
    %v2289 = vpop.f32.mrb[0].mxu0
    %v2290 = vadd.f32 0.0, %v2289
    %v2291 = vpop.f32.mrb[0].mxu0
    %v2292 = vpop.f32.mrb[0].mxu0
    %v2293 = vadd.f32 0.0, %v2292
    %v2294 = vpop.f32.mrb[0].mxu0
    %2295 = vdwg.mxu0
    %v2296 = vpack.c.bf16 %v2245, %v2244
    %2298 = vrot.lane.b32.xlu0 %v2251, 96
    %v2299 = vpop.permute.xlu0 %2298
    %v2302 = vsel %vm299, %v2296, 0
    %2304 = vmatprep.subr.bf16.mxu0 0
    %2305 = vmatpush1.bf16.msra.mxu0 %v2299
    %2306 = vmatprep.subr.bf16.mxu0 0
    %2307 = vmatpush1.bf16.msra.mxu0 0
    %2308 = vmatprep.subr.bf16.mxu0 0
    %2309 = vmatpush1.bf16.msra.mxu0 0
    %2310 = vmatprep.subr.bf16.mxu0 0
    %2311 = vmatpush1.bf16.msra.mxu0 0
    %2312 = vmatprep.subr.bf16.mxu0 0
    %2313 = vmatpush1.bf16.msra.mxu0 0
    %2314 = vmatprep.subr.bf16.mxu0 0
    %2315 = vmatpush1.bf16.msra.mxu0 0
    %2316 = vmatprep.subr.bf16.mxu0 0
    %2317 = vmatpush1.bf16.msra.mxu0 0
    %2318 = vmatprep.subr.bf16.mxu0 0
    %2319 = vmatpush1.bf16.msra.mxu0 0
    %2320 = vmatprep.subr.bf16.mxu0 0
    %2321 = vmatpush1.bf16.msra.mxu0 0
    %2322 = vmatprep.subr.bf16.mxu0 0
    %2323 = vmatpush1.bf16.msra.mxu0 0
    %2324 = vmatprep.subr.bf16.mxu0 0
    %2325 = vmatpush1.bf16.msra.mxu0 0
    %2326 = vmatprep.subr.bf16.mxu0 0
    %2327 = vmatpush1.bf16.msra.mxu0 0
    %2328 = vmatprep.subr.bf16.mxu0 0
    %2329 = vmatpush1.bf16.msra.mxu0 0
    %2330 = vmatprep.subr.bf16.mxu0 0
    %2331 = vmatpush1.bf16.msra.mxu0 0
    %2332 = vmatprep.subr.bf16.mxu0 0
    %2333 = vmatpush1.bf16.msra.mxu0 0
    %2334 = vmatprep.subr.bf16.mxu0 0
    %2335 = vmatpush1.bf16.msra.mxu0 0
    %2336 = vmatprep.mubr.bf16.mxu0 0
    %2337 = vmatmul.mubr.bf16.gmra.mrb[0].mxu0 %v2302
    %v2338 = vpop.f32.mrb[0].mxu0
    %v2339 = vadd.f32 0.0, %v2338
    %v2340 = vpop.f32.mrb[0].mxu0
    %v2341 = vpop.f32.mrb[0].mxu0
    %v2342 = vadd.f32 0.0, %v2341
    %v2343 = vpop.f32.mrb[0].mxu0
    %2344 = vdwg.mxu0
    %v2345 = vpack.c.bf16 %v2247, %v2246
    %2346 = vrot.lane.b32.xlu0 %v2251, 64
    %v2347 = vpop.permute.xlu0 %2346
    %v2350 = vsel %vm299, %v2345, 0
    %2352 = vmatprep.subr.bf16.mxu0 0
    %2353 = vmatpush1.bf16.msra.mxu0 %v2347
    %2354 = vmatprep.subr.bf16.mxu0 0
    %2355 = vmatpush1.bf16.msra.mxu0 0
    %2356 = vmatprep.subr.bf16.mxu0 0
    %2357 = vmatpush1.bf16.msra.mxu0 0
    %2358 = vmatprep.subr.bf16.mxu0 0
    %2359 = vmatpush1.bf16.msra.mxu0 0
    %2360 = vmatprep.subr.bf16.mxu0 0
    %2361 = vmatpush1.bf16.msra.mxu0 0
    %2362 = vmatprep.subr.bf16.mxu0 0
    %2363 = vmatpush1.bf16.msra.mxu0 0
    %2364 = vmatprep.subr.bf16.mxu0 0
    %2365 = vmatpush1.bf16.msra.mxu0 0
    %2366 = vmatprep.subr.bf16.mxu0 0
    %2367 = vmatpush1.bf16.msra.mxu0 0
    %2368 = vmatprep.subr.bf16.mxu0 0
    %2369 = vmatpush1.bf16.msra.mxu0 0
    %2370 = vmatprep.subr.bf16.mxu0 0
    %2371 = vmatpush1.bf16.msra.mxu0 0
    %2372 = vmatprep.subr.bf16.mxu0 0
    %2373 = vmatpush1.bf16.msra.mxu0 0
    %2374 = vmatprep.subr.bf16.mxu0 0
    %2375 = vmatpush1.bf16.msra.mxu0 0
    %2376 = vmatprep.subr.bf16.mxu0 0
    %2377 = vmatpush1.bf16.msra.mxu0 0
    %2378 = vmatprep.subr.bf16.mxu0 0
    %2379 = vmatpush1.bf16.msra.mxu0 0
    %2380 = vmatprep.subr.bf16.mxu0 0
    %2381 = vmatpush1.bf16.msra.mxu0 0
    %2382 = vmatprep.subr.bf16.mxu0 0
    %2383 = vmatpush1.bf16.msra.mxu0 0
    %2384 = vmatprep.mubr.bf16.mxu0 0
    %2385 = vmatmul.mubr.bf16.gmra.mrb[0].mxu0 %v2350
    %v2386 = vpop.f32.mrb[0].mxu0
    %v2387 = vadd.f32 0.0, %v2386
    %v2388 = vpop.f32.mrb[0].mxu0
    %v2389 = vpop.f32.mrb[0].mxu0
    %v2390 = vadd.f32 0.0, %v2389
    %v2391 = vpop.f32.mrb[0].mxu0
    %2392 = vdwg.mxu0
    %v2393 = vpack.c.bf16 %v2249, %v2248
    %2394 = vrot.lane.b32.xlu0 %v2251, 32
    %v2395 = vpop.permute.xlu0 %2394
    %v2398 = vsel %vm299, %v2393, 0
    %2400 = vmatprep.subr.bf16.mxu0 0
    %2401 = vmatpush1.bf16.msra.mxu0 %v2395
    %2402 = vmatprep.subr.bf16.mxu0 0
    %2403 = vmatpush1.bf16.msra.mxu0 0
    %2404 = vmatprep.subr.bf16.mxu0 0
    %2405 = vmatpush1.bf16.msra.mxu0 0
    %2406 = vmatprep.subr.bf16.mxu0 0
    %2407 = vmatpush1.bf16.msra.mxu0 0
    %2408 = vmatprep.subr.bf16.mxu0 0
    %2409 = vmatpush1.bf16.msra.mxu0 0
    %2410 = vmatprep.subr.bf16.mxu0 0
    %2411 = vmatpush1.bf16.msra.mxu0 0
    %2412 = vmatprep.subr.bf16.mxu0 0
    %2413 = vmatpush1.bf16.msra.mxu0 0
    %2414 = vmatprep.subr.bf16.mxu0 0
    %2415 = vmatpush1.bf16.msra.mxu0 0
    %2416 = vmatprep.subr.bf16.mxu0 0
    %2417 = vmatpush1.bf16.msra.mxu0 0
    %2418 = vmatprep.subr.bf16.mxu0 0
    %2419 = vmatpush1.bf16.msra.mxu0 0
    %2420 = vmatprep.subr.bf16.mxu0 0
    %2421 = vmatpush1.bf16.msra.mxu0 0
    %2422 = vmatprep.subr.bf16.mxu0 0
    %2423 = vmatpush1.bf16.msra.mxu0 0
    %2424 = vmatprep.subr.bf16.mxu0 0
    %2425 = vmatpush1.bf16.msra.mxu0 0
    %2426 = vmatprep.subr.bf16.mxu0 0
    %2427 = vmatpush1.bf16.msra.mxu0 0
    %2428 = vmatprep.subr.bf16.mxu0 0
    %2429 = vmatpush1.bf16.msra.mxu0 0
    %2430 = vmatprep.subr.bf16.mxu0 0
    %2431 = vmatpush1.bf16.msra.mxu0 0
    %2432 = vmatprep.mubr.bf16.mxu0 0
    %2433 = vmatmul.mubr.bf16.gmra.mrb[0].mxu0 %v2398
    %v2434 = vpop.f32.mrb[0].mxu0
    %v2435 = vadd.f32 0.0, %v2434
    %v2436 = vpop.f32.mrb[0].mxu0
    %v2437 = vpop.f32.mrb[0].mxu0
    %v2438 = vadd.f32 0.0, %v2437
    %v2439 = vpop.f32.mrb[0].mxu0
    %2440 = vdwg.mxu0
    %2443 = vrot.lane.b32.xlu0 %v2339, 32
    %v2444 = vpop.permute.xlu0 %2443
    %2445 = vrot.lane.b32.xlu0 %v2342, 32
    %v2446 = vpop.permute.xlu0 %2445
    %2451 = vrot.lane.b32.xlu0 %v2387, 64
    %v2452 = vpop.permute.xlu0 %2451
    %2453 = vrot.lane.b32.xlu0 %v2390, 64
    %v2454 = vpop.permute.xlu0 %2453
    %2459 = vrot.lane.b32.xlu0 %v2435, 96
    %v2460 = vpop.permute.xlu0 %2459
    %2461 = vrot.lane.b32.xlu0 %v2438, 96
    %v2462 = vpop.permute.xlu0 %2461
    %v2465 = vsel %vm616, %v2290, %v2444
    %v2466 = vsel %vm616, %v2293, %v2446
    %v2467 = vsel %vm1140, %v2465, %v2452
    %v2468 = vsel %vm1140, %v2466, %v2454
    %v2469 = vsel %vm1143, %v2467, %v2460
    %v2470 = vsel %vm1143, %v2468, %v2462
    %s2471 = scalar_lea.vmem %s7, 64
    %v2472 = vld [vmem:[%s2471] sm:$0xf]
    %v2473 = vld [vmem:[%s2471 + $0x4] sm:$0xf]
    %v2474 = vld [vmem:[%s2471 + $0x8] sm:$0xf]
    %v2475 = vld [vmem:[%s2471 + $0xc] sm:$0xf]
    %v2476 = vld [vmem:[%s2471 + $0x10] sm:$0xf]
    %v2477 = vld [vmem:[%s2471 + $0x14] sm:$0xf]
    %v2478 = vld [vmem:[%s2471 + $0x18] sm:$0xf]
    %v2479 = vld [vmem:[%s2471 + $0x1c] sm:$0xf]
    %v2480 = vld [vmem:[%s2471 + $0x20] sm:$0xf]
    %v2481 = vld [vmem:[%s2471 + $0x24] sm:$0xf]
    %v2482 = vld [vmem:[%s2471 + $0x28] sm:$0xf]
    %v2483 = vld [vmem:[%s2471 + $0x2c] sm:$0xf]
    %v2484 = vld [vmem:[%s2471 + $0x30] sm:$0xf]
    %v2485 = vld [vmem:[%s2471 + $0x34] sm:$0xf]
    %v2486 = vld [vmem:[%s2471 + $0x38] sm:$0xf]
    %v2487 = vld [vmem:[%s2471 + $0x3c] sm:$0xf]
    %v2488 = vpack.c.bf16 %v2470, %v2469
    %s2489 = scalar_lea.vmem [#allocation8], 1
    %v2490 = vld [vmem:[%s2489] sm:$0x1]
    %v2492 = vlaneseq
    %v2493 = vshrl.u32 %v2492, 7
    %v2494 = vsub.s32 0, %v2493
    %v2495 = vrot.slane %v2490, %v2494
    %v2513 = vunpack.c.l.b16 %v2472
    %v2514 = vunpack.c.l.b16 %v2473
    %v2515 = vunpack.c.l.b16 %v2474
    %v2516 = vunpack.c.l.b16 %v2475
    %v2517 = vunpack.c.l.b16 %v2476
    %v2518 = vunpack.c.l.b16 %v2477
    %v2519 = vunpack.c.l.b16 %v2478
    %v2520 = vunpack.c.l.b16 %v2479
    %v2521 = vunpack.c.l.b16 %v2480
    %v2522 = vunpack.c.l.b16 %v2481
    %v2523 = vunpack.c.l.b16 %v2482
    %v2524 = vunpack.c.l.b16 %v2483
    %v2525 = vunpack.c.l.b16 %v2484
    %v2526 = vunpack.c.l.b16 %v2485
    %v2527 = vunpack.c.l.b16 %v2486
    %v2528 = vunpack.c.l.b16 %v2487
    %v2529 = vpack.c.b16 %v2514, %v2513
    %v2530 = vpack.c.b16 %v2516, %v2515
    %v2531 = vpack.c.b16 %v2518, %v2517
    %v2532 = vpack.c.b16 %v2520, %v2519
    %v2533 = vpack.c.b16 %v2522, %v2521
    %v2534 = vpack.c.b16 %v2524, %v2523
    %v2535 = vpack.c.b16 %v2526, %v2525
    %v2536 = vpack.c.b16 %v2528, %v2527
    %2545 = vmatprep.subr.bf16.mxu0 0
    %2546 = vmatpush1.bf16.msra.mxu0 %v2529
    %2547 = vmatprep.subr.bf16.mxu0 0
    %2548 = vmatpush1.bf16.msra.mxu0 %v2530
    %2549 = vmatprep.subr.bf16.mxu0 0
    %2550 = vmatpush1.bf16.msra.mxu0 %v2531
    %2551 = vmatprep.subr.bf16.mxu0 0
    %2552 = vmatpush1.bf16.msra.mxu0 %v2532
    %2553 = vmatprep.subr.bf16.mxu0 0
    %2554 = vmatpush1.bf16.msra.mxu0 %v2533
    %2555 = vmatprep.subr.bf16.mxu0 0
    %2556 = vmatpush1.bf16.msra.mxu0 %v2534
    %2557 = vmatprep.subr.bf16.mxu0 0
    %2558 = vmatpush1.bf16.msra.mxu0 %v2535
    %2559 = vmatprep.subr.bf16.mxu0 0
    %2560 = vmatpush1.bf16.msra.mxu0 %v2536
    %2561 = vmatprep.subr.bf16.mxu0 0
    %2562 = vmatpush1.bf16.msra.mxu0 0
    %2563 = vmatprep.subr.bf16.mxu0 0
    %2564 = vmatpush1.bf16.msra.mxu0 0
    %2565 = vmatprep.subr.bf16.mxu0 0
    %2566 = vmatpush1.bf16.msra.mxu0 0
    %2567 = vmatprep.subr.bf16.mxu0 0
    %2568 = vmatpush1.bf16.msra.mxu0 0
    %2569 = vmatprep.subr.bf16.mxu0 0
    %2570 = vmatpush1.bf16.msra.mxu0 0
    %2571 = vmatprep.subr.bf16.mxu0 0
    %2572 = vmatpush1.bf16.msra.mxu0 0
    %2573 = vmatprep.subr.bf16.mxu0 0
    %2574 = vmatpush1.bf16.msra.mxu0 0
    %2575 = vmatprep.subr.bf16.mxu0 0
    %2576 = vmatpush1.bf16.msra.mxu0 0
    %2577 = vmatprep.mubr.bf16.mxu0 0
    %2578 = vmatmul.mubr.bf16.gmra.mrb[0].mxu0 %v2488
    %v2579 = vpop.f32.mrb[0].mxu0
    %v2580 = vadd.f32 %v2495, %v2579
    %v2581 = vpop.f32.mrb[0].mxu0
    %v2582 = vpop.f32.mrb[0].mxu0
    %v2583 = vadd.f32 %v2495, %v2582
    %v2584 = vpop.f32.mrb[0].mxu0
    %2585 = vdwg.mxu0
    %v2586 = vadd.f32 %v1676, %v2580
    %v2587 = vadd.f32 %v1677, %v2583
    %s2588 = scalar_lea.vmem [#allocation16], 1
    %v2589 = vld [vmem:[%s2588] sm:$0x1]
    %s2590 = scalar_lea.vmem [#allocation17], 1
    %v2591 = vld [vmem:[%s2590] sm:$0x1]
    %2592 = vadd.xlane.f32.xlu0 %v2586
    %v2593 = vpop.xlane.xlu0 %2592
    %2594 = vadd.xlane.f32.xlu0 %v2587
    %v2595 = vpop.xlane.xlu0 %2594
    %v2596 = vmul.f32 %v2593, %v1267
    %v2597 = vmul.f32 %v2595, %v1267
    %v2598 = vsub.f32 %v2586, %v2596
    %v2599 = vsub.f32 %v2587, %v2597
    %v2600 = vmul.f32 %v2598, %v2598
    %v2601 = vmul.f32 %v2599, %v2599
    %2602 = vadd.xlane.f32.xlu0 %v2600
    %v2603 = vpop.xlane.xlu0 %2602
    %2604 = vadd.xlane.f32.xlu0 %v2601
    %v2605 = vpop.xlane.xlu0 %2604
    %v2606 = vmul.f32 %v2603, %v1267
    %v2607 = vmul.f32 %v2605, %v1267
    %v2608 = vadd.f32 %v2606, 1e-05
    %v2609 = vadd.f32 %v2607, 1e-05
    %v2610 = vrsqrt.pop %v2608
    %v2611 = vrsqrt.pop %v2609
    %v2612 = vmul.f32 %v2598, %v2610
    %v2613 = vmul.f32 %v2599, %v2611
    %v2615 = vlaneseq
    %v2616 = vshrl.u32 %v2615, 7
    %v2617 = vsub.s32 0, %v2616
    %v2618 = vrot.slane %v2589, %v2617
    %v2620 = vmul.f32 %v2612, %v2618
    %v2621 = vmul.f32 %v2613, %v2618
    %v2623 = vlaneseq
    %v2624 = vshrl.u32 %v2623, 7
    %v2625 = vsub.s32 0, %v2624
    %v2626 = vrot.slane %v2591, %v2625
    %v2628 = vadd.f32 %v2620, %v2626
    %v2629 = vadd.f32 %v2621, %v2626
    %s2630 = scalar_lea.vmem [#allocation10], 128
    %v2631 = vld [vmem:[%s2630] sm:$0xff]
    %v2632 = vld [vmem:[%s2630 + $0x8] sm:$0xff]
    %v2633 = vld [vmem:[%s2630 + $0x10] sm:$0xff]
    %v2634 = vld [vmem:[%s2630 + $0x18] sm:$0xff]
    %v2635 = vld [vmem:[%s2630 + $0x20] sm:$0xff]
    %v2636 = vld [vmem:[%s2630 + $0x28] sm:$0xff]
    %v2637 = vld [vmem:[%s2630 + $0x30] sm:$0xff]
    %v2638 = vld [vmem:[%s2630 + $0x38] sm:$0xff]
    %v2639 = vld [vmem:[%s2630 + $0x40] sm:$0xff]
    %v2640 = vld [vmem:[%s2630 + $0x48] sm:$0xff]
    %v2641 = vld [vmem:[%s2630 + $0x50] sm:$0xff]
    %v2642 = vld [vmem:[%s2630 + $0x58] sm:$0xff]
    %v2643 = vld [vmem:[%s2630 + $0x60] sm:$0xff]
    %v2644 = vld [vmem:[%s2630 + $0x68] sm:$0xff]
    %v2645 = vld [vmem:[%s2630 + $0x70] sm:$0xff]
    %v2646 = vld [vmem:[%s2630 + $0x78] sm:$0xff]
    %v2647 = vpack.c.bf16 %v2629, %v2628
    %s2648 = scalar_lea.vmem [#allocation11], 2
    %v2649 = vld [vmem:[%s2648] sm:$0x3]
    %v2651 = vlaneseq
    %v2652 = vshrl.u32 %v2651, 7
    %v2653 = vsub.s32 0, %v2652
    %v2654 = vrot.slane %v2649, %v2653
    %v2655 = vlaneseq
    %v2656 = vshrl.u32 %v2655, 7
    %v2657 = vsub.s32 1, %v2656
    %v2658 = vrot.slane %v2649, %v2657
    %v2677 = vunpack.c.l.b16 %v2631
    %v2678 = vunpack.c.h.b16 %v2631
    %v2679 = vunpack.c.l.b16 %v2632
    %v2680 = vunpack.c.h.b16 %v2632
    %v2681 = vunpack.c.l.b16 %v2633
    %v2682 = vunpack.c.h.b16 %v2633
    %v2683 = vunpack.c.l.b16 %v2634
    %v2684 = vunpack.c.h.b16 %v2634
    %v2685 = vunpack.c.l.b16 %v2635
    %v2686 = vunpack.c.h.b16 %v2635
    %v2687 = vunpack.c.l.b16 %v2636
    %v2688 = vunpack.c.h.b16 %v2636
    %v2689 = vunpack.c.l.b16 %v2637
    %v2690 = vunpack.c.h.b16 %v2637
    %v2691 = vunpack.c.l.b16 %v2638
    %v2692 = vunpack.c.h.b16 %v2638
    %v2693 = vunpack.c.l.b16 %v2639
    %v2694 = vunpack.c.h.b16 %v2639
    %v2695 = vunpack.c.l.b16 %v2640
    %v2696 = vunpack.c.h.b16 %v2640
    %v2697 = vunpack.c.l.b16 %v2641
    %v2698 = vunpack.c.h.b16 %v2641
    %v2699 = vunpack.c.l.b16 %v2642
    %v2700 = vunpack.c.h.b16 %v2642
    %v2701 = vunpack.c.l.b16 %v2643
    %v2702 = vunpack.c.h.b16 %v2643
    %v2703 = vunpack.c.l.b16 %v2644
    %v2704 = vunpack.c.h.b16 %v2644
    %v2705 = vunpack.c.l.b16 %v2645
    %v2706 = vunpack.c.h.b16 %v2645
    %v2707 = vunpack.c.l.b16 %v2646
    %v2708 = vunpack.c.h.b16 %v2646
    %v2709 = vpack.c.b16 %v2679, %v2677
    %v2710 = vpack.c.b16 %v2680, %v2678
    %v2711 = vpack.c.b16 %v2683, %v2681
    %v2712 = vpack.c.b16 %v2684, %v2682
    %v2713 = vpack.c.b16 %v2687, %v2685
    %v2714 = vpack.c.b16 %v2688, %v2686
    %v2715 = vpack.c.b16 %v2691, %v2689
    %v2716 = vpack.c.b16 %v2692, %v2690
    %v2717 = vpack.c.b16 %v2695, %v2693
    %v2718 = vpack.c.b16 %v2696, %v2694
    %v2719 = vpack.c.b16 %v2699, %v2697
    %v2720 = vpack.c.b16 %v2700, %v2698
    %v2721 = vpack.c.b16 %v2703, %v2701
    %v2722 = vpack.c.b16 %v2704, %v2702
    %v2723 = vpack.c.b16 %v2707, %v2705
    %v2724 = vpack.c.b16 %v2708, %v2706
    %2741 = vmatprep.subr.bf16.mxu0 %v2710
    %2742 = vmatpush1.bf16.msra.mxu0 %v2709
    %2743 = vmatprep.subr.bf16.mxu0 %v2712
    %2744 = vmatpush1.bf16.msra.mxu0 %v2711
    %2745 = vmatprep.subr.bf16.mxu0 %v2714
    %2746 = vmatpush1.bf16.msra.mxu0 %v2713
    %2747 = vmatprep.subr.bf16.mxu0 %v2716
    %2748 = vmatpush1.bf16.msra.mxu0 %v2715
    %2749 = vmatprep.subr.bf16.mxu0 %v2718
    %2750 = vmatpush1.bf16.msra.mxu0 %v2717
    %2751 = vmatprep.subr.bf16.mxu0 %v2720
    %2752 = vmatpush1.bf16.msra.mxu0 %v2719
    %2753 = vmatprep.subr.bf16.mxu0 %v2722
    %2754 = vmatpush1.bf16.msra.mxu0 %v2721
    %2755 = vmatprep.subr.bf16.mxu0 %v2724
    %2756 = vmatpush1.bf16.msra.mxu0 %v2723
    %2757 = vmatprep.subr.bf16.mxu0 0
    %2758 = vmatpush1.bf16.msra.mxu0 0
    %2759 = vmatprep.subr.bf16.mxu0 0
    %2760 = vmatpush1.bf16.msra.mxu0 0
    %2761 = vmatprep.subr.bf16.mxu0 0
    %2762 = vmatpush1.bf16.msra.mxu0 0
    %2763 = vmatprep.subr.bf16.mxu0 0
    %2764 = vmatpush1.bf16.msra.mxu0 0
    %2765 = vmatprep.subr.bf16.mxu0 0
    %2766 = vmatpush1.bf16.msra.mxu0 0
    %2767 = vmatprep.subr.bf16.mxu0 0
    %2768 = vmatpush1.bf16.msra.mxu0 0
    %2769 = vmatprep.subr.bf16.mxu0 0
    %2770 = vmatpush1.bf16.msra.mxu0 0
    %2771 = vmatprep.subr.bf16.mxu0 0
    %2772 = vmatpush1.bf16.msra.mxu0 0
    %2773 = vmatprep.mubr.bf16.mxu0 0
    %2774 = vmatmul.mubr.bf16.gmra.mrb[0].mxu0 %v2647
    %v2775 = vpop.f32.mrb[0].mxu0
    %v2776 = vadd.f32 %v2654, %v2775
    %v2777 = vpop.f32.mrb[0].mxu0
    %v2778 = vadd.f32 %v2658, %v2777
    %v2779 = vpop.f32.mrb[0].mxu0
    %v2780 = vadd.f32 %v2654, %v2779
    %v2781 = vpop.f32.mrb[0].mxu0
    %v2782 = vadd.f32 %v2658, %v2781
    %2783 = vdwg.mxu0
    %v2784 = vmax.f32 %v2776, 0.0
    %v2785 = vmax.f32 %v2778, 0.0
    %v2786 = vmax.f32 %v2780, 0.0
    %v2787 = vmax.f32 %v2782, 0.0
    %s2788 = scalar_lea.vmem [#allocation13], 128
    %v2789 = vld [vmem:[%s2788] sm:$0xf]
    %v2790 = vld [vmem:[%s2788 + $0x4] sm:$0xf]
    %v2791 = vld [vmem:[%s2788 + $0x8] sm:$0xf]
    %v2792 = vld [vmem:[%s2788 + $0xc] sm:$0xf]
    %v2793 = vld [vmem:[%s2788 + $0x10] sm:$0xf]
    %v2794 = vld [vmem:[%s2788 + $0x14] sm:$0xf]
    %v2795 = vld [vmem:[%s2788 + $0x18] sm:$0xf]
    %v2796 = vld [vmem:[%s2788 + $0x1c] sm:$0xf]
    %v2797 = vld [vmem:[%s2788 + $0x20] sm:$0xf]
    %v2798 = vld [vmem:[%s2788 + $0x24] sm:$0xf]
    %v2799 = vld [vmem:[%s2788 + $0x28] sm:$0xf]
    %v2800 = vld [vmem:[%s2788 + $0x2c] sm:$0xf]
    %v2801 = vld [vmem:[%s2788 + $0x30] sm:$0xf]
    %v2802 = vld [vmem:[%s2788 + $0x34] sm:$0xf]
    %v2803 = vld [vmem:[%s2788 + $0x38] sm:$0xf]
    %v2804 = vld [vmem:[%s2788 + $0x3c] sm:$0xf]
    %v2805 = vld [vmem:[%s2788 + $0x40] sm:$0xf]
    %v2806 = vld [vmem:[%s2788 + $0x44] sm:$0xf]
    %v2807 = vld [vmem:[%s2788 + $0x48] sm:$0xf]
    %v2808 = vld [vmem:[%s2788 + $0x4c] sm:$0xf]
    %v2809 = vld [vmem:[%s2788 + $0x50] sm:$0xf]
    %v2810 = vld [vmem:[%s2788 + $0x54] sm:$0xf]
    %v2811 = vld [vmem:[%s2788 + $0x58] sm:$0xf]
    %v2812 = vld [vmem:[%s2788 + $0x5c] sm:$0xf]
    %v2813 = vld [vmem:[%s2788 + $0x60] sm:$0xf]
    %v2814 = vld [vmem:[%s2788 + $0x64] sm:$0xf]
    %v2815 = vld [vmem:[%s2788 + $0x68] sm:$0xf]
    %v2816 = vld [vmem:[%s2788 + $0x6c] sm:$0xf]
    %v2817 = vld [vmem:[%s2788 + $0x70] sm:$0xf]
    %v2818 = vld [vmem:[%s2788 + $0x74] sm:$0xf]
    %v2819 = vld [vmem:[%s2788 + $0x78] sm:$0xf]
    %v2820 = vld [vmem:[%s2788 + $0x7c] sm:$0xf]
    %v2821 = vpack.c.bf16 %v2786, %v2784
    %v2822 = vpack.c.bf16 %v2787, %v2785
    %s2823 = scalar_lea.vmem [#allocation14], 1
    %v2824 = vld [vmem:[%s2823] sm:$0x1]
    %v2826 = vlaneseq
    %v2827 = vshrl.u32 %v2826, 7
    %v2828 = vsub.s32 0, %v2827
    %v2829 = vrot.slane %v2824, %v2828
    %v2863 = vunpack.c.l.b16 %v2789
    %v2864 = vunpack.c.l.b16 %v2790
    %v2865 = vunpack.c.l.b16 %v2791
    %v2866 = vunpack.c.l.b16 %v2792
    %v2867 = vunpack.c.l.b16 %v2793
    %v2868 = vunpack.c.l.b16 %v2794
    %v2869 = vunpack.c.l.b16 %v2795
    %v2870 = vunpack.c.l.b16 %v2796
    %v2871 = vunpack.c.l.b16 %v2797
    %v2872 = vunpack.c.l.b16 %v2798
    %v2873 = vunpack.c.l.b16 %v2799
    %v2874 = vunpack.c.l.b16 %v2800
    %v2875 = vunpack.c.l.b16 %v2801
    %v2876 = vunpack.c.l.b16 %v2802
    %v2877 = vunpack.c.l.b16 %v2803
    %v2878 = vunpack.c.l.b16 %v2804
    %v2879 = vunpack.c.l.b16 %v2805
    %v2880 = vunpack.c.l.b16 %v2806
    %v2881 = vunpack.c.l.b16 %v2807
    %v2882 = vunpack.c.l.b16 %v2808
    %v2883 = vunpack.c.l.b16 %v2809
    %v2884 = vunpack.c.l.b16 %v2810
    %v2885 = vunpack.c.l.b16 %v2811
    %v2886 = vunpack.c.l.b16 %v2812
    %v2887 = vunpack.c.l.b16 %v2813
    %v2888 = vunpack.c.l.b16 %v2814
    %v2889 = vunpack.c.l.b16 %v2815
    %v2890 = vunpack.c.l.b16 %v2816
    %v2891 = vunpack.c.l.b16 %v2817
    %v2892 = vunpack.c.l.b16 %v2818
    %v2893 = vunpack.c.l.b16 %v2819
    %v2894 = vunpack.c.l.b16 %v2820
    %v2895 = vpack.c.b16 %v2864, %v2863
    %v2896 = vpack.c.b16 %v2866, %v2865
    %v2897 = vpack.c.b16 %v2868, %v2867
    %v2898 = vpack.c.b16 %v2870, %v2869
    %v2899 = vpack.c.b16 %v2872, %v2871
    %v2900 = vpack.c.b16 %v2874, %v2873
    %v2901 = vpack.c.b16 %v2876, %v2875
    %v2902 = vpack.c.b16 %v2878, %v2877
    %v2903 = vpack.c.b16 %v2880, %v2879
    %v2904 = vpack.c.b16 %v2882, %v2881
    %v2905 = vpack.c.b16 %v2884, %v2883
    %v2906 = vpack.c.b16 %v2886, %v2885
    %v2907 = vpack.c.b16 %v2888, %v2887
    %v2908 = vpack.c.b16 %v2890, %v2889
    %v2909 = vpack.c.b16 %v2892, %v2891
    %v2910 = vpack.c.b16 %v2894, %v2893
    %2927 = vmatprep.subr.bf16.mxu0 0
    %2928 = vmatpush1.bf16.msra.mxu0 %v2895
    %2929 = vmatprep.subr.bf16.mxu0 0
    %2930 = vmatpush1.bf16.msra.mxu0 %v2896
    %2931 = vmatprep.subr.bf16.mxu0 0
    %2932 = vmatpush1.bf16.msra.mxu0 %v2897
    %2933 = vmatprep.subr.bf16.mxu0 0
    %2934 = vmatpush1.bf16.msra.mxu0 %v2898
    %2935 = vmatprep.subr.bf16.mxu0 0
    %2936 = vmatpush1.bf16.msra.mxu0 %v2899
    %2937 = vmatprep.subr.bf16.mxu0 0
    %2938 = vmatpush1.bf16.msra.mxu0 %v2900
    %2939 = vmatprep.subr.bf16.mxu0 0
    %2940 = vmatpush1.bf16.msra.mxu0 %v2901
    %2941 = vmatprep.subr.bf16.mxu0 0
    %2942 = vmatpush1.bf16.msra.mxu0 %v2902
    %2943 = vmatprep.subr.bf16.mxu0 0
    %2944 = vmatpush1.bf16.msra.mxu0 %v2903
    %2945 = vmatprep.subr.bf16.mxu0 0
    %2946 = vmatpush1.bf16.msra.mxu0 %v2904
    %2947 = vmatprep.subr.bf16.mxu0 0
    %2948 = vmatpush1.bf16.msra.mxu0 %v2905
    %2949 = vmatprep.subr.bf16.mxu0 0
    %2950 = vmatpush1.bf16.msra.mxu0 %v2906
    %2951 = vmatprep.subr.bf16.mxu0 0
    %2952 = vmatpush1.bf16.msra.mxu0 %v2907
    %2953 = vmatprep.subr.bf16.mxu0 0
    %2954 = vmatpush1.bf16.msra.mxu0 %v2908
    %2955 = vmatprep.subr.bf16.mxu0 0
    %2956 = vmatpush1.bf16.msra.mxu0 %v2909
    %2957 = vmatprep.subr.bf16.mxu0 0
    %2958 = vmatpush1.bf16.msra.mxu0 %v2910
    %2959 = vmatprep.mubr.bf16.mxu0 %v2822
    %2960 = vmatmul.mubr.bf16.gmra.mrb[0].mxu0 %v2821
    %v2961 = vpop.f32.mrb[0].mxu0
    %v2962 = vadd.f32 %v2829, %v2961
    %v2963 = vpop.f32.mrb[0].mxu0
    %v2964 = vpop.f32.mrb[0].mxu0
    %v2965 = vadd.f32 %v2829, %v2964
    %v2966 = vpop.f32.mrb[0].mxu0
    %2967 = vdwg.mxu0
    %v2968 = vadd.f32 %v2628, %v2962
    %v2969 = vadd.f32 %v2629, %v2965
    %s2970 = scalar_lea.vmem [#allocation19], 1
    %v2971 = vld [vmem:[%s2970] sm:$0x1]
    %s2972 = scalar_lea.vmem [#allocation20], 1
    %v2973 = vld [vmem:[%s2972] sm:$0x1]
    %2974 = vadd.xlane.f32.xlu0 %v2968
    %v2975 = vpop.xlane.xlu0 %2974
    %2976 = vadd.xlane.f32.xlu0 %v2969
    %v2977 = vpop.xlane.xlu0 %2976
    %v2978 = vmul.f32 %v2975, %v1267
    %v2979 = vmul.f32 %v2977, %v1267
    %v2980 = vsub.f32 %v2968, %v2978
    %v2981 = vsub.f32 %v2969, %v2979
    %v2982 = vmul.f32 %v2980, %v2980
    %v2983 = vmul.f32 %v2981, %v2981
    %2984 = vadd.xlane.f32.xlu0 %v2982
    %v2985 = vpop.xlane.xlu0 %2984
    %2986 = vadd.xlane.f32.xlu0 %v2983
    %v2987 = vpop.xlane.xlu0 %2986
    %v2988 = vmul.f32 %v2985, %v1267
    %v2989 = vmul.f32 %v2987, %v1267
    %v2990 = vadd.f32 %v2988, 1e-05
    %v2991 = vadd.f32 %v2989, 1e-05
    %v2992 = vrsqrt.pop %v2990
    %v2993 = vrsqrt.pop %v2991
    %v2994 = vmul.f32 %v2980, %v2992
    %v2995 = vmul.f32 %v2981, %v2993
    %v2997 = vlaneseq
    %v2998 = vshrl.u32 %v2997, 7
    %v2999 = vsub.s32 0, %v2998
    %v3000 = vrot.slane %v2971, %v2999
    %v3002 = vmul.f32 %v2994, %v3000
    %v3003 = vmul.f32 %v2995, %v3000
    %v3005 = vlaneseq
    %v3006 = vshrl.u32 %v3005, 7
    %v3007 = vsub.s32 0, %v3006
    %v3008 = vrot.slane %v2973, %v3007
    %v3010 = vadd.f32 %v3002, %v3008
    %v3011 = vadd.f32 %v3003, %v3008
    %v3012 = vld [vmem:[#allocation2] sm:$0x3]
    %v3014 = vsel %vm299, %v3012, 0
    %3016 = vmatprep.subr.mxu0 0.0
    %3017 = vmatpush1.msra.mxu0 %v3010
    %3018 = vmatprep.subr.mxu0 0.0
    %3019 = vmatpush1.msra.mxu0 %v3011
    %3020 = vmatprep.subr.mxu0 0.0
    %3021 = vmatpush1.msra.mxu0 0.0
    %3022 = vmatprep.subr.mxu0 0.0
    %3023 = vmatpush1.msra.mxu0 0.0
    %3024 = vmatprep.subr.mxu0 0.0
    %3025 = vmatpush1.msra.mxu0 0.0
    %3026 = vmatprep.subr.mxu0 0.0
    %3027 = vmatpush1.msra.mxu0 0.0
    %3028 = vmatprep.subr.mxu0 0.0
    %3029 = vmatpush1.msra.mxu0 0.0
    %3030 = vmatprep.subr.mxu0 0.0
    %3031 = vmatpush1.msra.mxu0 0.0
    %3032 = vmatprep.subr.mxu0 0.0
    %3033 = vmatpush1.msra.mxu0 0.0
    %3034 = vmatprep.subr.mxu0 0.0
    %3035 = vmatpush1.msra.mxu0 0.0
    %3036 = vmatprep.subr.mxu0 0.0
    %3037 = vmatpush1.msra.mxu0 0.0
    %3038 = vmatprep.subr.mxu0 0.0
    %3039 = vmatpush1.msra.mxu0 0.0
    %3040 = vmatprep.subr.mxu0 0.0
    %3041 = vmatpush1.msra.mxu0 0.0
    %3042 = vmatprep.subr.mxu0 0.0
    %3043 = vmatpush1.msra.mxu0 0.0
    %3044 = vmatprep.subr.mxu0 0.0
    %3045 = vmatpush1.msra.mxu0 0.0
    %3046 = vmatprep.subr.mxu0 0.0
    %3047 = vmatpush1.msra.mxu0 0.0
    %3048 = vmatprep.subr.mxu0 0.0
    %3049 = vmatpush1.msra.mxu0 0.0
    %3050 = vmatprep.subr.mxu0 0.0
    %3051 = vmatpush1.msra.mxu0 0.0
    %3052 = vmatprep.subr.mxu0 0.0
    %3053 = vmatpush1.msra.mxu0 0.0
    %3054 = vmatprep.subr.mxu0 0.0
    %3055 = vmatpush1.msra.mxu0 0.0
    %3056 = vmatprep.subr.mxu0 0.0
    %3057 = vmatpush1.msra.mxu0 0.0
    %3058 = vmatprep.subr.mxu0 0.0
    %3059 = vmatpush1.msra.mxu0 0.0
    %3060 = vmatprep.subr.mxu0 0.0
    %3061 = vmatpush1.msra.mxu0 0.0
    %3062 = vmatprep.subr.mxu0 0.0
    %3063 = vmatpush1.msra.mxu0 0.0
    %3064 = vmatprep.subr.mxu0 0.0
    %3065 = vmatpush1.msra.mxu0 0.0
    %3066 = vmatprep.subr.mxu0 0.0
    %3067 = vmatpush1.msra.mxu0 0.0
    %3068 = vmatprep.subr.mxu0 0.0
    %3069 = vmatpush1.msra.mxu0 0.0
    %3070 = vmatprep.subr.mxu0 0.0
    %3071 = vmatpush1.msra.mxu0 0.0
    %3072 = vmatprep.subr.mxu0 0.0
    %3073 = vmatpush1.msra.mxu0 0.0
    %3074 = vmatprep.subr.mxu0 0.0
    %3075 = vmatpush1.msra.mxu0 0.0
    %3076 = vmatprep.subr.mxu0 0.0
    %3077 = vmatpush1.msra.mxu0 0.0
    %3078 = vmatprep.subr.mxu0 0.0
    %3079 = vmatpush1.msra.mxu0 0.0
    %3080 = vmatprep.mubr.f32.mxu0 0.0
    %3081 = vmatmul.mubr.f32.gmra.mrb[0].mxu0 %v3014
    %v3082 = vpop.f32.mrb[0].mxu0
    %v3083 = vadd.f32 0.0, %v3082
    %v3084 = vpop.f32.mrb[0].mxu0
    %3085 = vdwg.mxu0
    %v3086 = vld [vmem:[#allocation22] sm:$0xff]
    %v3087 = vld [vmem:[#allocation22 + $0x8] sm:$0xff]
    %v3088 = vld [vmem:[#allocation22 + $0x10] sm:$0xff]
    %v3089 = vld [vmem:[#allocation22 + $0x18] sm:$0xff]
    %v3090 = vld [vmem:[#allocation22 + $0x20] sm:$0xff]
    %v3091 = vld [vmem:[#allocation22 + $0x28] sm:$0xff]
    %v3092 = vld [vmem:[#allocation22 + $0x30] sm:$0xff]
    %v3093 = vld [vmem:[#allocation22 + $0x38] sm:$0xff]
    %v3094 = vld [vmem:[#allocation22 + $0x40] sm:$0xff]
    %v3095 = vld [vmem:[#allocation22 + $0x48] sm:$0xff]
    %v3096 = vld [vmem:[#allocation22 + $0x50] sm:$0xff]
    %v3097 = vld [vmem:[#allocation22 + $0x58] sm:$0xff]
    %v3098 = vld [vmem:[#allocation22 + $0x60] sm:$0xff]
    %v3099 = vld [vmem:[#allocation22 + $0x68] sm:$0xff]
    %v3100 = vld [vmem:[#allocation22 + $0x70] sm:$0xff]
    %v3101 = vld [vmem:[#allocation22 + $0x78] sm:$0xff]
    %v3102 = vpack.c.bf16 %v3083, %v3083
    %v3103 = vld [vmem:[#allocation23] sm:$0x3]
    %v3105 = vlaneseq
    %v3106 = vshrl.u32 %v3105, 7
    %v3107 = vsub.s32 0, %v3106
    %v3108 = vrot.slane %v3103, %v3107
    %v3109 = vlaneseq
    %v3110 = vshrl.u32 %v3109, 7
    %v3111 = vsub.s32 1, %v3110
    %v3112 = vrot.slane %v3103, %v3111
    %v3131 = vunpack.c.l.b16 %v3086
    %v3132 = vunpack.c.h.b16 %v3086
    %v3133 = vunpack.c.l.b16 %v3087
    %v3134 = vunpack.c.h.b16 %v3087
    %v3135 = vunpack.c.l.b16 %v3088
    %v3136 = vunpack.c.h.b16 %v3088
    %v3137 = vunpack.c.l.b16 %v3089
    %v3138 = vunpack.c.h.b16 %v3089
    %v3139 = vunpack.c.l.b16 %v3090
    %v3140 = vunpack.c.h.b16 %v3090
    %v3141 = vunpack.c.l.b16 %v3091
    %v3142 = vunpack.c.h.b16 %v3091
    %v3143 = vunpack.c.l.b16 %v3092
    %v3144 = vunpack.c.h.b16 %v3092
    %v3145 = vunpack.c.l.b16 %v3093
    %v3146 = vunpack.c.h.b16 %v3093
    %v3147 = vunpack.c.l.b16 %v3094
    %v3148 = vunpack.c.h.b16 %v3094
    %v3149 = vunpack.c.l.b16 %v3095
    %v3150 = vunpack.c.h.b16 %v3095
    %v3151 = vunpack.c.l.b16 %v3096
    %v3152 = vunpack.c.h.b16 %v3096
    %v3153 = vunpack.c.l.b16 %v3097
    %v3154 = vunpack.c.h.b16 %v3097
    %v3155 = vunpack.c.l.b16 %v3098
    %v3156 = vunpack.c.h.b16 %v3098
    %v3157 = vunpack.c.l.b16 %v3099
    %v3158 = vunpack.c.h.b16 %v3099
    %v3159 = vunpack.c.l.b16 %v3100
    %v3160 = vunpack.c.h.b16 %v3100
    %v3161 = vunpack.c.l.b16 %v3101
    %v3162 = vunpack.c.h.b16 %v3101
    %v3163 = vpack.c.b16 %v3133, %v3131
    %v3164 = vpack.c.b16 %v3134, %v3132
    %v3165 = vpack.c.b16 %v3137, %v3135
    %v3166 = vpack.c.b16 %v3138, %v3136
    %v3167 = vpack.c.b16 %v3141, %v3139
    %v3168 = vpack.c.b16 %v3142, %v3140
    %v3169 = vpack.c.b16 %v3145, %v3143
    %v3170 = vpack.c.b16 %v3146, %v3144
    %v3171 = vpack.c.b16 %v3149, %v3147
    %v3172 = vpack.c.b16 %v3150, %v3148
    %v3173 = vpack.c.b16 %v3153, %v3151
    %v3174 = vpack.c.b16 %v3154, %v3152
    %v3175 = vpack.c.b16 %v3157, %v3155
    %v3176 = vpack.c.b16 %v3158, %v3156
    %v3177 = vpack.c.b16 %v3161, %v3159
    %v3178 = vpack.c.b16 %v3162, %v3160
    %3195 = vmatprep.subr.bf16.mxu0 %v3164
    %3196 = vmatpush1.bf16.msra.mxu0 %v3163
    %3197 = vmatprep.subr.bf16.mxu0 %v3166
    %3198 = vmatpush1.bf16.msra.mxu0 %v3165
    %3199 = vmatprep.subr.bf16.mxu0 %v3168
    %3200 = vmatpush1.bf16.msra.mxu0 %v3167
    %3201 = vmatprep.subr.bf16.mxu0 %v3170
    %3202 = vmatpush1.bf16.msra.mxu0 %v3169
    %3203 = vmatprep.subr.bf16.mxu0 %v3172
    %3204 = vmatpush1.bf16.msra.mxu0 %v3171
    %3205 = vmatprep.subr.bf16.mxu0 %v3174
    %3206 = vmatpush1.bf16.msra.mxu0 %v3173
    %3207 = vmatprep.subr.bf16.mxu0 %v3176
    %3208 = vmatpush1.bf16.msra.mxu0 %v3175
    %3209 = vmatprep.subr.bf16.mxu0 %v3178
    %3210 = vmatpush1.bf16.msra.mxu0 %v3177
    %3211 = vmatprep.subr.bf16.mxu0 0
    %3212 = vmatpush1.bf16.msra.mxu0 0
    %3213 = vmatprep.subr.bf16.mxu0 0
    %3214 = vmatpush1.bf16.msra.mxu0 0
    %3215 = vmatprep.subr.bf16.mxu0 0
    %3216 = vmatpush1.bf16.msra.mxu0 0
    %3217 = vmatprep.subr.bf16.mxu0 0
    %3218 = vmatpush1.bf16.msra.mxu0 0
    %3219 = vmatprep.subr.bf16.mxu0 0
    %3220 = vmatpush1.bf16.msra.mxu0 0
    %3221 = vmatprep.subr.bf16.mxu0 0
    %3222 = vmatpush1.bf16.msra.mxu0 0
    %3223 = vmatprep.subr.bf16.mxu0 0
    %3224 = vmatpush1.bf16.msra.mxu0 0
    %3225 = vmatprep.subr.bf16.mxu0 0
    %3226 = vmatpush1.bf16.msra.mxu0 0
    %3227 = vmatprep.mubr.bf16.mxu0 0
    %3228 = vmatmul.mubr.bf16.gmra.mrb[0].mxu0 %v3102
    %v3229 = vpop.f32.mrb[0].mxu0
    %v3230 = vadd.f32 %v3108, %v3229
    %v3231 = vpop.f32.mrb[0].mxu0
    %v3232 = vadd.f32 %v3112, %v3231
    %v3233 = vpop.f32.mrb[0].mxu0
    %v3234 = vpop.f32.mrb[0].mxu0
    %3235 = vdwg.mxu0
    %v3236 = vmax.f32 %v3230, 0.0
    %v3237 = vmax.f32 %v3232, 0.0
    %v3238 = vld [vmem:[#allocation25] sm:$0xf]
    %v3239 = vld [vmem:[#allocation25 + $0x4] sm:$0xf]
    %v3240 = vld [vmem:[#allocation25 + $0x8] sm:$0xf]
    %v3241 = vld [vmem:[#allocation25 + $0xc] sm:$0xf]
    %v3242 = vld [vmem:[#allocation25 + $0x10] sm:$0xf]
    %v3243 = vld [vmem:[#allocation25 + $0x14] sm:$0xf]
    %v3244 = vld [vmem:[#allocation25 + $0x18] sm:$0xf]
    %v3245 = vld [vmem:[#allocation25 + $0x1c] sm:$0xf]
    %v3246 = vld [vmem:[#allocation25 + $0x20] sm:$0xf]
    %v3247 = vld [vmem:[#allocation25 + $0x24] sm:$0xf]
    %v3248 = vld [vmem:[#allocation25 + $0x28] sm:$0xf]
    %v3249 = vld [vmem:[#allocation25 + $0x2c] sm:$0xf]
    %v3250 = vld [vmem:[#allocation25 + $0x30] sm:$0xf]
    %v3251 = vld [vmem:[#allocation25 + $0x34] sm:$0xf]
    %v3252 = vld [vmem:[#allocation25 + $0x38] sm:$0xf]
    %v3253 = vld [vmem:[#allocation25 + $0x3c] sm:$0xf]
    %v3254 = vld [vmem:[#allocation25 + $0x40] sm:$0xf]
    %v3255 = vld [vmem:[#allocation25 + $0x44] sm:$0xf]
    %v3256 = vld [vmem:[#allocation25 + $0x48] sm:$0xf]
    %v3257 = vld [vmem:[#allocation25 + $0x4c] sm:$0xf]
    %v3258 = vld [vmem:[#allocation25 + $0x50] sm:$0xf]
    %v3259 = vld [vmem:[#allocation25 + $0x54] sm:$0xf]
    %v3260 = vld [vmem:[#allocation25 + $0x58] sm:$0xf]
    %v3261 = vld [vmem:[#allocation25 + $0x5c] sm:$0xf]
    %v3262 = vld [vmem:[#allocation25 + $0x60] sm:$0xf]
    %v3263 = vld [vmem:[#allocation25 + $0x64] sm:$0xf]
    %v3264 = vld [vmem:[#allocation25 + $0x68] sm:$0xf]
    %v3265 = vld [vmem:[#allocation25 + $0x6c] sm:$0xf]
    %v3266 = vld [vmem:[#allocation25 + $0x70] sm:$0xf]
    %v3267 = vld [vmem:[#allocation25 + $0x74] sm:$0xf]
    %v3268 = vld [vmem:[#allocation25 + $0x78] sm:$0xf]
    %v3269 = vld [vmem:[#allocation25 + $0x7c] sm:$0xf]
    %v3270 = vpack.c.bf16 %v3236, %v3236
    %v3271 = vpack.c.bf16 %v3237, %v3237
    %v3272 = vld [vmem:[#allocation26] sm:$0x1]
    %v3274 = vlaneseq
    %v3275 = vshrl.u32 %v3274, 7
    %v3276 = vsub.s32 0, %v3275
    %v3277 = vrot.slane %v3272, %v3276
    %v3311 = vunpack.c.l.b16 %v3238
    %v3312 = vunpack.c.l.b16 %v3239
    %v3313 = vunpack.c.l.b16 %v3240
    %v3314 = vunpack.c.l.b16 %v3241
    %v3315 = vunpack.c.l.b16 %v3242
    %v3316 = vunpack.c.l.b16 %v3243
    %v3317 = vunpack.c.l.b16 %v3244
    %v3318 = vunpack.c.l.b16 %v3245
    %v3319 = vunpack.c.l.b16 %v3246
    %v3320 = vunpack.c.l.b16 %v3247
    %v3321 = vunpack.c.l.b16 %v3248
    %v3322 = vunpack.c.l.b16 %v3249
    %v3323 = vunpack.c.l.b16 %v3250
    %v3324 = vunpack.c.l.b16 %v3251
    %v3325 = vunpack.c.l.b16 %v3252
    %v3326 = vunpack.c.l.b16 %v3253
    %v3327 = vunpack.c.l.b16 %v3254
    %v3328 = vunpack.c.l.b16 %v3255
    %v3329 = vunpack.c.l.b16 %v3256
    %v3330 = vunpack.c.l.b16 %v3257
    %v3331 = vunpack.c.l.b16 %v3258
    %v3332 = vunpack.c.l.b16 %v3259
    %v3333 = vunpack.c.l.b16 %v3260
    %v3334 = vunpack.c.l.b16 %v3261
    %v3335 = vunpack.c.l.b16 %v3262
    %v3336 = vunpack.c.l.b16 %v3263
    %v3337 = vunpack.c.l.b16 %v3264
    %v3338 = vunpack.c.l.b16 %v3265
    %v3339 = vunpack.c.l.b16 %v3266
    %v3340 = vunpack.c.l.b16 %v3267
    %v3341 = vunpack.c.l.b16 %v3268
    %v3342 = vunpack.c.l.b16 %v3269
    %v3343 = vpack.c.b16 %v3312, %v3311
    %v3344 = vpack.c.b16 %v3314, %v3313
    %v3345 = vpack.c.b16 %v3316, %v3315
    %v3346 = vpack.c.b16 %v3318, %v3317
    %v3347 = vpack.c.b16 %v3320, %v3319
    %v3348 = vpack.c.b16 %v3322, %v3321
    %v3349 = vpack.c.b16 %v3324, %v3323
    %v3350 = vpack.c.b16 %v3326, %v3325
    %v3351 = vpack.c.b16 %v3328, %v3327
    %v3352 = vpack.c.b16 %v3330, %v3329
    %v3353 = vpack.c.b16 %v3332, %v3331
    %v3354 = vpack.c.b16 %v3334, %v3333
    %v3355 = vpack.c.b16 %v3336, %v3335
    %v3356 = vpack.c.b16 %v3338, %v3337
    %v3357 = vpack.c.b16 %v3340, %v3339
    %v3358 = vpack.c.b16 %v3342, %v3341
    %3375 = vmatprep.subr.bf16.mxu0 0
    %3376 = vmatpush1.bf16.msra.mxu0 %v3343
    %3377 = vmatprep.subr.bf16.mxu0 0
    %3378 = vmatpush1.bf16.msra.mxu0 %v3344
    %3379 = vmatprep.subr.bf16.mxu0 0
    %3380 = vmatpush1.bf16.msra.mxu0 %v3345
    %3381 = vmatprep.subr.bf16.mxu0 0
    %3382 = vmatpush1.bf16.msra.mxu0 %v3346
    %3383 = vmatprep.subr.bf16.mxu0 0
    %3384 = vmatpush1.bf16.msra.mxu0 %v3347
    %3385 = vmatprep.subr.bf16.mxu0 0
    %3386 = vmatpush1.bf16.msra.mxu0 %v3348
    %3387 = vmatprep.subr.bf16.mxu0 0
    %3388 = vmatpush1.bf16.msra.mxu0 %v3349
    %3389 = vmatprep.subr.bf16.mxu0 0
    %3390 = vmatpush1.bf16.msra.mxu0 %v3350
    %3391 = vmatprep.subr.bf16.mxu0 0
    %3392 = vmatpush1.bf16.msra.mxu0 %v3351
    %3393 = vmatprep.subr.bf16.mxu0 0
    %3394 = vmatpush1.bf16.msra.mxu0 %v3352
    %3395 = vmatprep.subr.bf16.mxu0 0
    %3396 = vmatpush1.bf16.msra.mxu0 %v3353
    %3397 = vmatprep.subr.bf16.mxu0 0
    %3398 = vmatpush1.bf16.msra.mxu0 %v3354
    %3399 = vmatprep.subr.bf16.mxu0 0
    %3400 = vmatpush1.bf16.msra.mxu0 %v3355
    %3401 = vmatprep.subr.bf16.mxu0 0
    %3402 = vmatpush1.bf16.msra.mxu0 %v3356
    %3403 = vmatprep.subr.bf16.mxu0 0
    %3404 = vmatpush1.bf16.msra.mxu0 %v3357
    %3405 = vmatprep.subr.bf16.mxu0 0
    %3406 = vmatpush1.bf16.msra.mxu0 %v3358
    %3407 = vmatprep.mubr.bf16.mxu0 %v3271
    %3408 = vmatmul.mubr.bf16.gmra.mrb[0].mxu0 %v3270
    %v3409 = vpop.f32.mrb[0].mxu0
    %v3410 = vadd.f32 %v3277, %v3409
    %v3411 = vpop.f32.mrb[0].mxu0
    %v3412 = vpop.f32.mrb[0].mxu0
    %v3413 = vpop.f32.mrb[0].mxu0
    %3414 = vdwg.mxu0
    %3415 = vst [vmem:[#allocation28] sm:$0x3] %v3410
    // Predicated region
    $region150: #{snake_qnet_forward.1} parent=1 // pred_check
      _
    $region151: #{snake_qnet_forward.1} parent=1 // pred_check_branch
      %3417 = sbr.rel (0) target = $region153
    $region152: #{snake_qnet_forward.1} parent=1 // pred_region
      %s3419 = ssub.s32 32, 32
      %3420 = vsyncadd [#allocation4], %s3419
      %s3422 = sshll.u32 [#allocation28], 4
      %s3423 = int_to_ptr.vmem [resolvable:$true] %s3422
      %3425 = dma.vmem_to_hbm [thread:$0]  %s3423, 32, %s21, [#allocation4]
    $region153: #{snake_qnet_forward.1} parent=1 // pred_fallthru
      _
    // Predicated region
    $region154: #{snake_qnet_forward.1} parent=1 // pred_check
      _
    $region155: #{snake_qnet_forward.1} parent=1 // pred_check_branch
      %3427 = sbr.rel (0) target = $region157
    $region156: #{snake_qnet_forward.1} parent=1 // pred_region
      %3428 = dma.done [#allocation4], 32
    $region157: #{snake_qnet_forward.1} parent=1 // pred_fallthru
      _
    %3429 = vsyncpa [#allocation3], 1
    %3430 = vsyncpa [#allocation6], 1
    %3431 = vsyncpa [#allocation9], 1
    %3432 = vsyncpa [#allocation12], 1
    %3433 = vsyncpa [#allocation15], 1
    %3434 = vsyncpa [#allocation18], 1
    %3435 = vsyncpa [#allocation21], 1
    %3436 = vsyncpa [#allocation24], 1
    %3437 = vsyncpa [#allocation27], 1
    %3438 = vsyncpa [#allocation4], 1

</llo_original>
